<compile_context>
chip_gen: v7x
topology: tpu7x:2x2x1
jax: 0.10.0
libtpu: 0.0.40
codegen_flags: <defaults>
</compile_context>

<pallas_src>
import functools
import math

import jax
import jax.numpy as jnp
from jax.experimental import pallas as pl
from jax.experimental.pallas import tpu as pltpu

_EPS = 1e-5


# ------------------------------ tiling helpers ------------------------------

def _hw_defaults():
    """(vmem_limit_bytes, target_rows) tuned per TPU generation."""
    kind = ""
    try:
        kind = jax.devices()[0].device_kind.lower()
    except Exception:
        pass
    if "v7" in kind or "7x" in kind:            # 64 MiB VMEM per TensorCore
        return 40 * 1024 * 1024, 512
    if "v2" in kind or "v3" in kind:            # small-VMEM legacy parts
        return 12 * 1024 * 1024, 256
    return 64 * 1024 * 1024, 1024               # v4 / v5e / v6e (128 MiB VMEM)


def _pick_sample_chunk(n, rows_per_sample, target_rows):
    """Largest divisor of n whose row count stays within target_rows (>= 1)."""
    best = 1
    for d in range(1, n + 1):
        if n % d == 0 and d * rows_per_sample <= target_rows:
            best = d
    return best


def _pick_row_tile(m, target_rows):
    """Largest multiple-of-8 divisor of m that is <= target_rows, else m."""
    if m <= target_rows:
        return m
    best = None
    d = 8
    while d <= target_rows:
        if m % d == 0:
            best = d
        d += 8
    return best if best is not None else m


def _pick_head_chunk(n, rows_per_sample, target_rows):
    """Sample chunk for the head: full batch if it fits, else a multiple of 8."""
    if n * rows_per_sample <= target_rows:
        return n
    best = None
    for d in range(8, n, 8):
        if n % d == 0 and d * rows_per_sample <= target_rows:
            best = d
    return best if best is not None else n


# ------------------------------ Pallas kernels ------------------------------

def conv_gemm_stats(patches, w, *, target_rows, vmem_limit):
    """Tap-merged implicit-GEMM conv (k=4, s=2, p=1) + per-chunk BN statistics.

    patches: (M, 16*Cin) bf16 -- row-major (n, oh, ow) patches, tap-major K.
    w:       (16*Cin, Cout) bf16.
    Returns y:(M, Cout) bf16 and stats:(G, 2, Cout) f32 per-chunk
            [row-sum ; row-sum-of-squares] (reduced by the consumer).
    """
    m, k = patches.shape
    cout = w.shape[-1]
    per_row = 4 * (k + cout)                      # double-buffered bf16 in+out
    fixed = 4 * k * cout + 1024                   # double-buffered bf16 weight
    cap = max((vmem_limit // 2 - fixed) // per_row, 64)
    tm = _pick_row_tile(m, min(target_rows, cap))
    g = m // tm

    def kernel(x_ref, w_ref, y_ref, s_ref):
        acc = jnp.dot(x_ref[...], w_ref[...], preferred_element_type=jnp.float32)
        y_ref[...] = acc.astype(y_ref.dtype)
        s_ref[...] = jnp.concatenate(
            [jnp.sum(acc, axis=0, keepdims=True),
             jnp.sum(acc * acc, axis=0, keepdims=True)],
            axis=0).reshape(1, 2, cout)

    return pl.pallas_call(
        kernel,
        out_shape=(jax.ShapeDtypeStruct((m, cout), jnp.bfloat16),
                   jax.ShapeDtypeStruct((g, 2, cout), jnp.float32)),
        grid=(g,),
        in_specs=[pl.BlockSpec((tm, k), lambda i: (i, 0)),
                  pl.BlockSpec((k, cout), lambda i: (0, 0))],     # weight resident
        out_specs=(pl.BlockSpec((tm, cout), lambda i: (i, 0)),
                   pl.BlockSpec((1, 2, cout), lambda i: (i, 0, 0))),
        compiler_params=pltpu.CompilerParams(
            dimension_semantics=("parallel",),
            vmem_limit_bytes=vmem_limit),
    )(patches, w)


def conv_s2d_stats(xs, w4, *, target_rows, vmem_limit):
    """Implicit-GEMM conv (k=4, s=2, p=1) from a single space-to-depth tensor.

    xs: (N, Ho+1, Wo+1, 4*Cin) bf16 -- padded 2x2 space-to-depth, (dh, dw, ci).
    w4: (4, 4*Cin, Cout) bf16        -- tap = 2*qh + qw.
    Four overlapping tap windows are sliced in-kernel (+0/+1 row and column),
    flattened to (tile_rows, 4*Cin) and fed to one MXU matmul per tap.
    Returns y:(N*Ho*Wo, Cout) bf16 and per-chunk stats:(G, 2, Cout) f32.
    """
    n, hop1, wop1, k = xs.shape
    ho, wo = hop1 - 1, wop1 - 1
    cout = w4.shape[-1]
    per_sample = 4 * (hop1 * wop1 * k + ho * wo * cout)   # double-buffered bf16
    fixed = 8 * k * cout + 1024                           # resident weight (x2)
    cap_rows = max((vmem_limit // 2 - fixed) // per_sample, 1) * ho * wo
    tb = _pick_sample_chunk(n, ho * wo, min(target_rows, max(cap_rows, ho * wo)))
    g = n // tb
    mrows = tb * ho * wo

    def kernel(x_ref, w_ref, y_ref, s_ref):
        taps = ((0, 0), (0, 1), (1, 0), (1, 1))

        def win(qh, qw):
            return x_ref[:, qh:qh + ho, qw:qw + wo, :].reshape(mrows, k)

        acc = jnp.dot(win(0, 0), w_ref[0], preferred_element_type=jnp.float32)
        for t in range(1, 4):
            qh, qw = taps[t]
            acc = acc + jnp.dot(win(qh, qw), w_ref[t],
                                preferred_element_type=jnp.float32)
        y_ref[...] = acc.astype(y_ref.dtype)
        s_ref[...] = jnp.concatenate(
            [jnp.sum(acc, axis=0, keepdims=True),
             jnp.sum(acc * acc, axis=0, keepdims=True)],
            axis=0).reshape(1, 2, cout)

    return pl.pallas_call(
        kernel,
        out_shape=(jax.ShapeDtypeStruct((n * ho * wo, cout), jnp.bfloat16),
                   jax.ShapeDtypeStruct((g, 2, cout), jnp.float32)),
        grid=(g,),
        in_specs=[pl.BlockSpec((tb, hop1, wop1, k), lambda i: (i, 0, 0, 0)),
                  pl.BlockSpec((4, k, cout), lambda i: (0, 0, 0))],  # resident
        out_specs=(pl.BlockSpec((mrows, cout), lambda i: (i, 0)),
                   pl.BlockSpec((1, 2, cout), lambda i: (i, 0, 0))),
        compiler_params=pltpu.CompilerParams(
            dimension_semantics=("parallel",),
            vmem_limit_bytes=vmem_limit),
    )(xs, w4)


def bn_lrelu(y, stats, gamma, beta, *, target_rows, vmem_limit):
    """Training-mode BatchNorm (global batch stats, biased var) + LeakyReLU(0.2).

    y: (M, C) bf16, stats: (G, 2, C) f32 per-chunk sums reduced here.
    """
    m, c = y.shape
    g = stats.shape[0]
    tm = _pick_row_tile(m, target_rows)
    inv_m = 1.0 / float(m)

    def kernel(y_ref, s_ref, g_ref, b_ref, o_ref):
        tot = jnp.sum(s_ref[...], axis=0)               # (2, C) global stats
        mean = tot[0:1, :] * inv_m
        var = tot[1:2, :] * inv_m - mean * mean
        scale = g_ref[...] * jax.lax.rsqrt(var + _EPS)
        shift = b_ref[...] - mean * scale
        a = y_ref[...].astype(jnp.float32) * scale + shift
        o_ref[...] = jnp.where(a > 0, a, 0.2 * a).astype(o_ref.dtype)

    return pl.pallas_call(
        kernel,
        out_shape=jax.ShapeDtypeStruct((m, c), jnp.bfloat16),
        grid=(m // tm,),
        in_specs=[pl.BlockSpec((tm, c), lambda i: (i, 0)),
                  pl.BlockSpec((g, 2, c), lambda i: (0, 0, 0)),
                  pl.BlockSpec((1, c), lambda i: (0, 0)),
                  pl.BlockSpec((1, c), lambda i: (0, 0))],
        out_specs=pl.BlockSpec((tm, c), lambda i: (i, 0)),
        compiler_params=pltpu.CompilerParams(
            dimension_semantics=("parallel",),
            vmem_limit_bytes=vmem_limit),
    )(y, stats, gamma, beta)


def bn_lrelu_head(y, stats, gamma, beta, wf, n_samples, *, target_rows, vmem_limit):
    """Last layer's BN + LeakyReLU fused with Conv2d(hidden->1, k=4) + Sigmoid
    + Flatten; a whole sample chunk is reduced per grid step."""
    m, c = y.shape
    g = stats.shape[0]
    s = m // n_samples                                  # 4*4 positions / sample
    nb = _pick_head_chunk(n_samples, s, target_rows)
    inv_m = 1.0 / float(m)

    def kernel(y_ref, s_ref, g_ref, b_ref, wf_ref, o_ref):
        tot = jnp.sum(s_ref[...], axis=0)
        mean = tot[0:1, :] * inv_m
        var = tot[1:2, :] * inv_m - mean * mean
        scale = g_ref[...] * jax.lax.rsqrt(var + _EPS)
        shift = b_ref[...] - mean * scale
        a = y_ref[...].astype(jnp.float32) * scale + shift
        a = jnp.where(a > 0, a, 0.2 * a)                # (nb*s, C)
        z = a.reshape(nb, s, c) * wf_ref[...]           # broadcast (s, C)
        logit = jnp.sum(jnp.sum(z, axis=1), axis=1, keepdims=True)   # (nb, 1)
        o_ref[...] = (0.5 * (jnp.tanh(0.5 * logit) + 1.0)).astype(o_ref.dtype)

    return pl.pallas_call(
        kernel,
        out_shape=jax.ShapeDtypeStruct((n_samples, 1), jnp.float32),
        grid=(n_samples // nb,),
        in_specs=[pl.BlockSpec((nb * s, c), lambda i: (i, 0)),
                  pl.BlockSpec((g, 2, c), lambda i: (0, 0, 0)),
                  pl.BlockSpec((1, c), lambda i: (0, 0)),
                  pl.BlockSpec((1, c), lambda i: (0, 0)),
                  pl.BlockSpec((s, c), lambda i: (0, 0))],
        out_specs=pl.BlockSpec((nb, 1), lambda i: (i, 0)),
        compiler_params=pltpu.CompilerParams(
            dimension_semantics=("parallel",),
            vmem_limit_bytes=vmem_limit),
    )(y, stats, gamma, beta, wf)


# ------------------------------- glue (JAX) ---------------------------------

def _space_to_depth(x):
    """NHWC -> zero-padded 2x2 space-to-depth: (N, Ho+1, Wo+1, 4*C) with
    channel order (dh, dw, ci)."""
    n, h, w, c = x.shape
    ho, wo = h // 2, w // 2
    xp = jnp.pad(x, ((0, 0), (1, 1), (1, 1), (0, 0)))
    s = xp.reshape(n, ho + 1, 2, wo + 1, 2, c)
    s = jnp.transpose(s, (0, 1, 3, 2, 4, 5))
    return s.reshape(n, ho + 1, wo + 1, 4 * c)


def _conv_patches(x):
    """NHWC -> full k=4/s=2/p=1 patch matrix (N*Ho*Wo, 16*C), tap-major K
    (qh, qw, dh, dw, ci).  Only used for layers where this is cheap."""
    n, h, w, c = x.shape
    ho, wo = h // 2, w // 2
    s = _space_to_depth(x)
    taps = [s[:, qh:qh + ho, qw:qw + wo, :] for qh in (0, 1) for qw in (0, 1)]
    p = jnp.concatenate(taps, axis=-1)                 # (N, Ho, Wo, 16*C)
    return p.reshape(n * ho * wo, 16 * c)


def _prep_conv_weight(w):
    """PyTorch (Cout, Cin, 4, 4) -> (4 taps, 4*Cin, Cout); tap = 2*qh+qw with
    kh = 2*qh+dh, kw = 2*qw+dw; inner K order (dh, dw, ci) matches s2d."""
    cout, cin, _, _ = w.shape
    w6 = w.reshape(cout, cin, 2, 2, 2, 2)              # (co, ci, qh, dh, qw, dw)
    w6 = jnp.transpose(w6, (2, 4, 3, 5, 1, 0))         # (qh, qw, dh, dw, ci, co)
    return w6.reshape(4, 4 * cin, cout)


def prepare_params(raw):
    """One-time re-layout of PyTorch-layout parameters for the kernels."""
    convs = []
    for w, gamma, beta in raw["convs"]:
        convs.append((
            _prep_conv_weight(w).astype(jnp.bfloat16),        # (4, 4*Cin, Cout)
            gamma.reshape(1, -1).astype(jnp.float32),
            beta.reshape(1, -1).astype(jnp.float32),
        ))
    wf = raw["w_final"][0]                                    # (Cin, 4, 4)
    wf = jnp.transpose(wf, (1, 2, 0)).reshape(16, -1)         # row = kh*4 + kw
    return {"convs": convs, "w_final": wf.astype(jnp.float32)}


def dcgan_discriminator_forward(x_nchw, params, *, target_rows=None):
    """x_nchw: (N, C, H, W) float32.  Returns (N, 1) probabilities."""
    vmem_limit, default_rows = _hw_defaults()
    rows = default_rows if target_rows is None else target_rows
    n = x_nchw.shape[0]
    x = jnp.transpose(x_nchw, (0, 2, 3, 1)).astype(jnp.bfloat16)  # NCHW->NHWC once
    convs = params["convs"]
    out = None
    for li, (w4, gamma, beta) in enumerate(convs):
        cin = w4.shape[1] // 4
        cout = w4.shape[-1]
        ho, wo = x.shape[1] // 2, x.shape[2] // 2
        if 4 * cin < 128 or wo < 8:
            # Tap-merged K: one wide MXU matmul per grid step.
            patches = _conv_patches(x)                         # (M, 16*Cin)
            wm = w4.reshape(4 * w4.shape[1], cout)             # tap-major K
            y, stats = conv_gemm_stats(patches, wm, target_rows=rows,
                                       vmem_limit=vmem_limit)
        else:
            # Single s2d tensor; 4 overlapping tap windows sliced in-kernel.
            xs = _space_to_depth(x)                            # (N, Ho+1, Wo+1, 4*Cin)
            y, stats = conv_s2d_stats(xs, w4, target_rows=rows,
                                      vmem_limit=vmem_limit)
        if li + 1 < len(convs):
            act = bn_lrelu(y, stats, gamma, beta, target_rows=rows,
                           vmem_limit=vmem_limit)
            x = act.reshape(n, ho, wo, cout)
        else:
            assert ho == 4 and wo == 4, "last conv layer must output 4x4 maps"
            out = bn_lrelu_head(y, stats, gamma, beta, params["w_final"], n,
                                target_rows=rows, vmem_limit=vmem_limit)
    return out


# ------------------------- params / reference / main ------------------------

def init_params(key, hidden_channels, n_image_channels, image_size):
    """Deterministic parameters mirroring DCGANDiscriminator.__init__
    (conv weights ~ 0.02*N(0,1); BatchNorm weight=1, bias=0), PyTorch layouts."""
    n_layers = round(math.log2(image_size // 4))
    channels = hidden_channels // 2 ** (n_layers - 1)
    keys = jax.random.split(key, n_layers + 1)
    convs = []
    in_c, out_c = n_image_channels, channels
    for i in range(n_layers):
        w = 0.02 * jax.random.normal(keys[i], (out_c, in_c, 4, 4), jnp.float32)
        convs.append((w,
                      jnp.ones((out_c,), jnp.float32),
                      jnp.zeros((out_c,), jnp.float32)))
        in_c, out_c = out_c, out_c * 2
    assert in_c == hidden_channels
    w_final = 0.02 * jax.random.normal(
        keys[n_layers], (1, hidden_channels, 4, 4), jnp.float32)
    return {"convs": convs, "w_final": w_final}


def reference_forward(x_nchw, raw):
    """Pure-JAX f32 reference replicating the PyTorch module semantics."""
    x = x_nchw
    for w, gamma, beta in raw["convs"]:
        y = jax.lax.conv_general_dilated(
            x, w, window_strides=(2, 2), padding=((1, 1), (1, 1)),
            dimension_numbers=("NCHW", "OIHW", "NCHW"),
            precision=jax.lax.Precision.HIGHEST)
        mean = jnp.mean(y, axis=(0, 2, 3), keepdims=True)
        var = jnp.mean((y - mean) ** 2, axis=(0, 2, 3), keepdims=True)
        y = (y - mean) * jax.lax.rsqrt(var + _EPS)
        y = y * gamma.reshape(1, -1, 1, 1) + beta.reshape(1, -1, 1, 1)
        x = jnp.where(y > 0, y, 0.2 * y)
    y = jax.lax.conv_general_dilated(
        x, raw["w_final"], window_strides=(1, 1), padding="VALID",
        dimension_numbers=("NCHW", "OIHW", "NCHW"),
        precision=jax.lax.Precision.HIGHEST)
    return jax.nn.sigmoid(y.reshape(x.shape[0], 1))


if __name__ == "__main__":
    # Small config consistent with the module:
    #   image_size=32 -> 3 conv+BN+LeakyReLU blocks (3->32 @32x32->16x16,
    #   32->64 @16x16->8x8, 64->128 @8x8->4x4), then Conv(128->1, k=4) +
    #   Sigmoid + Flatten.  This exercises both the tap-merged GEMM path
    #   (layers 1 and 3) and the single-s2d 4-tap path (layer 2).
    hidden_channels = 128
    n_image_channels = 3
    image_size = 32
    batch = 2

    key = jax.random.PRNGKey(0)
    k_x, k_p = jax.random.split(key)
    x = jax.random.normal(
        k_x, (batch, n_image_channels, image_size, image_size), jnp.float32)
    raw = init_params(k_p, hidden_channels, n_image_channels, image_size)
    params = prepare_params(raw)

    # Small target_rows so the toy shapes exercise multi-step pipelined grids
    # and the cross-chunk BN-stat reduction path.
    fwd = jax.jit(functools.partial(dcgan_discriminator_forward, target_rows=64))
    out = jax.block_until_ready(fwd(x, params))
    assert out.shape == (batch, 1), out.shape

    ref = jax.block_until_ready(reference_forward(x, raw))
    max_err = float(jnp.max(jnp.abs(out - ref)))
    assert max_err < 3e-2, f"max |pallas - reference| = {max_err}"
    print("KERNEL_OK")
</pallas_src>

<mosaic_0001>
module attributes {stable_mosaic.version = 11 : i64} {
  func.func @kernel(%arg0: i32, %arg1: memref<64x48xbf16, #tpu.memory_space<vmem>>, %arg2: memref<48x32xbf16, #tpu.memory_space<vmem>>, %arg3: memref<64x32xbf16, #tpu.memory_space<vmem>>, %arg4: memref<1x2x32xf32, #tpu.memory_space<vmem>>) attributes {dimension_semantics = [#tpu.dimension_semantics<parallel>], iteration_bounds = array<i64: 8>, scalar_prefetch = 0 : i64, scratch_operands = 0 : i64, tpu.core_type = #tpu.core_type<tc>, window_params = [{transform_indices = @transform_0, window_bounds = array<i64: 64, 48>}, {pipeline_mode = #tpu.pipeline_mode<synchronous>, transform_indices = @transform_1, window_bounds = array<i64: 48, 32>}, {transform_indices = @transform_2, window_bounds = array<i64: 64, 32>}, {transform_indices = @transform_3, window_bounds = array<i64: 1, 2, 32>}]} {
    %c0 = arith.constant 0 : index
    %c0_0 = arith.constant 0 : index
    %0 = vector.load %arg1[%c0, %c0_0] : memref<64x48xbf16, #tpu.memory_space<vmem>>, vector<64x48xbf16>
    %c0_1 = arith.constant 0 : index
    %c0_2 = arith.constant 0 : index
    %1 = vector.load %arg2[%c0_1, %c0_2] : memref<48x32xbf16, #tpu.memory_space<vmem>>, vector<48x32xbf16>
    %cst = arith.constant dense<0.000000e+00> : vector<64x32xf32>
    %2 = tpu.matmul %0, %1, %cst {dimension_numbers = #tpu.dot_dimension_numbers<[1], [0], [0], [1], [0, 0, 1, 1], [], []>} : vector<64x48xbf16>, vector<48x32xbf16>, vector<64x32xf32> -> vector<64x32xf32>
    %3 = arith.truncf %2 : vector<64x32xf32> to vector<64x32xbf16>
    %c0_3 = arith.constant 0 : index
    %c0_4 = arith.constant 0 : index
    %4 = vector.load %arg3[%c0_3, %c0_4] : memref<64x32xbf16, #tpu.memory_space<vmem>>, vector<64x32xbf16>
    tpu.vector_store %arg3[%c0_3, %c0_4], %3 {strides = array<i32>} : memref<64x32xbf16, #tpu.memory_space<vmem>>, vector<64x32xbf16>,
    %cst_5 = arith.constant dense<0.000000e+00> : vector<32xf32>
    %5 = vector.multi_reduction <add>, %2, %cst_5 [0] : vector<64x32xf32> to vector<32xf32>
    %6 = vector.shape_cast %5 : vector<32xf32> to vector<1x32xf32>
    %7 = arith.mulf %2, %2 : vector<64x32xf32>
    %cst_6 = arith.constant dense<0.000000e+00> : vector<32xf32>
    %8 = vector.multi_reduction <add>, %7, %cst_6 [0] : vector<64x32xf32> to vector<32xf32>
    %9 = vector.shape_cast %8 : vector<32xf32> to vector<1x32xf32>
    %10 = tpu.concatenate %6, %9 in 0 : vector<1x32xf32>, vector<1x32xf32> -> vector<2x32xf32>
    %11 = vector.shape_cast %10 : vector<2x32xf32> to vector<1x2x32xf32>
    %c0_7 = arith.constant 0 : index
    %c0_8 = arith.constant 0 : index
    %c0_9 = arith.constant 0 : index
    %12 = vector.load %arg4[%c0_7, %c0_8, %c0_9] : memref<1x2x32xf32, #tpu.memory_space<vmem>>, vector<1x2x32xf32>
    tpu.vector_store %arg4[%c0_7, %c0_8, %c0_9], %11 {strides = array<i32>} : memref<1x2x32xf32, #tpu.memory_space<vmem>>, vector<1x2x32xf32>,
    return
  }
  func.func @transform_0(%arg0: i32) -> (i32, i32) {
    %c0_i32 = arith.constant 0 : i32
    %c0_i32_0 = arith.constant 0 : i32
    return %arg0, %c0_i32 : i32, i32
  }
  func.func @transform_1(%arg0: i32) -> (i32, i32) {
    %c0_i32 = arith.constant 0 : i32
    %c0_i32_0 = arith.constant 0 : i32
    %c0_i32_1 = arith.constant 0 : i32
    return %c0_i32, %c0_i32_0 : i32, i32
  }
  func.func @transform_2(%arg0: i32) -> (i32, i32) {
    %c0_i32 = arith.constant 0 : i32
    %c0_i32_0 = arith.constant 0 : i32
    return %arg0, %c0_i32 : i32, i32
  }
  func.func @transform_3(%arg0: i32) -> (i32, i32, i32) {
    %c0_i32 = arith.constant 0 : i32
    %c0_i32_0 = arith.constant 0 : i32
    %c0_i32_1 = arith.constant 0 : i32
    return %arg0, %c0_i32, %c0_i32_0 : i32, i32, i32
  }
}

module attributes {stable_mosaic.version = 11 : i64} {
  func.func @kernel(%arg0: i32, %arg1: memref<64x32xbf16, #tpu.memory_space<vmem>>, %arg2: memref<8x2x32xf32, #tpu.memory_space<vmem>>, %arg3: memref<1x32xf32, #tpu.memory_space<vmem>>, %arg4: memref<1x32xf32, #tpu.memory_space<vmem>>, %arg5: memref<64x32xbf16, #tpu.memory_space<vmem>>) attributes {dimension_semantics = [#tpu.dimension_semantics<parallel>], iteration_bounds = array<i64: 8>, scalar_prefetch = 0 : i64, scratch_operands = 0 : i64, tpu.core_type = #tpu.core_type<tc>, window_params = [{transform_indices = @transform_0, window_bounds = array<i64: 64, 32>}, {pipeline_mode = #tpu.pipeline_mode<synchronous>, transform_indices = @transform_1, window_bounds = array<i64: 8, 2, 32>}, {pipeline_mode = #tpu.pipeline_mode<synchronous>, transform_indices = @transform_2, window_bounds = array<i64: 1, 32>}, {pipeline_mode = #tpu.pipeline_mode<synchronous>, transform_indices = @transform_3, window_bounds = array<i64: 1, 32>}, {transform_indices = @transform_4, window_bounds = array<i64: 64, 32>}]} {
    %c0 = arith.constant 0 : index
    %c0_0 = arith.constant 0 : index
    %c0_1 = arith.constant 0 : index
    %0 = vector.load %arg2[%c0, %c0_0, %c0_1] : memref<8x2x32xf32, #tpu.memory_space<vmem>>, vector<8x2x32xf32>
    %cst = arith.constant dense<0.000000e+00> : vector<2x32xf32>
    %1 = vector.multi_reduction <add>, %0, %cst [0] : vector<8x2x32xf32> to vector<2x32xf32>
    %2 = vector.extract_strided_slice %1 {offsets = [0, 0], sizes = [1, 32], strides = [1, 1]} : vector<2x32xf32> to vector<1x32xf32>
    %cst_2 = arith.constant 0.001953125 : f32
    %3 = vector.broadcast %cst_2 : f32 to vector<1x32xf32>
    %4 = arith.mulf %2, %3 : vector<1x32xf32>
    %5 = vector.extract_strided_slice %1 {offsets = [1, 0], sizes = [1, 32], strides = [1, 1]} : vector<2x32xf32> to vector<1x32xf32>
    %cst_3 = arith.constant 0.001953125 : f32
    %6 = vector.broadcast %cst_3 : f32 to vector<1x32xf32>
    %7 = arith.mulf %5, %6 : vector<1x32xf32>
    %8 = arith.mulf %4, %4 : vector<1x32xf32>
    %9 = arith.subf %7, %8 : vector<1x32xf32>
    %c0_4 = arith.constant 0 : index
    %c0_5 = arith.constant 0 : index
    %10 = vector.load %arg3[%c0_4, %c0_5] : memref<1x32xf32, #tpu.memory_space<vmem>>, vector<1x32xf32>
    %cst_6 = arith.constant 9.99999974E-6 : f32
    %11 = vector.broadcast %cst_6 : f32 to vector<1x32xf32>
    %12 = arith.addf %9, %11 : vector<1x32xf32>
    %13 = math.rsqrt %12 : vector<1x32xf32>
    %14 = arith.mulf %10, %13 : vector<1x32xf32>
    %c0_7 = arith.constant 0 : index
    %c0_8 = arith.constant 0 : index
    %15 = vector.load %arg4[%c0_7, %c0_8] : memref<1x32xf32, #tpu.memory_space<vmem>>, vector<1x32xf32>
    %16 = arith.mulf %4, %14 : vector<1x32xf32>
    %17 = arith.subf %15, %16 : vector<1x32xf32>
    %c0_9 = arith.constant 0 : index
    %c0_10 = arith.constant 0 : index
    %18 = vector.load %arg1[%c0_9, %c0_10] : memref<64x32xbf16, #tpu.memory_space<vmem>>, vector<64x32xbf16>
    %19 = arith.extf %18 : vector<64x32xbf16> to vector<64x32xf32>
    %20 = vector.broadcast %14 : vector<1x32xf32> to vector<64x32xf32>
    %21 = arith.mulf %19, %20 : vector<64x32xf32>
    %22 = vector.broadcast %17 : vector<1x32xf32> to vector<64x32xf32>
    %23 = arith.addf %21, %22 : vector<64x32xf32>
    %cst_11 = arith.constant 0.000000e+00 : f32
    %24 = vector.broadcast %cst_11 : f32 to vector<64x32xf32>
    %25 = arith.cmpf ogt, %23, %24 : vector<64x32xf32>
    %cst_12 = arith.constant 2.000000e-01 : f32
    %26 = vector.broadcast %cst_12 : f32 to vector<64x32xf32>
    %27 = arith.mulf %26, %23 : vector<64x32xf32>
    %28 = arith.select %25, %23, %27 : vector<64x32xi1>, vector<64x32xf32>
    %29 = arith.truncf %28 : vector<64x32xf32> to vector<64x32xbf16>
    %c0_13 = arith.constant 0 : index
    %c0_14 = arith.constant 0 : index
    %30 = vector.load %arg5[%c0_13, %c0_14] : memref<64x32xbf16, #tpu.memory_space<vmem>>, vector<64x32xbf16>
    tpu.vector_store %arg5[%c0_13, %c0_14], %29 {strides = array<i32>} : memref<64x32xbf16, #tpu.memory_space<vmem>>, vector<64x32xbf16>,
    return
  }
  func.func @transform_0(%arg0: i32) -> (i32, i32) {
    %c0_i32 = arith.constant 0 : i32
    %c0_i32_0 = arith.constant 0 : i32
    return %arg0, %c0_i32 : i32, i32
  }
  func.func @transform_1(%arg0: i32) -> (i32, i32, i32) {
    %c0_i32 = arith.constant 0 : i32
    %c0_i32_0 = arith.constant 0 : i32
    %c0_i32_1 = arith.constant 0 : i32
    %c0_i32_2 = arith.constant 0 : i32
    return %c0_i32, %c0_i32_0, %c0_i32_1 : i32, i32, i32
  }
  func.func @transform_2(%arg0: i32) -> (i32, i32) {
    %c0_i32 = arith.constant 0 : i32
    %c0_i32_0 = arith.constant 0 : i32
    %c0_i32_1 = arith.constant 0 : i32
    return %c0_i32, %c0_i32_0 : i32, i32
  }
  func.func @transform_3(%arg0: i32) -> (i32, i32) {
    %c0_i32 = arith.constant 0 : i32
    %c0_i32_0 = arith.constant 0 : i32
    %c0_i32_1 = arith.constant 0 : i32
    return %c0_i32, %c0_i32_0 : i32, i32
  }
  func.func @transform_4(%arg0: i32) -> (i32, i32) {
    %c0_i32 = arith.constant 0 : i32
    %c0_i32_0 = arith.constant 0 : i32
    return %arg0, %c0_i32 : i32, i32
  }
}

module attributes {stable_mosaic.version = 11 : i64} {
  func.func @kernel(%arg0: i32, %arg1: memref<1x9x9x128xbf16, #tpu.memory_space<vmem>>, %arg2: memref<4x128x64xbf16, #tpu.memory_space<vmem>>, %arg3: memref<64x64xbf16, #tpu.memory_space<vmem>>, %arg4: memref<1x2x64xf32, #tpu.memory_space<vmem>>) attributes {dimension_semantics = [#tpu.dimension_semantics<parallel>], iteration_bounds = array<i64: 2>, scalar_prefetch = 0 : i64, scratch_operands = 0 : i64, tpu.core_type = #tpu.core_type<tc>, window_params = [{transform_indices = @transform_0, window_bounds = array<i64: 1, 9, 9, 128>}, {pipeline_mode = #tpu.pipeline_mode<synchronous>, transform_indices = @transform_1, window_bounds = array<i64: 4, 128, 64>}, {transform_indices = @transform_2, window_bounds = array<i64: 64, 64>}, {transform_indices = @transform_3, window_bounds = array<i64: 1, 2, 64>}]} {
    %c0 = arith.constant 0 : index
    %c0_0 = arith.constant 0 : index
    %c0_1 = arith.constant 0 : index
    %c0_2 = arith.constant 0 : index
    %0 = vector.load %arg1[%c0, %c0_0, %c0_1, %c0_2] : memref<1x9x9x128xbf16, #tpu.memory_space<vmem>>, vector<1x8x8x128xbf16>
    %1 = vector.shape_cast %0 : vector<1x8x8x128xbf16> to vector<64x128xbf16>
    %c0_3 = arith.constant 0 : index
    %c0_4 = arith.constant 0 : index
    %c0_5 = arith.constant 0 : index
    %2 = vector.load %arg2[%c0_3, %c0_4, %c0_5] : memref<4x128x64xbf16, #tpu.memory_space<vmem>>, vector<1x128x64xbf16>
    %3 = vector.shape_cast %2 : vector<1x128x64xbf16> to vector<128x64xbf16>
    %cst = arith.constant dense<0.000000e+00> : vector<64x64xf32>
    %4 = tpu.matmul %1, %3, %cst {dimension_numbers = #tpu.dot_dimension_numbers<[1], [0], [0], [1], [0, 0, 1, 1], [], []>} : vector<64x128xbf16>, vector<128x64xbf16>, vector<64x64xf32> -> vector<64x64xf32>
    %c0_6 = arith.constant 0 : index
    %c0_7 = arith.constant 0 : index
    %c1 = arith.constant 1 : index
    %c0_8 = arith.constant 0 : index
    %5 = vector.load %arg1[%c0_6, %c0_7, %c1, %c0_8] : memref<1x9x9x128xbf16, #tpu.memory_space<vmem>>, vector<1x8x8x128xbf16>
    %6 = vector.shape_cast %5 : vector<1x8x8x128xbf16> to vector<64x128xbf16>
    %c1_9 = arith.constant 1 : index
    %c0_10 = arith.constant 0 : index
    %c0_11 = arith.constant 0 : index
    %7 = vector.load %arg2[%c1_9, %c0_10, %c0_11] : memref<4x128x64xbf16, #tpu.memory_space<vmem>>, vector<1x128x64xbf16>
    %8 = vector.shape_cast %7 : vector<1x128x64xbf16> to vector<128x64xbf16>
    %cst_12 = arith.constant dense<0.000000e+00> : vector<64x64xf32>
    %9 = tpu.matmul %6, %8, %cst_12 {dimension_numbers = #tpu.dot_dimension_numbers<[1], [0], [0], [1], [0, 0, 1, 1], [], []>} : vector<64x128xbf16>, vector<128x64xbf16>, vector<64x64xf32> -> vector<64x64xf32>
    %10 = arith.addf %4, %9 : vector<64x64xf32>
    %c0_13 = arith.constant 0 : index
    %c1_14 = arith.constant 1 : index
    %c0_15 = arith.constant 0 : index
    %c0_16 = arith.constant 0 : index
    %11 = vector.load %arg1[%c0_13, %c1_14, %c0_15, %c0_16] : memref<1x9x9x128xbf16, #tpu.memory_space<vmem>>, vector<1x8x8x128xbf16>
    %12 = vector.shape_cast %11 : vector<1x8x8x128xbf16> to vector<64x128xbf16>
    %c2 = arith.constant 2 : index
    %c0_17 = arith.constant 0 : index
    %c0_18 = arith.constant 0 : index
    %13 = vector.load %arg2[%c2, %c0_17, %c0_18] : memref<4x128x64xbf16, #tpu.memory_space<vmem>>, vector<1x128x64xbf16>
    %14 = vector.shape_cast %13 : vector<1x128x64xbf16> to vector<128x64xbf16>
    %cst_19 = arith.constant dense<0.000000e+00> : vector<64x64xf32>
    %15 = tpu.matmul %12, %14, %cst_19 {dimension_numbers = #tpu.dot_dimension_numbers<[1], [0], [0], [1], [0, 0, 1, 1], [], []>} : vector<64x128xbf16>, vector<128x64xbf16>, vector<64x64xf32> -> vector<64x64xf32>
    %16 = arith.addf %10, %15 : vector<64x64xf32>
    %c0_20 = arith.constant 0 : index
    %c1_21 = arith.constant 1 : index
    %c1_22 = arith.constant 1 : index
    %c0_23 = arith.constant 0 : index
    %17 = vector.load %arg1[%c0_20, %c1_21, %c1_22, %c0_23] : memref<1x9x9x128xbf16, #tpu.memory_space<vmem>>, vector<1x8x8x128xbf16>
    %18 = vector.shape_cast %17 : vector<1x8x8x128xbf16> to vector<64x128xbf16>
    %c3 = arith.constant 3 : index
    %c0_24 = arith.constant 0 : index
    %c0_25 = arith.constant 0 : index
    %19 = vector.load %arg2[%c3, %c0_24, %c0_25] : memref<4x128x64xbf16, #tpu.memory_space<vmem>>, vector<1x128x64xbf16>
    %20 = vector.shape_cast %19 : vector<1x128x64xbf16> to vector<128x64xbf16>
    %cst_26 = arith.constant dense<0.000000e+00> : vector<64x64xf32>
    %21 = tpu.matmul %18, %20, %cst_26 {dimension_numbers = #tpu.dot_dimension_numbers<[1], [0], [0], [1], [0, 0, 1, 1], [], []>} : vector<64x128xbf16>, vector<128x64xbf16>, vector<64x64xf32> -> vector<64x64xf32>
    %22 = arith.addf %16, %21 : vector<64x64xf32>
    %23 = arith.truncf %22 : vector<64x64xf32> to vector<64x64xbf16>
    %c0_27 = arith.constant 0 : index
    %c0_28 = arith.constant 0 : index
    %24 = vector.load %arg3[%c0_27, %c0_28] : memref<64x64xbf16, #tpu.memory_space<vmem>>, vector<64x64xbf16>
    tpu.vector_store %arg3[%c0_27, %c0_28], %23 {strides = array<i32>} : memref<64x64xbf16, #tpu.memory_space<vmem>>, vector<64x64xbf16>,
    %cst_29 = arith.constant dense<0.000000e+00> : vector<64xf32>
    %25 = vector.multi_reduction <add>, %22, %cst_29 [0] : vector<64x64xf32> to vector<64xf32>
    %26 = vector.shape_cast %25 : vector<64xf32> to vector<1x64xf32>
    %27 = arith.mulf %22, %22 : vector<64x64xf32>
    %cst_30 = arith.constant dense<0.000000e+00> : vector<64xf32>
    %28 = vector.multi_reduction <add>, %27, %cst_30 [0] : vector<64x64xf32> to vector<64xf32>
    %29 = vector.shape_cast %28 : vector<64xf32> to vector<1x64xf32>
    %30 = tpu.concatenate %26, %29 in 0 : vector<1x64xf32>, vector<1x64xf32> -> vector<2x64xf32>
    %31 = vector.shape_cast %30 : vector<2x64xf32> to vector<1x2x64xf32>
    %c0_31 = arith.constant 0 : index
    %c0_32 = arith.constant 0 : index
    %c0_33 = arith.constant 0 : index
    %32 = vector.load %arg4[%c0_31, %c0_32, %c0_33] : memref<1x2x64xf32, #tpu.memory_space<vmem>>, vector<1x2x64xf32>
    tpu.vector_store %arg4[%c0_31, %c0_32, %c0_33], %31 {strides = array<i32>} : memref<1x2x64xf32, #tpu.memory_space<vmem>>, vector<1x2x64xf32>,
    return
  }
  func.func @transform_0(%arg0: i32) -> (i32, i32, i32, i32) {
    %c0_i32 = arith.constant 0 : i32
    %c0_i32_0 = arith.constant 0 : i32
    %c0_i32_1 = arith.constant 0 : i32
    %c0_i32_2 = arith.constant 0 : i32
    return %arg0, %c0_i32, %c0_i32_0, %c0_i32_1 : i32, i32, i32, i32
  }
  func.func @transform_1(%arg0: i32) -> (i32, i32, i32) {
    %c0_i32 = arith.constant 0 : i32
    %c0_i32_0 = arith.constant 0 : i32
    %c0_i32_1 = arith.constant 0 : i32
    %c0_i32_2 = arith.constant 0 : i32
    return %c0_i32, %c0_i32_0, %c0_i32_1 : i32, i32, i32
  }
  func.func @transform_2(%arg0: i32) -> (i32, i32) {
    %c0_i32 = arith.constant 0 : i32
    %c0_i32_0 = arith.constant 0 : i32
    return %arg0, %c0_i32 : i32, i32
  }
  func.func @transform_3(%arg0: i32) -> (i32, i32, i32) {
    %c0_i32 = arith.constant 0 : i32
    %c0_i32_0 = arith.constant 0 : i32
    %c0_i32_1 = arith.constant 0 : i32
    return %arg0, %c0_i32, %c0_i32_0 : i32, i32, i32
  }
}

module attributes {stable_mosaic.version = 11 : i64} {
  func.func @kernel(%arg0: i32, %arg1: memref<64x64xbf16, #tpu.memory_space<vmem>>, %arg2: memref<2x2x64xf32, #tpu.memory_space<vmem>>, %arg3: memref<1x64xf32, #tpu.memory_space<vmem>>, %arg4: memref<1x64xf32, #tpu.memory_space<vmem>>, %arg5: memref<64x64xbf16, #tpu.memory_space<vmem>>) attributes {dimension_semantics = [#tpu.dimension_semantics<parallel>], iteration_bounds = array<i64: 2>, scalar_prefetch = 0 : i64, scratch_operands = 0 : i64, tpu.core_type = #tpu.core_type<tc>, window_params = [{transform_indices = @transform_0, window_bounds = array<i64: 64, 64>}, {pipeline_mode = #tpu.pipeline_mode<synchronous>, transform_indices = @transform_1, window_bounds = array<i64: 2, 2, 64>}, {pipeline_mode = #tpu.pipeline_mode<synchronous>, transform_indices = @transform_2, window_bounds = array<i64: 1, 64>}, {pipeline_mode = #tpu.pipeline_mode<synchronous>, transform_indices = @transform_3, window_bounds = array<i64: 1, 64>}, {transform_indices = @transform_4, window_bounds = array<i64: 64, 64>}]} {
    %c0 = arith.constant 0 : index
    %c0_0 = arith.constant 0 : index
    %c0_1 = arith.constant 0 : index
    %0 = vector.load %arg2[%c0, %c0_0, %c0_1] : memref<2x2x64xf32, #tpu.memory_space<vmem>>, vector<2x2x64xf32>
    %cst = arith.constant dense<0.000000e+00> : vector<2x64xf32>
    %1 = vector.multi_reduction <add>, %0, %cst [0] : vector<2x2x64xf32> to vector<2x64xf32>
    %2 = vector.extract_strided_slice %1 {offsets = [0, 0], sizes = [1, 64], strides = [1, 1]} : vector<2x64xf32> to vector<1x64xf32>
    %cst_2 = arith.constant 7.812500e-03 : f32
    %3 = vector.broadcast %cst_2 : f32 to vector<1x64xf32>
    %4 = arith.mulf %2, %3 : vector<1x64xf32>
    %5 = vector.extract_strided_slice %1 {offsets = [1, 0], sizes = [1, 64], strides = [1, 1]} : vector<2x64xf32> to vector<1x64xf32>
    %cst_3 = arith.constant 7.812500e-03 : f32
    %6 = vector.broadcast %cst_3 : f32 to vector<1x64xf32>
    %7 = arith.mulf %5, %6 : vector<1x64xf32>
    %8 = arith.mulf %4, %4 : vector<1x64xf32>
    %9 = arith.subf %7, %8 : vector<1x64xf32>
    %c0_4 = arith.constant 0 : index
    %c0_5 = arith.constant 0 : index
    %10 = vector.load %arg3[%c0_4, %c0_5] : memref<1x64xf32, #tpu.memory_space<vmem>>, vector<1x64xf32>
    %cst_6 = arith.constant 9.99999974E-6 : f32
    %11 = vector.broadcast %cst_6 : f32 to vector<1x64xf32>
    %12 = arith.addf %9, %11 : vector<1x64xf32>
    %13 = math.rsqrt %12 : vector<1x64xf32>
    %14 = arith.mulf %10, %13 : vector<1x64xf32>
    %c0_7 = arith.constant 0 : index
    %c0_8 = arith.constant 0 : index
    %15 = vector.load %arg4[%c0_7, %c0_8] : memref<1x64xf32, #tpu.memory_space<vmem>>, vector<1x64xf32>
    %16 = arith.mulf %4, %14 : vector<1x64xf32>
    %17 = arith.subf %15, %16 : vector<1x64xf32>
    %c0_9 = arith.constant 0 : index
    %c0_10 = arith.constant 0 : index
    %18 = vector.load %arg1[%c0_9, %c0_10] : memref<64x64xbf16, #tpu.memory_space<vmem>>, vector<64x64xbf16>
    %19 = arith.extf %18 : vector<64x64xbf16> to vector<64x64xf32>
    %20 = vector.broadcast %14 : vector<1x64xf32> to vector<64x64xf32>
    %21 = arith.mulf %19, %20 : vector<64x64xf32>
    %22 = vector.broadcast %17 : vector<1x64xf32> to vector<64x64xf32>
    %23 = arith.addf %21, %22 : vector<64x64xf32>
    %cst_11 = arith.constant 0.000000e+00 : f32
    %24 = vector.broadcast %cst_11 : f32 to vector<64x64xf32>
    %25 = arith.cmpf ogt, %23, %24 : vector<64x64xf32>
    %cst_12 = arith.constant 2.000000e-01 : f32
    %26 = vector.broadcast %cst_12 : f32 to vector<64x64xf32>
    %27 = arith.mulf %26, %23 : vector<64x64xf32>
    %28 = arith.select %25, %23, %27 : vector<64x64xi1>, vector<64x64xf32>
    %29 = arith.truncf %28 : vector<64x64xf32> to vector<64x64xbf16>
    %c0_13 = arith.constant 0 : index
    %c0_14 = arith.constant 0 : index
    %30 = vector.load %arg5[%c0_13, %c0_14] : memref<64x64xbf16, #tpu.memory_space<vmem>>, vector<64x64xbf16>
    tpu.vector_store %arg5[%c0_13, %c0_14], %29 {strides = array<i32>} : memref<64x64xbf16, #tpu.memory_space<vmem>>, vector<64x64xbf16>,
    return
  }
  func.func @transform_0(%arg0: i32) -> (i32, i32) {
    %c0_i32 = arith.constant 0 : i32
    %c0_i32_0 = arith.constant 0 : i32
    return %arg0, %c0_i32 : i32, i32
  }
  func.func @transform_1(%arg0: i32) -> (i32, i32, i32) {
    %c0_i32 = arith.constant 0 : i32
    %c0_i32_0 = arith.constant 0 : i32
    %c0_i32_1 = arith.constant 0 : i32
    %c0_i32_2 = arith.constant 0 : i32
    return %c0_i32, %c0_i32_0, %c0_i32_1 : i32, i32, i32
  }
  func.func @transform_2(%arg0: i32) -> (i32, i32) {
    %c0_i32 = arith.constant 0 : i32
    %c0_i32_0 = arith.constant 0 : i32
    %c0_i32_1 = arith.constant 0 : i32
    return %c0_i32, %c0_i32_0 : i32, i32
  }
  func.func @transform_3(%arg0: i32) -> (i32, i32) {
    %c0_i32 = arith.constant 0 : i32
    %c0_i32_0 = arith.constant 0 : i32
    %c0_i32_1 = arith.constant 0 : i32
    return %c0_i32, %c0_i32_0 : i32, i32
  }
  func.func @transform_4(%arg0: i32) -> (i32, i32) {
    %c0_i32 = arith.constant 0 : i32
    %c0_i32_0 = arith.constant 0 : i32
    return %arg0, %c0_i32 : i32, i32
  }
}

module attributes {stable_mosaic.version = 11 : i64} {
  func.func @kernel(%arg0: i32, %arg1: memref<32x1024xbf16, #tpu.memory_space<vmem>>, %arg2: memref<1024x128xbf16, #tpu.memory_space<vmem>>, %arg3: memref<32x128xbf16, #tpu.memory_space<vmem>>, %arg4: memref<1x2x128xf32, #tpu.memory_space<vmem>>) attributes {dimension_semantics = [#tpu.dimension_semantics<parallel>], iteration_bounds = array<i64: 1>, scalar_prefetch = 0 : i64, scratch_operands = 0 : i64, tpu.core_type = #tpu.core_type<tc>, window_params = [{transform_indices = @transform_0, window_bounds = array<i64: 32, 1024>}, {pipeline_mode = #tpu.pipeline_mode<synchronous>, transform_indices = @transform_1, window_bounds = array<i64: 1024, 128>}, {transform_indices = @transform_2, window_bounds = array<i64: 32, 128>}, {transform_indices = @transform_3, window_bounds = array<i64: 1, 2, 128>}]} {
    %c0 = arith.constant 0 : index
    %c0_0 = arith.constant 0 : index
    %0 = vector.load %arg1[%c0, %c0_0] : memref<32x1024xbf16, #tpu.memory_space<vmem>>, vector<32x1024xbf16>
    %c0_1 = arith.constant 0 : index
    %c0_2 = arith.constant 0 : index
    %1 = vector.load %arg2[%c0_1, %c0_2] : memref<1024x128xbf16, #tpu.memory_space<vmem>>, vector<1024x128xbf16>
    %cst = arith.constant dense<0.000000e+00> : vector<32x128xf32>
    %2 = tpu.matmul %0, %1, %cst {dimension_numbers = #tpu.dot_dimension_numbers<[1], [0], [0], [1], [0, 0, 1, 1], [], []>} : vector<32x1024xbf16>, vector<1024x128xbf16>, vector<32x128xf32> -> vector<32x128xf32>
    %3 = arith.truncf %2 : vector<32x128xf32> to vector<32x128xbf16>
    %c0_3 = arith.constant 0 : index
    %c0_4 = arith.constant 0 : index
    %4 = vector.load %arg3[%c0_3, %c0_4] : memref<32x128xbf16, #tpu.memory_space<vmem>>, vector<32x128xbf16>
    tpu.vector_store %arg3[%c0_3, %c0_4], %3 {strides = array<i32>} : memref<32x128xbf16, #tpu.memory_space<vmem>>, vector<32x128xbf16>,
    %cst_5 = arith.constant dense<0.000000e+00> : vector<128xf32>
    %5 = vector.multi_reduction <add>, %2, %cst_5 [0] : vector<32x128xf32> to vector<128xf32>
    %6 = vector.shape_cast %5 : vector<128xf32> to vector<1x128xf32>
    %7 = arith.mulf %2, %2 : vector<32x128xf32>
    %cst_6 = arith.constant dense<0.000000e+00> : vector<128xf32>
    %8 = vector.multi_reduction <add>, %7, %cst_6 [0] : vector<32x128xf32> to vector<128xf32>
    %9 = vector.shape_cast %8 : vector<128xf32> to vector<1x128xf32>
    %10 = tpu.concatenate %6, %9 in 0 : vector<1x128xf32>, vector<1x128xf32> -> vector<2x128xf32>
    %11 = vector.shape_cast %10 : vector<2x128xf32> to vector<1x2x128xf32>
    %c0_7 = arith.constant 0 : index
    %c0_8 = arith.constant 0 : index
    %c0_9 = arith.constant 0 : index
    %12 = vector.load %arg4[%c0_7, %c0_8, %c0_9] : memref<1x2x128xf32, #tpu.memory_space<vmem>>, vector<1x2x128xf32>
    tpu.vector_store %arg4[%c0_7, %c0_8, %c0_9], %11 {strides = array<i32>} : memref<1x2x128xf32, #tpu.memory_space<vmem>>, vector<1x2x128xf32>,
    return
  }
  func.func @transform_0(%arg0: i32) -> (i32, i32) {
    %c0_i32 = arith.constant 0 : i32
    %c0_i32_0 = arith.constant 0 : i32
    return %arg0, %c0_i32 : i32, i32
  }
  func.func @transform_1(%arg0: i32) -> (i32, i32) {
    %c0_i32 = arith.constant 0 : i32
    %c0_i32_0 = arith.constant 0 : i32
    %c0_i32_1 = arith.constant 0 : i32
    return %c0_i32, %c0_i32_0 : i32, i32
  }
  func.func @transform_2(%arg0: i32) -> (i32, i32) {
    %c0_i32 = arith.constant 0 : i32
    %c0_i32_0 = arith.constant 0 : i32
    return %arg0, %c0_i32 : i32, i32
  }
  func.func @transform_3(%arg0: i32) -> (i32, i32, i32) {
    %c0_i32 = arith.constant 0 : i32
    %c0_i32_0 = arith.constant 0 : i32
    %c0_i32_1 = arith.constant 0 : i32
    return %arg0, %c0_i32, %c0_i32_0 : i32, i32, i32
  }
}

module attributes {stable_mosaic.version = 11 : i64} {
  func.func @kernel(%arg0: i32, %arg1: memref<32x128xbf16, #tpu.memory_space<vmem>>, %arg2: memref<1x2x128xf32, #tpu.memory_space<vmem>>, %arg3: memref<1x128xf32, #tpu.memory_space<vmem>>, %arg4: memref<1x128xf32, #tpu.memory_space<vmem>>, %arg5: memref<16x128xf32, #tpu.memory_space<vmem>>, %arg6: memref<2x1xf32, #tpu.memory_space<vmem>>) attributes {dimension_semantics = [#tpu.dimension_semantics<parallel>], iteration_bounds = array<i64: 1>, scalar_prefetch = 0 : i64, scratch_operands = 0 : i64, tpu.core_type = #tpu.core_type<tc>, window_params = [{transform_indices = @transform_0, window_bounds = array<i64: 32, 128>}, {pipeline_mode = #tpu.pipeline_mode<synchronous>, transform_indices = @transform_1, window_bounds = array<i64: 1, 2, 128>}, {pipeline_mode = #tpu.pipeline_mode<synchronous>, transform_indices = @transform_2, window_bounds = array<i64: 1, 128>}, {pipeline_mode = #tpu.pipeline_mode<synchronous>, transform_indices = @transform_3, window_bounds = array<i64: 1, 128>}, {pipeline_mode = #tpu.pipeline_mode<synchronous>, transform_indices = @transform_4, window_bounds = array<i64: 16, 128>}, {transform_indices = @transform_5, window_bounds = array<i64: 2, 1>}]} {
    %c0 = arith.constant 0 : index
    %c0_0 = arith.constant 0 : index
    %c0_1 = arith.constant 0 : index
    %0 = vector.load %arg2[%c0, %c0_0, %c0_1] : memref<1x2x128xf32, #tpu.memory_space<vmem>>, vector<1x2x128xf32>
    %cst = arith.constant dense<0.000000e+00> : vector<2x128xf32>
    %1 = vector.multi_reduction <add>, %0, %cst [0] : vector<1x2x128xf32> to vector<2x128xf32>
    %2 = vector.extract_strided_slice %1 {offsets = [0, 0], sizes = [1, 128], strides = [1, 1]} : vector<2x128xf32> to vector<1x128xf32>
    %cst_2 = arith.constant 3.125000e-02 : f32
    %3 = vector.broadcast %cst_2 : f32 to vector<1x128xf32>
    %4 = arith.mulf %2, %3 : vector<1x128xf32>
    %5 = vector.extract_strided_slice %1 {offsets = [1, 0], sizes = [1, 128], strides = [1, 1]} : vector<2x128xf32> to vector<1x128xf32>
    %cst_3 = arith.constant 3.125000e-02 : f32
    %6 = vector.broadcast %cst_3 : f32 to vector<1x128xf32>
    %7 = arith.mulf %5, %6 : vector<1x128xf32>
    %8 = arith.mulf %4, %4 : vector<1x128xf32>
    %9 = arith.subf %7, %8 : vector<1x128xf32>
    %c0_4 = arith.constant 0 : index
    %c0_5 = arith.constant 0 : index
    %10 = vector.load %arg3[%c0_4, %c0_5] : memref<1x128xf32, #tpu.memory_space<vmem>>, vector<1x128xf32>
    %cst_6 = arith.constant 9.99999974E-6 : f32
    %11 = vector.broadcast %cst_6 : f32 to vector<1x128xf32>
    %12 = arith.addf %9, %11 : vector<1x128xf32>
    %13 = math.rsqrt %12 : vector<1x128xf32>
    %14 = arith.mulf %10, %13 : vector<1x128xf32>
    %c0_7 = arith.constant 0 : index
    %c0_8 = arith.constant 0 : index
    %15 = vector.load %arg4[%c0_7, %c0_8] : memref<1x128xf32, #tpu.memory_space<vmem>>, vector<1x128xf32>
    %16 = arith.mulf %4, %14 : vector<1x128xf32>
    %17 = arith.subf %15, %16 : vector<1x128xf32>
    %c0_9 = arith.constant 0 : index
    %c0_10 = arith.constant 0 : index
    %18 = vector.load %arg1[%c0_9, %c0_10] : memref<32x128xbf16, #tpu.memory_space<vmem>>, vector<32x128xbf16>
    %19 = arith.extf %18 : vector<32x128xbf16> to vector<32x128xf32>
    %20 = vector.broadcast %14 : vector<1x128xf32> to vector<32x128xf32>
    %21 = arith.mulf %19, %20 : vector<32x128xf32>
    %22 = vector.broadcast %17 : vector<1x128xf32> to vector<32x128xf32>
    %23 = arith.addf %21, %22 : vector<32x128xf32>
    %cst_11 = arith.constant 0.000000e+00 : f32
    %24 = vector.broadcast %cst_11 : f32 to vector<32x128xf32>
    %25 = arith.cmpf ogt, %23, %24 : vector<32x128xf32>
    %cst_12 = arith.constant 2.000000e-01 : f32
    %26 = vector.broadcast %cst_12 : f32 to vector<32x128xf32>
    %27 = arith.mulf %26, %23 : vector<32x128xf32>
    %28 = arith.select %25, %23, %27 : vector<32x128xi1>, vector<32x128xf32>
    %29 = vector.shape_cast %28 : vector<32x128xf32> to vector<2x16x128xf32>
    %c0_13 = arith.constant 0 : index
    %c0_14 = arith.constant 0 : index
    %30 = vector.load %arg5[%c0_13, %c0_14] : memref<16x128xf32, #tpu.memory_space<vmem>>, vector<16x128xf32>
    %31 = vector.shape_cast %30 : vector<16x128xf32> to vector<1x16x128xf32>
    %32 = vector.broadcast %31 : vector<1x16x128xf32> to vector<2x16x128xf32>
    %33 = arith.mulf %29, %32 : vector<2x16x128xf32>
    %cst_15 = arith.constant dense<0.000000e+00> : vector<2x128xf32>
    %34 = vector.multi_reduction <add>, %33, %cst_15 [1] : vector<2x16x128xf32> to vector<2x128xf32>
    %cst_16 = arith.constant dense<0.000000e+00> : vector<2xf32>
    %35 = vector.multi_reduction <add>, %34, %cst_16 [1] : vector<2x128xf32> to vector<2xf32>
    %36 = vector.shape_cast %35 : vector<2xf32> to vector<2x1xf32>
    %cst_17 = arith.constant 5.000000e-01 : f32
    %37 = vector.broadcast %cst_17 : f32 to vector<2x1xf32>
    %38 = arith.mulf %37, %36 : vector<2x1xf32>
    %39 = math.tanh %38 : vector<2x1xf32>
    %cst_18 = arith.constant 1.000000e+00 : f32
    %40 = vector.broadcast %cst_18 : f32 to vector<2x1xf32>
    %41 = arith.addf %39, %40 : vector<2x1xf32>
    %cst_19 = arith.constant 5.000000e-01 : f32
    %42 = vector.broadcast %cst_19 : f32 to vector<2x1xf32>
    %43 = arith.mulf %42, %41 : vector<2x1xf32>
    %c0_20 = arith.constant 0 : index
    %c0_21 = arith.constant 0 : index
    %44 = vector.load %arg6[%c0_20, %c0_21] : memref<2x1xf32, #tpu.memory_space<vmem>>, vector<2x1xf32>
    tpu.vector_store %arg6[%c0_20, %c0_21], %43 {strides = array<i32>} : memref<2x1xf32, #tpu.memory_space<vmem>>, vector<2x1xf32>,
    return
  }
  func.func @transform_0(%arg0: i32) -> (i32, i32) {
    %c0_i32 = arith.constant 0 : i32
    %c0_i32_0 = arith.constant 0 : i32
    return %arg0, %c0_i32 : i32, i32
  }
  func.func @transform_1(%arg0: i32) -> (i32, i32, i32) {
    %c0_i32 = arith.constant 0 : i32
    %c0_i32_0 = arith.constant 0 : i32
    %c0_i32_1 = arith.constant 0 : i32
    %c0_i32_2 = arith.constant 0 : i32
    return %c0_i32, %c0_i32_0, %c0_i32_1 : i32, i32, i32
  }
  func.func @transform_2(%arg0: i32) -> (i32, i32) {
    %c0_i32 = arith.constant 0 : i32
    %c0_i32_0 = arith.constant 0 : i32
    %c0_i32_1 = arith.constant 0 : i32
    return %c0_i32, %c0_i32_0 : i32, i32
  }
  func.func @transform_3(%arg0: i32) -> (i32, i32) {
    %c0_i32 = arith.constant 0 : i32
    %c0_i32_0 = arith.constant 0 : i32
    %c0_i32_1 = arith.constant 0 : i32
    return %c0_i32, %c0_i32_0 : i32, i32
  }
  func.func @transform_4(%arg0: i32) -> (i32, i32) {
    %c0_i32 = arith.constant 0 : i32
    %c0_i32_0 = arith.constant 0 : i32
    %c0_i32_1 = arith.constant 0 : i32
    return %c0_i32, %c0_i32_0 : i32, i32
  }
  func.func @transform_5(%arg0: i32) -> (i32, i32) {
    %c0_i32 = arith.constant 0 : i32
    %c0_i32_0 = arith.constant 0 : i32
    return %arg0, %c0_i32 : i32, i32
  }
}

</mosaic_0001>

<llo_original>
// kernel: dcgan_discriminator_forward.6
$region0: #{dcgan_discriminator_forward.6}
  #allocation0 [shape = 'u32[]', space=smem, size = 0x4, offset = 0x4, fixed_abs, tag = 'smem constant byte address 0x4 - core index']
  #allocation1 [shape = 'u32[144,128]{1,0:T(1,128)}', space=vmem, size = 0x12000, scoped, tag = 'internal scratch']
  %s0 = inlined_call_operand.hbm [shape: bf16[512,48], index: 0, kind: input, shape index: {}]
  %s1 = inlined_call_operand.hbm [shape: bf16[48,32], index: 1, kind: input, shape index: {}]
  %s2 = inlined_call_operand.hbm [shape: bf16[512,32], index: 2, kind: output, shape index: {0}]
  %s3 = inlined_call_operand.hbm [shape: f32[8,2,32], index: 3, kind: output, shape index: {1}]
  %4 = xla_tuple %s2, %s3
  %s5 = sld [smem:[#allocation0]]
  $region57: #{dcgan_discriminator_forward.6} parent=0
    _
  %s7 = ssub.s32 1, %s5
  %s8 = scalar_select 0, %s7, %s5
  $region1: #{dcgan_discriminator_forward.6} parent=0
    #allocation2 [shape = 'u8[32768]{0}', space=vmem, size = 0x8000, scoped, tag = 'input window, operand 0']
    #allocation3 [shape = 's32[2]{0}', space=sflag, size = 0x8, scoped, tag = 'scoped memory for dcgan_discriminator_forward.6']
    #allocation4 [shape = 's32[2]{0}', space=sflag, size = 0x8, scoped, tag = 'scoped memory for dcgan_discriminator_forward.6']
    #allocation5 [shape = 'u8[12288]{0}', space=vmem, size = 0x3000, scoped, tag = 'input window, operand 1, single buffered']
    #allocation6 [shape = 's32[1]{0}', space=sflag, size = 0x4, scoped, tag = 'scoped memory for dcgan_discriminator_forward.6']
    #allocation7 [shape = 'u8[32768]{0}', space=vmem, size = 0x8000, scoped, tag = 'output window, operand 0']
    #allocation8 [shape = 'u8[2048]{0}', space=vmem, size = 0x800, scoped, tag = 'output window, operand 1']
    #allocation9 [shape = 's32[2]{0}', space=sflag, size = 0x8, scoped, tag = 'scoped memory for dcgan_discriminator_forward.6']
    %9 = vsyncpa [#allocation3], 0
    %s10 = scalar_lea.sflag [#allocation3], 1
    %11 = vsyncpa %s10, 0
    %12 = vsyncpa [#allocation6], 0
    %13 = vsyncpa [#allocation4], 0
    %s14 = scalar_lea.sflag [#allocation4], 1
    %15 = vsyncpa %s14, 0
    %16 = vsyncpa [#allocation9], 0
    %s17 = scalar_lea.sflag [#allocation9], 1
    %18 = vsyncpa %s17, 0
    loop: start=0, step=1, limit=10
    $region2: #{dcgan_discriminator_forward.6} parent=1 // loop_pre_header
      _
    $region3: #{dcgan_discriminator_forward.6} parent=1 // loop_header
      %s20 = sphi 0, %s24
      %p21 = scmp.ge.s32.totalorder %s20, 10
      %s30 = sphi 0, %s32
      %s33 = sphi 0, %s30
      %s34 = sphi 0, %s33
      %s50 = sphi 0, %s34
      %s54 = sphi 0, %s54
      %s56 = sphi 0, %s54
      %s57 = sphi 0, %s56
      %s71 = sphi 0, %s57
      %s77 = sphi 0, %s79
      %s80 = sphi 0, %s77
      %s81 = sphi 0, %s80
      %s97 = sphi 0, %s81
      %s103 = sphi 0, %s105
      %s106 = sphi 0, %s103
      %s107 = sphi 0, %s106
      %s123 = sphi 0, %s107
    $region4: #{dcgan_discriminator_forward.6} parent=1 // loop_header_branch
      %23 = sbr.rel (%p21) target = $region8
    $region5: #{dcgan_discriminator_forward.6} parent=1 // loop_body
      %s25 = ssub.s32 %s20, 1
      %s26 = ssub.s32 %s20, 2
      %s27 = sadd.s32 %s20, 1
      %s28 = ssub.s32 %s20, %s27
      %p29 = scmp.eq.s32.totalorder %s28, 0
      %s31 = sadd.s32 %s30, 1
      %s32 = scalar_select %p29, %s30, %s31
      %p35 = pneg %p29
      %p36 = scmp.eq.s32.totalorder %s20, 7
      %p37 = por %p35, %p36
      %p38 = scmp.ne.s32.totalorder %s30, %s33
      %p39 = scmp.eq.s32.totalorder %s20, 0
      %p40 = por %p38, %p39
      %p41 = scmp.ne.s32.totalorder %s30, %s33
      %p42 = scmp.eq.s32.totalorder %s25, 7
      %p43 = por %p41, %p42
      %p44 = scmp.ne.s32.totalorder %s33, %s34
      %p45 = scmp.eq.s32.totalorder %s25, 0
      %p46 = por %p44, %p45
      %p47 = scmp.ne.s32.totalorder %s33, %s34
      %p48 = scmp.eq.s32.totalorder %s26, 7
      %p49 = por %p47, %p48
      %p51 = scmp.ne.s32.totalorder %s34, %s50
      %p52 = scmp.eq.s32.totalorder %s26, 0
      %p53 = por %p51, %p52
      %s55 = sadd.s32 %s54, 1
      %p58 = scmp.eq.s32.totalorder %s20, 7
      %p59 = scmp.ne.s32.totalorder %s54, %s56
      %p60 = scmp.eq.s32.totalorder %s20, 0
      %p61 = por %p59, %p60
      %p62 = scmp.ne.s32.totalorder %s54, %s56
      %p63 = scmp.eq.s32.totalorder %s25, 7
      %p64 = por %p62, %p63
      %p65 = scmp.ne.s32.totalorder %s56, %s57
      %p66 = scmp.eq.s32.totalorder %s25, 0
      %p67 = por %p65, %p66
      %p68 = scmp.ne.s32.totalorder %s56, %s57
      %p69 = scmp.eq.s32.totalorder %s26, 7
      %p70 = por %p68, %p69
      %p72 = scmp.ne.s32.totalorder %s57, %s71
      %p73 = scmp.eq.s32.totalorder %s26, 0
      %p74 = por %p72, %p73
      %s75 = ssub.s32 %s20, %s27
      %p76 = scmp.eq.s32.totalorder %s75, 0
      %s78 = sadd.s32 %s77, 1
      %s79 = scalar_select %p76, %s77, %s78
      %p82 = pneg %p76
      %p83 = scmp.eq.s32.totalorder %s20, 7
      %p84 = por %p82, %p83
      %p85 = scmp.ne.s32.totalorder %s77, %s80
      %p86 = scmp.eq.s32.totalorder %s20, 0
      %p87 = por %p85, %p86
      %p88 = scmp.ne.s32.totalorder %s77, %s80
      %p89 = scmp.eq.s32.totalorder %s25, 7
      %p90 = por %p88, %p89
      %p91 = scmp.ne.s32.totalorder %s80, %s81
      %p92 = scmp.eq.s32.totalorder %s25, 0
      %p93 = por %p91, %p92
      %p94 = scmp.ne.s32.totalorder %s80, %s81
      %p95 = scmp.eq.s32.totalorder %s26, 7
      %p96 = por %p94, %p95
      %p98 = scmp.ne.s32.totalorder %s81, %s97
      %p99 = scmp.eq.s32.totalorder %s26, 0
      %p100 = por %p98, %p99
      %s101 = ssub.s32 %s20, %s27
      %p102 = scmp.eq.s32.totalorder %s101, 0
      %s104 = sadd.s32 %s103, 1
      %s105 = scalar_select %p102, %s103, %s104
      %p108 = pneg %p102
      %p109 = scmp.eq.s32.totalorder %s20, 7
      %p110 = por %p108, %p109
      %p111 = scmp.ne.s32.totalorder %s103, %s106
      %p112 = scmp.eq.s32.totalorder %s20, 0
      %p113 = por %p111, %p112
      %p114 = scmp.ne.s32.totalorder %s103, %s106
      %p115 = scmp.eq.s32.totalorder %s25, 7
      %p116 = por %p114, %p115
      %p117 = scmp.ne.s32.totalorder %s106, %s107
      %p118 = scmp.eq.s32.totalorder %s25, 0
      %p119 = por %p117, %p118
      %p120 = scmp.ne.s32.totalorder %s106, %s107
      %p121 = scmp.eq.s32.totalorder %s26, 7
      %p122 = por %p120, %p121
      %p124 = scmp.ne.s32.totalorder %s107, %s123
      %p125 = scmp.eq.s32.totalorder %s26, 0
      %p126 = por %p124, %p125
      %p127 = scmp.le.s32.totalorder 1, %s20
      %p128 = scmp.lt.s32.totalorder %s20, 9
      %p129 = pnand %p127, %p128
      %p130 = pneg %p129
      // Predicated region
      $region9: #{dcgan_discriminator_forward.6} parent=5 // pred_check
        _
      $region10: #{dcgan_discriminator_forward.6} parent=5 // pred_check_branch
        %132 = sbr.rel (%p129) target = $region12
      $region11: #{dcgan_discriminator_forward.6} parent=5 // pred_region
        %s133 = ssub.s32 %s20, 1
        // Predicated region
        $region13: #{dcgan_discriminator_forward.6} parent=11 // pred_check
          %p134 = pneg %p67
        $region14: #{dcgan_discriminator_forward.6} parent=11 // pred_check_branch
          %136 = sbr.rel (%p134) target = $region16
        $region15: #{dcgan_discriminator_forward.6} parent=11 // pred_region
          %s138 = ssub.s32 384, 384
          %139 = vsyncadd [#allocation6], %s138
          %s140 = sshll.u32 [#allocation5], 4
          %s141 = int_to_ptr.vmem [resolvable:$true] %s140
          %146 = dma.hbm_to_vmem [thread:$0]  %s1, 384, %s141, [#allocation6], 64, 64, 4
        $region16: #{dcgan_discriminator_forward.6} parent=11 // pred_fallthru
          _
      $region12: #{dcgan_discriminator_forward.6} parent=5 // pred_fallthru
        _
      %p147 = scmp.lt.s32.totalorder %s20, 8
      // Predicated region
      $region17: #{dcgan_discriminator_forward.6} parent=5 // pred_check
        %p148 = pneg %p147
      $region18: #{dcgan_discriminator_forward.6} parent=5 // pred_check_branch
        %150 = sbr.rel (%p148) target = $region20
      $region19: #{dcgan_discriminator_forward.6} parent=5 // pred_region
        // Predicated region
        $region21: #{dcgan_discriminator_forward.6} parent=19 // pred_check
          %p151 = pneg %p40
        $region22: #{dcgan_discriminator_forward.6} parent=19 // pred_check_branch
          %153 = sbr.rel (%p151) target = $region24
        $region23: #{dcgan_discriminator_forward.6} parent=19 // pred_region
          %s154 = sand.u32 %s30, 1
          %s155 = scalar_lea.sflag [#allocation3], %s154
          %s156 = sand.u32 %s30, 1
          %s157 = smul.addr %s156, 32
          %s158 = scalar_lea.vmem [#allocation2], %s157
          %s159 = smul.u32 8, %s20
          %s161 = ssub.s32 512, 512
          %162 = vsyncadd %s155, %s161
          %s163 = smul.addr %s159, 64
          %s164 = scalar_lea.hbm %s0, %s163
          %s165 = sshll.u32 %s158, 4
          %s166 = int_to_ptr.vmem [resolvable:$true] %s165
          %171 = dma.hbm_to_vmem [thread:$0]  %s164, 512, %s166, %s155, 64, 64, 4
        $region24: #{dcgan_discriminator_forward.6} parent=19 // pred_fallthru
          _
      $region20: #{dcgan_discriminator_forward.6} parent=5 // pred_fallthru
        _
      %p172 = scmp.le.s32.totalorder 1, %s20
      %p173 = scmp.lt.s32.totalorder %s20, 9
      %p174 = pnand %p172, %p173
      %p175 = pneg %p174
      // Predicated region
      $region25: #{dcgan_discriminator_forward.6} parent=5 // pred_check
        _
      $region26: #{dcgan_discriminator_forward.6} parent=5 // pred_check_branch
        %177 = sbr.rel (%p174) target = $region28
      $region27: #{dcgan_discriminator_forward.6} parent=5 // pred_region
        %s178 = ssub.s32 %s20, 1
        %s179 = sand.u32 %s33, 1
        %s180 = scalar_lea.sflag [#allocation3], %s179
        %s181 = sand.u32 %s33, 1
        %s182 = smul.addr %s181, 32
        %s183 = scalar_lea.vmem [#allocation2], %s182
        // Predicated region
        $region29: #{dcgan_discriminator_forward.6} parent=27 // pred_check
          %p184 = pneg %p46
        $region30: #{dcgan_discriminator_forward.6} parent=27 // pred_check_branch
          %186 = sbr.rel (%p184) target = $region32
        $region31: #{dcgan_discriminator_forward.6} parent=27 // pred_region
          %187 = dma.done %s180, 512
        $region32: #{dcgan_discriminator_forward.6} parent=27 // pred_fallthru
          _
        // Predicated region
        $region33: #{dcgan_discriminator_forward.6} parent=27 // pred_check
          %p188 = pneg %p67
        $region34: #{dcgan_discriminator_forward.6} parent=27 // pred_check_branch
          %190 = sbr.rel (%p188) target = $region36
        $region35: #{dcgan_discriminator_forward.6} parent=27 // pred_region
          %191 = dma.done [#allocation6], 384
        $region36: #{dcgan_discriminator_forward.6} parent=27 // pred_fallthru
          _
        %s192 = sand.u32 %s33, 1
        %s193 = scalar_lea.sflag [#allocation3], %s192
        %s194 = sand.u32 %s33, 1
        %s195 = smul.addr %s194, 32
        %s196 = scalar_lea.vmem [#allocation2], %s195
        %p197 = pneg %p46
        %p198 = pneg %p43
        %p199 = pneg %p67
        %p200 = pneg %p64
        %p201 = pneg %p93
        %p202 = pneg %p90
        %s203 = sand.u32 %s80, 1
        %s204 = scalar_lea.sflag [#allocation4], %s203
        %s205 = sand.u32 %s80, 1
        %s206 = smul.addr %s205, 32
        %s207 = scalar_lea.vmem [#allocation7], %s206
        %p208 = pneg %p119
        %p209 = pneg %p116
        %s210 = sand.u32 %s106, 1
        %s211 = scalar_lea.sflag [#allocation9], %s210
        %s212 = sand.u32 %s106, 1
        %s213 = smul.addr %s212, 2
        %s214 = scalar_lea.vmem [#allocation8], %s213
        %s215 = smul.u32 8, %s25
        %s216 = smul.u32 8, %s25
        %v218 = vld [vmem:[%s183] sm:$0xf]
        %v219 = vld [vmem:[%s183 + $0x4] sm:$0xf]
        %v220 = vld [vmem:[%s183 + $0x8] sm:$0xf]
        %v221 = vld [vmem:[%s183 + $0xc] sm:$0xf]
        %v222 = vld [vmem:[%s183 + $0x10] sm:$0xf]
        %v223 = vld [vmem:[%s183 + $0x14] sm:$0xf]
        %v224 = vld [vmem:[%s183 + $0x18] sm:$0xf]
        %v225 = vld [vmem:[%s183 + $0x1c] sm:$0xf]
        %v226 = vld [vmem:[#allocation5] sm:$0xf]
        %v227 = vld [vmem:[#allocation5 + $0x4] sm:$0xf]
        %v228 = vld [vmem:[#allocation5 + $0x8] sm:$0xf]
        %v229 = vld [vmem:[#allocation5 + $0xc] sm:$0xf]
        %v230 = vld [vmem:[#allocation5 + $0x10] sm:$0xf]
        %v231 = vld [vmem:[#allocation5 + $0x14] sm:$0xf]
        %v240 = vunpack.c.l.b16 %v218
        %v241 = vunpack.c.l.b16 %v219
        %v242 = vunpack.c.l.b16 %v220
        %v243 = vunpack.c.l.b16 %v221
        %v244 = vunpack.c.l.b16 %v222
        %v245 = vunpack.c.l.b16 %v223
        %v246 = vunpack.c.l.b16 %v224
        %v247 = vunpack.c.l.b16 %v225
        %v248 = vpack.c.b16 %v241, %v240
        %v249 = vpack.c.b16 %v243, %v242
        %v250 = vpack.c.b16 %v245, %v244
        %v251 = vpack.c.b16 %v247, %v246
        %v258 = vunpack.c.l.b16 %v226
        %v259 = vunpack.c.l.b16 %v227
        %v260 = vunpack.c.l.b16 %v228
        %v261 = vunpack.c.l.b16 %v229
        %v262 = vunpack.c.l.b16 %v230
        %v263 = vunpack.c.l.b16 %v231
        %v264 = vpack.c.b16 %v259, %v258
        %v265 = vpack.c.b16 %v261, %v260
        %v266 = vpack.c.b16 %v263, %v262
        %vm270 = vcmask 392192
        %v272 = vsel %vm270, %v248, 0
        %v275 = vsel %vm270, %v249, 0
        %v278 = vsel %vm270, %v250, 0
        %v281 = vsel %vm270, %v251, 0
        %283 = vmatprep.subr.bf16.mxu0 0
        %284 = vmatpush1.bf16.msra.mxu0 %v264
        %285 = vmatprep.subr.bf16.mxu0 0
        %286 = vmatpush1.bf16.msra.mxu0 %v265
        %287 = vmatprep.subr.bf16.mxu0 0
        %288 = vmatpush1.bf16.msra.mxu0 %v266
        %289 = vmatprep.subr.bf16.mxu0 0
        %290 = vmatpush1.bf16.msra.mxu0 0
        %291 = vmatprep.subr.bf16.mxu0 0
        %292 = vmatpush1.bf16.msra.mxu0 0
        %293 = vmatprep.subr.bf16.mxu0 0
        %294 = vmatpush1.bf16.msra.mxu0 0
        %295 = vmatprep.subr.bf16.mxu0 0
        %296 = vmatpush1.bf16.msra.mxu0 0
        %297 = vmatprep.subr.bf16.mxu0 0
        %298 = vmatpush1.bf16.msra.mxu0 0
        %299 = vmatprep.subr.bf16.mxu0 0
        %300 = vmatpush1.bf16.msra.mxu0 0
        %301 = vmatprep.subr.bf16.mxu0 0
        %302 = vmatpush1.bf16.msra.mxu0 0
        %303 = vmatprep.subr.bf16.mxu0 0
        %304 = vmatpush1.bf16.msra.mxu0 0
        %305 = vmatprep.subr.bf16.mxu0 0
        %306 = vmatpush1.bf16.msra.mxu0 0
        %307 = vmatprep.subr.bf16.mxu0 0
        %308 = vmatpush1.bf16.msra.mxu0 0
        %309 = vmatprep.subr.bf16.mxu0 0
        %310 = vmatpush1.bf16.msra.mxu0 0
        %311 = vmatprep.subr.bf16.mxu0 0
        %312 = vmatpush1.bf16.msra.mxu0 0
        %313 = vmatprep.subr.bf16.mxu0 0
        %314 = vmatpush1.bf16.msra.mxu0 0
        %315 = vmatprep.mubr.bf16.mxu0 0
        %316 = vmatmul.mubr.bf16.gmra.mrb[0].mxu0 %v272
        %v317 = vpop.f32.mrb[0].mxu0
        %v318 = vadd.f32 0.0, %v317
        %v319 = vpop.f32.mrb[0].mxu0
        %v320 = vpop.f32.mrb[0].mxu0
        %v321 = vadd.f32 0.0, %v320
        %v322 = vpop.f32.mrb[0].mxu0
        %323 = vmatprep.mubr.bf16.mxu0 0
        %324 = vmatmul.mubr.bf16.gmra.mrb[0].mxu0 %v275
        %v325 = vpop.f32.mrb[0].mxu0
        %v326 = vadd.f32 0.0, %v325
        %v327 = vpop.f32.mrb[0].mxu0
        %v328 = vpop.f32.mrb[0].mxu0
        %v329 = vadd.f32 0.0, %v328
        %v330 = vpop.f32.mrb[0].mxu0
        %331 = vmatprep.mubr.bf16.mxu0 0
        %332 = vmatmul.mubr.bf16.gmra.mrb[0].mxu0 %v278
        %v333 = vpop.f32.mrb[0].mxu0
        %v334 = vadd.f32 0.0, %v333
        %v335 = vpop.f32.mrb[0].mxu0
        %v336 = vpop.f32.mrb[0].mxu0
        %v337 = vadd.f32 0.0, %v336
        %v338 = vpop.f32.mrb[0].mxu0
        %339 = vmatprep.mubr.bf16.mxu0 0
        %340 = vmatmul.mubr.bf16.gmra.mrb[0].mxu0 %v281
        %v341 = vpop.f32.mrb[0].mxu0
        %v342 = vadd.f32 0.0, %v341
        %v343 = vpop.f32.mrb[0].mxu0
        %v344 = vpop.f32.mrb[0].mxu0
        %v345 = vadd.f32 0.0, %v344
        %v346 = vpop.f32.mrb[0].mxu0
        %347 = vdwg.mxu0
        %v348 = vpack.c.bf16 %v321, %v318
        %v349 = vpack.c.bf16 %v329, %v326
        %v350 = vpack.c.bf16 %v337, %v334
        %v351 = vpack.c.bf16 %v345, %v342
        %v356 = vunpack.c.l.b16 %v348
        %v357 = vunpack.c.h.b16 %v348
        %v358 = vunpack.c.l.b16 %v349
        %v359 = vunpack.c.h.b16 %v349
        %v360 = vunpack.c.l.b16 %v350
        %v361 = vunpack.c.h.b16 %v350
        %v362 = vunpack.c.l.b16 %v351
        %v363 = vunpack.c.h.b16 %v351
        %v364 = vpack.c.b16 %v356, %v356
        %v365 = vpack.c.b16 %v357, %v357
        %v366 = vpack.c.b16 %v358, %v358
        %v367 = vpack.c.b16 %v359, %v359
        %v368 = vpack.c.b16 %v360, %v360
        %v369 = vpack.c.b16 %v361, %v361
        %v370 = vpack.c.b16 %v362, %v362
        %v371 = vpack.c.b16 %v363, %v363
        %vm380 = vcmask 257024
        %381 = vst.msk [vmem:[%s207] sm:$0xf] %vm380, %v364
        %382 = vst.msk [vmem:[%s207 + $0x4] sm:$0xf] %vm380, %v365
        %383 = vst.msk [vmem:[%s207 + $0x8] sm:$0xf] %vm380, %v366
        %384 = vst.msk [vmem:[%s207 + $0xc] sm:$0xf] %vm380, %v367
        %385 = vst.msk [vmem:[%s207 + $0x10] sm:$0xf] %vm380, %v368
        %386 = vst.msk [vmem:[%s207 + $0x14] sm:$0xf] %vm380, %v369
        %387 = vst.msk [vmem:[%s207 + $0x18] sm:$0xf] %vm380, %v370
        %388 = vst.msk [vmem:[%s207 + $0x1c] sm:$0xf] %vm380, %v371
        %vm389 = vcmask 261120
        %v390 = vsel %vm389, %v318, 0.0
        %v391 = vsel %vm389, %v321, 0.0
        %v392 = vadd.f32 %v390, %v391
        %v393 = vsel %vm389, %v326, 0.0
        %v394 = vadd.f32 %v392, %v393
        %v395 = vsel %vm389, %v329, 0.0
        %v396 = vadd.f32 %v394, %v395
        %v397 = vsel %vm389, %v334, 0.0
        %v398 = vadd.f32 %v396, %v397
        %v399 = vsel %vm389, %v337, 0.0
        %v400 = vadd.f32 %v398, %v399
        %v401 = vsel %vm389, %v342, 0.0
        %v402 = vadd.f32 %v400, %v401
        %v403 = vsel %vm389, %v345, 0.0
        %v404 = vadd.f32 %v402, %v403
        %v405 = vrot.slane %v404, 4
        %v406 = vadd.f32 %v404, %v405
        %v407 = vrot.slane %v406, 2
        %v408 = vadd.f32 %v406, %v407
        %v409 = vrot.slane %v408, 1
        %v410 = vadd.f32 %v408, %v409
        %v411 = vmul.f32 %v318, %v318
        %v412 = vmul.f32 %v321, %v321
        %v413 = vmul.f32 %v326, %v326
        %v414 = vmul.f32 %v329, %v329
        %v415 = vmul.f32 %v334, %v334
        %v416 = vmul.f32 %v337, %v337
        %v417 = vmul.f32 %v342, %v342
        %v418 = vmul.f32 %v345, %v345
        %v419 = vsel %vm389, %v411, 0.0
        %v420 = vsel %vm389, %v412, 0.0
        %v421 = vadd.f32 %v419, %v420
        %v422 = vsel %vm389, %v413, 0.0
        %v423 = vadd.f32 %v421, %v422
        %v424 = vsel %vm389, %v414, 0.0
        %v425 = vadd.f32 %v423, %v424
        %v426 = vsel %vm389, %v415, 0.0
        %v427 = vadd.f32 %v425, %v426
        %v428 = vsel %vm389, %v416, 0.0
        %v429 = vadd.f32 %v427, %v428
        %v430 = vsel %vm389, %v417, 0.0
        %v431 = vadd.f32 %v429, %v430
        %v432 = vsel %vm389, %v418, 0.0
        %v433 = vadd.f32 %v431, %v432
        %v434 = vrot.slane %v433, 4
        %v435 = vadd.f32 %v433, %v434
        %v436 = vrot.slane %v435, 2
        %v437 = vadd.f32 %v435, %v436
        %v438 = vrot.slane %v437, 1
        %v439 = vadd.f32 %v437, %v438
        %vm440 = vcmask 1040384
        %v441 = vsel %vm440, %v410, %v439
        %vm442 = vcmask 254976
        %443 = vst.msk [vmem:[%s214] sm:$0x3] %vm442, %v441
        %s444 = sand.u32 %s80, 1
        %s445 = scalar_lea.sflag [#allocation4], %s444
        %s446 = sand.u32 %s80, 1
        %s447 = smul.addr %s446, 32
        %s448 = scalar_lea.vmem [#allocation7], %s447
        %s449 = sand.u32 %s106, 1
        %s450 = scalar_lea.sflag [#allocation9], %s449
        %s451 = sand.u32 %s106, 1
        %s452 = smul.addr %s451, 2
        %s453 = scalar_lea.vmem [#allocation8], %s452
        // Predicated region
        $region37: #{dcgan_discriminator_forward.6} parent=27 // pred_check
          %p454 = pneg %p90
        $region38: #{dcgan_discriminator_forward.6} parent=27 // pred_check_branch
          %456 = sbr.rel (%p454) target = $region40
        $region39: #{dcgan_discriminator_forward.6} parent=27 // pred_region
          %s457 = smul.u32 8, %s25
          %s459 = ssub.s32 512, 512
          %460 = vsyncadd %s445, %s459
          %s461 = smul.addr %s457, 64
          %s462 = scalar_lea.hbm %s2, %s461
          %s463 = sshll.u32 %s448, 4
          %s464 = int_to_ptr.vmem [resolvable:$true] %s463
          %469 = dma.vmem_to_hbm [thread:$0]  %s464, 512, %s462, %s445, 64, 64, 4
        $region40: #{dcgan_discriminator_forward.6} parent=27 // pred_fallthru
          _
        // Predicated region
        $region41: #{dcgan_discriminator_forward.6} parent=27 // pred_check
          %p470 = pneg %p116
        $region42: #{dcgan_discriminator_forward.6} parent=27 // pred_check_branch
          %472 = sbr.rel (%p470) target = $region44
        $region43: #{dcgan_discriminator_forward.6} parent=27 // pred_region
          %s474 = ssub.s32 32, 32
          %475 = vsyncadd %s450, %s474
          %s476 = smul.addr %s25, 32
          %s477 = scalar_lea.hbm %s3, %s476
          %s479 = sshll.u32 %s453, 4
          %s480 = int_to_ptr.vmem [resolvable:$true] %s479
          %482 = dma.vmem_to_hbm [thread:$0]  %s480, 32, %s477, %s450
        $region44: #{dcgan_discriminator_forward.6} parent=27 // pred_fallthru
          _
      $region28: #{dcgan_discriminator_forward.6} parent=5 // pred_fallthru
        _
      %p483 = scmp.le.s32.totalorder 2, %s20
      // Predicated region
      $region45: #{dcgan_discriminator_forward.6} parent=5 // pred_check
        %p484 = pneg %p483
      $region46: #{dcgan_discriminator_forward.6} parent=5 // pred_check_branch
        %486 = sbr.rel (%p484) target = $region48
      $region47: #{dcgan_discriminator_forward.6} parent=5 // pred_region
        %s487 = ssub.s32 %s20, 2
        // Predicated region
        $region49: #{dcgan_discriminator_forward.6} parent=47 // pred_check
          %p488 = pneg %p96
        $region50: #{dcgan_discriminator_forward.6} parent=47 // pred_check_branch
          %490 = sbr.rel (%p488) target = $region52
        $region51: #{dcgan_discriminator_forward.6} parent=47 // pred_region
          %s491 = sand.u32 %s81, 1
          %s492 = scalar_lea.sflag [#allocation4], %s491
          %s493 = sand.u32 %s81, 1
          %s494 = smul.addr %s493, 32
          %s495 = scalar_lea.vmem [#allocation7], %s494
          %496 = dma.done %s492, 512
        $region52: #{dcgan_discriminator_forward.6} parent=47 // pred_fallthru
          _
        // Predicated region
        $region53: #{dcgan_discriminator_forward.6} parent=47 // pred_check
          %p497 = pneg %p122
        $region54: #{dcgan_discriminator_forward.6} parent=47 // pred_check_branch
          %499 = sbr.rel (%p497) target = $region56
        $region55: #{dcgan_discriminator_forward.6} parent=47 // pred_region
          %s500 = sand.u32 %s107, 1
          %s501 = scalar_lea.sflag [#allocation9], %s500
          %s502 = sand.u32 %s107, 1
          %s503 = smul.addr %s502, 2
          %s504 = scalar_lea.vmem [#allocation8], %s503
          %505 = dma.done %s501, 32
        $region56: #{dcgan_discriminator_forward.6} parent=47 // pred_fallthru
          _
      $region48: #{dcgan_discriminator_forward.6} parent=5 // pred_fallthru
        _
    $region6: #{dcgan_discriminator_forward.6} parent=1 // loop_footer
      %s24 = sadd.s32 1, %s20
    $region7: #{dcgan_discriminator_forward.6} parent=1 // loop_footer_branch
      %19 = sbr.rel target = $region3
    $region8: #{dcgan_discriminator_forward.6} parent=1 // loop_exit
      _
    %506 = vsyncpa [#allocation3], 1
    %s507 = scalar_lea.sflag [#allocation3], 1
    %508 = vsyncpa %s507, 1
    %509 = vsyncpa [#allocation6], 1
    %510 = vsyncpa [#allocation4], 1
    %s511 = scalar_lea.sflag [#allocation4], 1
    %512 = vsyncpa %s511, 1
    %513 = vsyncpa [#allocation9], 1
    %s514 = scalar_lea.sflag [#allocation9], 1
    %515 = vsyncpa %s514, 1

// kernel: dcgan_discriminator_forward.7
$region0: #{dcgan_discriminator_forward.7}
  #allocation0 [shape = 'u32[]', space=smem, size = 0x4, offset = 0x4, fixed_abs, tag = 'smem constant byte address 0x4 - core index']
  #allocation1 [shape = 'u32[144,128]{1,0:T(1,128)}', space=vmem, size = 0x12000, scoped, tag = 'internal scratch']
  %s0 = inlined_call_operand.hbm [shape: bf16[512,32], index: 0, kind: input, shape index: {}]
  %s1 = inlined_call_operand.hbm [shape: f32[8,2,32], index: 1, kind: input, shape index: {}]
  %s2 = inlined_call_operand.hbm [shape: f32[1,32], index: 2, kind: input, shape index: {}]
  %s3 = inlined_call_operand.hbm [shape: f32[1,32], index: 3, kind: input, shape index: {}]
  %s4 = inlined_call_operand.hbm [shape: bf16[512,32], index: 4, kind: output, shape index: {}]
  %s5 = sld [smem:[#allocation0]]
  $region65: #{dcgan_discriminator_forward.7} parent=0
    _
  %s7 = ssub.s32 1, %s5
  %s8 = scalar_select 0, %s7, %s5
  $region1: #{dcgan_discriminator_forward.7} parent=0
    #allocation2 [shape = 'u8[32768]{0}', space=vmem, size = 0x8000, scoped, tag = 'input window, operand 0']
    #allocation3 [shape = 's32[2]{0}', space=sflag, size = 0x8, scoped, tag = 'scoped memory for dcgan_discriminator_forward.7']
    #allocation4 [shape = 's32[2]{0}', space=sflag, size = 0x8, scoped, tag = 'scoped memory for dcgan_discriminator_forward.7']
    #allocation5 [shape = 'u8[8192]{0}', space=vmem, size = 0x2000, scoped, tag = 'input window, operand 1, single buffered']
    #allocation6 [shape = 's32[1]{0}', space=sflag, size = 0x4, scoped, tag = 'scoped memory for dcgan_discriminator_forward.7']
    #allocation7 [shape = 'u8[512]{0}', space=vmem, size = 0x400, scoped, tag = 'input window, operand 2, single buffered']
    #allocation8 [shape = 'u8[512]{0}', space=vmem, size = 0x400, scoped, tag = 'input window, operand 3, single buffered']
    #allocation9 [shape = 's32[1]{0}', space=sflag, size = 0x4, scoped, tag = 'scoped memory for dcgan_discriminator_forward.7']
    #allocation10 [shape = 'u8[32768]{0}', space=vmem, size = 0x8000, scoped, tag = 'output window, operand 0']
    %9 = vsyncpa [#allocation3], 0
    %s10 = scalar_lea.sflag [#allocation3], 1
    %11 = vsyncpa %s10, 0
    %12 = vsyncpa [#allocation6], 0
    %13 = vsyncpa [#allocation9], 0
    %14 = vsyncpa [#allocation4], 0
    %s15 = scalar_lea.sflag [#allocation4], 1
    %16 = vsyncpa %s15, 0
    loop: start=0, step=1, limit=10
    $region2: #{dcgan_discriminator_forward.7} parent=1 // loop_pre_header
      _
    $region3: #{dcgan_discriminator_forward.7} parent=1 // loop_header
      %s18 = sphi 0, %s22
      %p19 = scmp.ge.s32.totalorder %s18, 10
      %s28 = sphi 0, %s30
      %s31 = sphi 0, %s28
      %s32 = sphi 0, %s31
      %s48 = sphi 0, %s32
      %s52 = sphi 0, %s52
      %s54 = sphi 0, %s52
      %s55 = sphi 0, %s54
      %s69 = sphi 0, %s55
      %s73 = sphi 0, %s73
      %s75 = sphi 0, %s73
      %s76 = sphi 0, %s75
      %s90 = sphi 0, %s76
      %s94 = sphi 0, %s94
      %s96 = sphi 0, %s94
      %s97 = sphi 0, %s96
      %s111 = sphi 0, %s97
      %s117 = sphi 0, %s119
      %s120 = sphi 0, %s117
      %s121 = sphi 0, %s120
      %s137 = sphi 0, %s121
    $region4: #{dcgan_discriminator_forward.7} parent=1 // loop_header_branch
      %21 = sbr.rel (%p19) target = $region8
    $region5: #{dcgan_discriminator_forward.7} parent=1 // loop_body
      %s23 = ssub.s32 %s18, 1
      %s24 = ssub.s32 %s18, 2
      %s25 = sadd.s32 %s18, 1
      %s26 = ssub.s32 %s18, %s25
      %p27 = scmp.eq.s32.totalorder %s26, 0
      %s29 = sadd.s32 %s28, 1
      %s30 = scalar_select %p27, %s28, %s29
      %p33 = pneg %p27
      %p34 = scmp.eq.s32.totalorder %s18, 7
      %p35 = por %p33, %p34
      %p36 = scmp.ne.s32.totalorder %s28, %s31
      %p37 = scmp.eq.s32.totalorder %s18, 0
      %p38 = por %p36, %p37
      %p39 = scmp.ne.s32.totalorder %s28, %s31
      %p40 = scmp.eq.s32.totalorder %s23, 7
      %p41 = por %p39, %p40
      %p42 = scmp.ne.s32.totalorder %s31, %s32
      %p43 = scmp.eq.s32.totalorder %s23, 0
      %p44 = por %p42, %p43
      %p45 = scmp.ne.s32.totalorder %s31, %s32
      %p46 = scmp.eq.s32.totalorder %s24, 7
      %p47 = por %p45, %p46
      %p49 = scmp.ne.s32.totalorder %s32, %s48
      %p50 = scmp.eq.s32.totalorder %s24, 0
      %p51 = por %p49, %p50
      %s53 = sadd.s32 %s52, 1
      %p56 = scmp.eq.s32.totalorder %s18, 7
      %p57 = scmp.ne.s32.totalorder %s52, %s54
      %p58 = scmp.eq.s32.totalorder %s18, 0
      %p59 = por %p57, %p58
      %p60 = scmp.ne.s32.totalorder %s52, %s54
      %p61 = scmp.eq.s32.totalorder %s23, 7
      %p62 = por %p60, %p61
      %p63 = scmp.ne.s32.totalorder %s54, %s55
      %p64 = scmp.eq.s32.totalorder %s23, 0
      %p65 = por %p63, %p64
      %p66 = scmp.ne.s32.totalorder %s54, %s55
      %p67 = scmp.eq.s32.totalorder %s24, 7
      %p68 = por %p66, %p67
      %p70 = scmp.ne.s32.totalorder %s55, %s69
      %p71 = scmp.eq.s32.totalorder %s24, 0
      %p72 = por %p70, %p71
      %s74 = sadd.s32 %s73, 1
      %p77 = scmp.eq.s32.totalorder %s18, 7
      %p78 = scmp.ne.s32.totalorder %s73, %s75
      %p79 = scmp.eq.s32.totalorder %s18, 0
      %p80 = por %p78, %p79
      %p81 = scmp.ne.s32.totalorder %s73, %s75
      %p82 = scmp.eq.s32.totalorder %s23, 7
      %p83 = por %p81, %p82
      %p84 = scmp.ne.s32.totalorder %s75, %s76
      %p85 = scmp.eq.s32.totalorder %s23, 0
      %p86 = por %p84, %p85
      %p87 = scmp.ne.s32.totalorder %s75, %s76
      %p88 = scmp.eq.s32.totalorder %s24, 7
      %p89 = por %p87, %p88
      %p91 = scmp.ne.s32.totalorder %s76, %s90
      %p92 = scmp.eq.s32.totalorder %s24, 0
      %p93 = por %p91, %p92
      %s95 = sadd.s32 %s94, 1
      %p98 = scmp.eq.s32.totalorder %s18, 7
      %p99 = scmp.ne.s32.totalorder %s94, %s96
      %p100 = scmp.eq.s32.totalorder %s18, 0
      %p101 = por %p99, %p100
      %p102 = scmp.ne.s32.totalorder %s94, %s96
      %p103 = scmp.eq.s32.totalorder %s23, 7
      %p104 = por %p102, %p103
      %p105 = scmp.ne.s32.totalorder %s96, %s97
      %p106 = scmp.eq.s32.totalorder %s23, 0
      %p107 = por %p105, %p106
      %p108 = scmp.ne.s32.totalorder %s96, %s97
      %p109 = scmp.eq.s32.totalorder %s24, 7
      %p110 = por %p108, %p109
      %p112 = scmp.ne.s32.totalorder %s97, %s111
      %p113 = scmp.eq.s32.totalorder %s24, 0
      %p114 = por %p112, %p113
      %s115 = ssub.s32 %s18, %s25
      %p116 = scmp.eq.s32.totalorder %s115, 0
      %s118 = sadd.s32 %s117, 1
      %s119 = scalar_select %p116, %s117, %s118
      %p122 = pneg %p116
      %p123 = scmp.eq.s32.totalorder %s18, 7
      %p124 = por %p122, %p123
      %p125 = scmp.ne.s32.totalorder %s117, %s120
      %p126 = scmp.eq.s32.totalorder %s18, 0
      %p127 = por %p125, %p126
      %p128 = scmp.ne.s32.totalorder %s117, %s120
      %p129 = scmp.eq.s32.totalorder %s23, 7
      %p130 = por %p128, %p129
      %p131 = scmp.ne.s32.totalorder %s120, %s121
      %p132 = scmp.eq.s32.totalorder %s23, 0
      %p133 = por %p131, %p132
      %p134 = scmp.ne.s32.totalorder %s120, %s121
      %p135 = scmp.eq.s32.totalorder %s24, 7
      %p136 = por %p134, %p135
      %p138 = scmp.ne.s32.totalorder %s121, %s137
      %p139 = scmp.eq.s32.totalorder %s24, 0
      %p140 = por %p138, %p139
      %p141 = scmp.le.s32.totalorder 1, %s18
      %p142 = scmp.lt.s32.totalorder %s18, 9
      %p143 = pnand %p141, %p142
      %p144 = pneg %p143
      // Predicated region
      $region9: #{dcgan_discriminator_forward.7} parent=5 // pred_check
        _
      $region10: #{dcgan_discriminator_forward.7} parent=5 // pred_check_branch
        %146 = sbr.rel (%p143) target = $region12
      $region11: #{dcgan_discriminator_forward.7} parent=5 // pred_region
        %s147 = ssub.s32 %s18, 1
        // Predicated region
        $region13: #{dcgan_discriminator_forward.7} parent=11 // pred_check
          %p148 = pneg %p65
        $region14: #{dcgan_discriminator_forward.7} parent=11 // pred_check_branch
          %150 = sbr.rel (%p148) target = $region16
        $region15: #{dcgan_discriminator_forward.7} parent=11 // pred_region
          %s152 = ssub.s32 256, 256
          %153 = vsyncadd [#allocation6], %s152
          %s154 = sshll.u32 [#allocation5], 4
          %s155 = int_to_ptr.vmem [resolvable:$true] %s154
          %160 = dma.hbm_to_vmem [thread:$0]  %s1, 256, %s155, [#allocation6], 32, 32, 2
        $region16: #{dcgan_discriminator_forward.7} parent=11 // pred_fallthru
          _
        // Predicated region
        $region17: #{dcgan_discriminator_forward.7} parent=11 // pred_check
          %p161 = pneg %p86
        $region18: #{dcgan_discriminator_forward.7} parent=11 // pred_check_branch
          %163 = sbr.rel (%p161) target = $region20
        $region19: #{dcgan_discriminator_forward.7} parent=11 // pred_region
          %s165 = ssub.s32 16, 16
          %166 = vsyncadd [#allocation6], %s165
          %s168 = sshll.u32 [#allocation7], 4
          %s169 = int_to_ptr.vmem [resolvable:$true] %s168
          %171 = dma.hbm_to_vmem [thread:$0]  %s2, 16, %s169, [#allocation6]
        $region20: #{dcgan_discriminator_forward.7} parent=11 // pred_fallthru
          _
        // Predicated region
        $region21: #{dcgan_discriminator_forward.7} parent=11 // pred_check
          %p172 = pneg %p107
        $region22: #{dcgan_discriminator_forward.7} parent=11 // pred_check_branch
          %174 = sbr.rel (%p172) target = $region24
        $region23: #{dcgan_discriminator_forward.7} parent=11 // pred_region
          %s176 = ssub.s32 16, 16
          %177 = vsyncadd [#allocation9], %s176
          %s179 = sshll.u32 [#allocation8], 4
          %s180 = int_to_ptr.vmem [resolvable:$true] %s179
          %182 = dma.hbm_to_vmem [thread:$0]  %s3, 16, %s180, [#allocation9]
        $region24: #{dcgan_discriminator_forward.7} parent=11 // pred_fallthru
          _
      $region12: #{dcgan_discriminator_forward.7} parent=5 // pred_fallthru
        _
      %p183 = scmp.lt.s32.totalorder %s18, 8
      // Predicated region
      $region25: #{dcgan_discriminator_forward.7} parent=5 // pred_check
        %p184 = pneg %p183
      $region26: #{dcgan_discriminator_forward.7} parent=5 // pred_check_branch
        %186 = sbr.rel (%p184) target = $region28
      $region27: #{dcgan_discriminator_forward.7} parent=5 // pred_region
        // Predicated region
        $region29: #{dcgan_discriminator_forward.7} parent=27 // pred_check
          %p187 = pneg %p38
        $region30: #{dcgan_discriminator_forward.7} parent=27 // pred_check_branch
          %189 = sbr.rel (%p187) target = $region32
        $region31: #{dcgan_discriminator_forward.7} parent=27 // pred_region
          %s190 = sand.u32 %s28, 1
          %s191 = scalar_lea.sflag [#allocation3], %s190
          %s192 = sand.u32 %s28, 1
          %s193 = smul.addr %s192, 32
          %s194 = scalar_lea.vmem [#allocation2], %s193
          %s195 = smul.u32 8, %s18
          %s197 = ssub.s32 512, 512
          %198 = vsyncadd %s191, %s197
          %s199 = smul.addr %s195, 64
          %s200 = scalar_lea.hbm %s0, %s199
          %s201 = sshll.u32 %s194, 4
          %s202 = int_to_ptr.vmem [resolvable:$true] %s201
          %207 = dma.hbm_to_vmem [thread:$0]  %s200, 512, %s202, %s191, 64, 64, 4
        $region32: #{dcgan_discriminator_forward.7} parent=27 // pred_fallthru
          _
      $region28: #{dcgan_discriminator_forward.7} parent=5 // pred_fallthru
        _
      %p208 = scmp.le.s32.totalorder 1, %s18
      %p209 = scmp.lt.s32.totalorder %s18, 9
      %p210 = pnand %p208, %p209
      %p211 = pneg %p210
      // Predicated region
      $region33: #{dcgan_discriminator_forward.7} parent=5 // pred_check
        _
      $region34: #{dcgan_discriminator_forward.7} parent=5 // pred_check_branch
        %213 = sbr.rel (%p210) target = $region36
      $region35: #{dcgan_discriminator_forward.7} parent=5 // pred_region
        %s214 = ssub.s32 %s18, 1
        %s215 = sand.u32 %s31, 1
        %s216 = scalar_lea.sflag [#allocation3], %s215
        %s217 = sand.u32 %s31, 1
        %s218 = smul.addr %s217, 32
        %s219 = scalar_lea.vmem [#allocation2], %s218
        // Predicated region
        $region37: #{dcgan_discriminator_forward.7} parent=35 // pred_check
          %p220 = pneg %p44
        $region38: #{dcgan_discriminator_forward.7} parent=35 // pred_check_branch
          %222 = sbr.rel (%p220) target = $region40
        $region39: #{dcgan_discriminator_forward.7} parent=35 // pred_region
          %223 = dma.done %s216, 512
        $region40: #{dcgan_discriminator_forward.7} parent=35 // pred_fallthru
          _
        // Predicated region
        $region41: #{dcgan_discriminator_forward.7} parent=35 // pred_check
          %p224 = pneg %p65
        $region42: #{dcgan_discriminator_forward.7} parent=35 // pred_check_branch
          %226 = sbr.rel (%p224) target = $region44
        $region43: #{dcgan_discriminator_forward.7} parent=35 // pred_region
          %227 = dma.done [#allocation6], 256
        $region44: #{dcgan_discriminator_forward.7} parent=35 // pred_fallthru
          _
        // Predicated region
        $region45: #{dcgan_discriminator_forward.7} parent=35 // pred_check
          %p228 = pneg %p86
        $region46: #{dcgan_discriminator_forward.7} parent=35 // pred_check_branch
          %230 = sbr.rel (%p228) target = $region48
        $region47: #{dcgan_discriminator_forward.7} parent=35 // pred_region
          %231 = dma.done [#allocation6], 16
        $region48: #{dcgan_discriminator_forward.7} parent=35 // pred_fallthru
          _
        // Predicated region
        $region49: #{dcgan_discriminator_forward.7} parent=35 // pred_check
          %p232 = pneg %p107
        $region50: #{dcgan_discriminator_forward.7} parent=35 // pred_check_branch
          %234 = sbr.rel (%p232) target = $region52
        $region51: #{dcgan_discriminator_forward.7} parent=35 // pred_region
          %235 = dma.done [#allocation9], 16
        $region52: #{dcgan_discriminator_forward.7} parent=35 // pred_fallthru
          _
        %s236 = sand.u32 %s31, 1
        %s237 = scalar_lea.sflag [#allocation3], %s236
        %s238 = sand.u32 %s31, 1
        %s239 = smul.addr %s238, 32
        %s240 = scalar_lea.vmem [#allocation2], %s239
        %p241 = pneg %p44
        %p242 = pneg %p41
        %p243 = pneg %p65
        %p244 = pneg %p62
        %p245 = pneg %p86
        %p246 = pneg %p83
        %p247 = pneg %p107
        %p248 = pneg %p104
        %p249 = pneg %p133
        %p250 = pneg %p130
        %s251 = sand.u32 %s120, 1
        %s252 = scalar_lea.sflag [#allocation4], %s251
        %s253 = sand.u32 %s120, 1
        %s254 = smul.addr %s253, 32
        %s255 = scalar_lea.vmem [#allocation10], %s254
        %s256 = smul.u32 8, %s23
        %s257 = smul.u32 8, %s23
        %v258 = vld [vmem:[#allocation5] sm:$0x3]
        %v259 = vld [vmem:[#allocation5 + $0x2] sm:$0x3]
        %v260 = vld [vmem:[#allocation5 + $0x4] sm:$0x3]
        %v261 = vld [vmem:[#allocation5 + $0x6] sm:$0x3]
        %v262 = vld [vmem:[#allocation5 + $0x8] sm:$0x3]
        %v263 = vld [vmem:[#allocation5 + $0xa] sm:$0x3]
        %v264 = vld [vmem:[#allocation5 + $0xc] sm:$0x3]
        %v265 = vld [vmem:[#allocation5 + $0xe] sm:$0x3]
        %vm266 = vcmask 254976
        %v267 = vsel %vm266, %v258, 0.0
        %v268 = vsel %vm266, %v259, 0.0
        %v269 = vadd.f32 %v267, %v268
        %v270 = vsel %vm266, %v260, 0.0
        %v271 = vadd.f32 %v269, %v270
        %v272 = vsel %vm266, %v261, 0.0
        %v273 = vadd.f32 %v271, %v272
        %v274 = vsel %vm266, %v262, 0.0
        %v275 = vadd.f32 %v273, %v274
        %v276 = vsel %vm266, %v263, 0.0
        %v277 = vadd.f32 %v275, %v276
        %v278 = vsel %vm266, %v264, 0.0
        %v279 = vadd.f32 %v277, %v278
        %v280 = vsel %vm266, %v265, 0.0
        %v281 = vadd.f32 %v279, %v280
        %v282 = vmul.f32 %v281, 0.001953125
        %v283 = vmul.f32 %v282, %v282
        %v285 = vrot.slane %v283, 7
        %v287 = vsub.f32 %v282, %v285
        %v288 = vld [vmem:[#allocation7] sm:$0x1]
        %v289 = vadd.f32 %v287, 1e-05
        %v290 = vrsqrt.pop %v289
        %v293 = vunpack.c.l.s4 1966171168
        %v294 = vunpack.c.0.s8 %v293
        %v295 = vlaneseq
        %v296 = vshrl.u32 %v295, 7
        %v297 = vsub.s32 %v294, %v296
        %v298 = vrot.slane %v290, %v297
        %v299 = vcombine.high %v298, %v298
        %v301 = vunpack.c.l.s4 1966171168
        %v302 = vunpack.c.0.s8 %v301
        %v303 = vlaneseq
        %v304 = vshrl.u32 %v303, 7
        %v305 = vsub.s32 %v302, %v304
        %v306 = vrot.slane %v299, %v305
        %v308 = vmul.f32 %v288, %v306
        %v309 = vld [vmem:[#allocation8] sm:$0x1]
        %v310 = vmul.f32 %v282, %v308
        %v311 = vsub.f32 %v309, %v310
        %v312 = vld [vmem:[%s219] sm:$0xf]
        %v313 = vld [vmem:[%s219 + $0x4] sm:$0xf]
        %v314 = vld [vmem:[%s219 + $0x8] sm:$0xf]
        %v315 = vld [vmem:[%s219 + $0xc] sm:$0xf]
        %v316 = vld [vmem:[%s219 + $0x10] sm:$0xf]
        %v317 = vld [vmem:[%s219 + $0x14] sm:$0xf]
        %v318 = vld [vmem:[%s219 + $0x18] sm:$0xf]
        %v319 = vld [vmem:[%s219 + $0x1c] sm:$0xf]
        %v320 = vunpack.c.l.bf16 %v312
        %v321 = vunpack.c.l.bf16 %v313
        %v322 = vunpack.c.l.bf16 %v314
        %v323 = vunpack.c.l.bf16 %v315
        %v324 = vunpack.c.l.bf16 %v316
        %v325 = vunpack.c.l.bf16 %v317
        %v326 = vunpack.c.l.bf16 %v318
        %v327 = vunpack.c.l.bf16 %v319
        %v329 = vlaneseq
        %v330 = vshrl.u32 %v329, 7
        %v331 = vsub.s32 0, %v330
        %v332 = vrot.slane %v308, %v331
        %v334 = vmul.f32 %v320, %v332
        %v335 = vmul.f32 %v321, %v332
        %v336 = vmul.f32 %v322, %v332
        %v337 = vmul.f32 %v323, %v332
        %v338 = vmul.f32 %v324, %v332
        %v339 = vmul.f32 %v325, %v332
        %v340 = vmul.f32 %v326, %v332
        %v341 = vmul.f32 %v327, %v332
        %v343 = vlaneseq
        %v344 = vshrl.u32 %v343, 7
        %v345 = vsub.s32 0, %v344
        %v346 = vrot.slane %v311, %v345
        %v348 = vadd.f32 %v334, %v346
        %v349 = vadd.f32 %v335, %v346
        %v350 = vadd.f32 %v336, %v346
        %v351 = vadd.f32 %v337, %v346
        %v352 = vadd.f32 %v338, %v346
        %v353 = vadd.f32 %v339, %v346
        %v354 = vadd.f32 %v340, %v346
        %v355 = vadd.f32 %v341, %v346
        %vm356 = vcmp.gt.f32.partialorder %v348, 0.0
        %vm357 = vcmp.gt.f32.partialorder %v349, 0.0
        %vm358 = vcmp.gt.f32.partialorder %v350, 0.0
        %vm359 = vcmp.gt.f32.partialorder %v351, 0.0
        %vm360 = vcmp.gt.f32.partialorder %v352, 0.0
        %vm361 = vcmp.gt.f32.partialorder %v353, 0.0
        %vm362 = vcmp.gt.f32.partialorder %v354, 0.0
        %vm363 = vcmp.gt.f32.partialorder %v355, 0.0
        %v364 = vmul.f32 %v348, 0.2
        %v365 = vmul.f32 %v349, 0.2
        %v366 = vmul.f32 %v350, 0.2
        %v367 = vmul.f32 %v351, 0.2
        %v368 = vmul.f32 %v352, 0.2
        %v369 = vmul.f32 %v353, 0.2
        %v370 = vmul.f32 %v354, 0.2
        %v371 = vmul.f32 %v355, 0.2
        %v372 = vsel %vm356, %v348, %v364
        %v373 = vsel %vm357, %v349, %v365
        %v374 = vsel %vm358, %v350, %v366
        %v375 = vsel %vm359, %v351, %v367
        %v376 = vsel %vm360, %v352, %v368
        %v377 = vsel %vm361, %v353, %v369
        %v378 = vsel %vm362, %v354, %v370
        %v379 = vsel %vm363, %v355, %v371
        %v380 = vpack.c.bf16 %v373, %v372
        %v381 = vpack.c.bf16 %v375, %v374
        %v382 = vpack.c.bf16 %v377, %v376
        %v383 = vpack.c.bf16 %v379, %v378
        %v388 = vunpack.c.l.b16 %v380
        %v389 = vunpack.c.h.b16 %v380
        %v390 = vunpack.c.l.b16 %v381
        %v391 = vunpack.c.h.b16 %v381
        %v392 = vunpack.c.l.b16 %v382
        %v393 = vunpack.c.h.b16 %v382
        %v394 = vunpack.c.l.b16 %v383
        %v395 = vunpack.c.h.b16 %v383
        %v396 = vpack.c.b16 %v388, %v388
        %v397 = vpack.c.b16 %v389, %v389
        %v398 = vpack.c.b16 %v390, %v390
        %v399 = vpack.c.b16 %v391, %v391
        %v400 = vpack.c.b16 %v392, %v392
        %v401 = vpack.c.b16 %v393, %v393
        %v402 = vpack.c.b16 %v394, %v394
        %v403 = vpack.c.b16 %v395, %v395
        %vm412 = vcmask 257024
        %413 = vst.msk [vmem:[%s255] sm:$0xf] %vm412, %v396
        %414 = vst.msk [vmem:[%s255 + $0x4] sm:$0xf] %vm412, %v397
        %415 = vst.msk [vmem:[%s255 + $0x8] sm:$0xf] %vm412, %v398
        %416 = vst.msk [vmem:[%s255 + $0xc] sm:$0xf] %vm412, %v399
        %417 = vst.msk [vmem:[%s255 + $0x10] sm:$0xf] %vm412, %v400
        %418 = vst.msk [vmem:[%s255 + $0x14] sm:$0xf] %vm412, %v401
        %419 = vst.msk [vmem:[%s255 + $0x18] sm:$0xf] %vm412, %v402
        %420 = vst.msk [vmem:[%s255 + $0x1c] sm:$0xf] %vm412, %v403
        %s421 = sand.u32 %s120, 1
        %s422 = scalar_lea.sflag [#allocation4], %s421
        %s423 = sand.u32 %s120, 1
        %s424 = smul.addr %s423, 32
        %s425 = scalar_lea.vmem [#allocation10], %s424
        // Predicated region
        $region53: #{dcgan_discriminator_forward.7} parent=35 // pred_check
          %p426 = pneg %p130
        $region54: #{dcgan_discriminator_forward.7} parent=35 // pred_check_branch
          %428 = sbr.rel (%p426) target = $region56
        $region55: #{dcgan_discriminator_forward.7} parent=35 // pred_region
          %s429 = smul.u32 8, %s23
          %s431 = ssub.s32 512, 512
          %432 = vsyncadd %s422, %s431
          %s433 = smul.addr %s429, 64
          %s434 = scalar_lea.hbm %s4, %s433
          %s435 = sshll.u32 %s425, 4
          %s436 = int_to_ptr.vmem [resolvable:$true] %s435
          %441 = dma.vmem_to_hbm [thread:$0]  %s436, 512, %s434, %s422, 64, 64, 4
        $region56: #{dcgan_discriminator_forward.7} parent=35 // pred_fallthru
          _
      $region36: #{dcgan_discriminator_forward.7} parent=5 // pred_fallthru
        _
      %p442 = scmp.le.s32.totalorder 2, %s18
      // Predicated region
      $region57: #{dcgan_discriminator_forward.7} parent=5 // pred_check
        %p443 = pneg %p442
      $region58: #{dcgan_discriminator_forward.7} parent=5 // pred_check_branch
        %445 = sbr.rel (%p443) target = $region60
      $region59: #{dcgan_discriminator_forward.7} parent=5 // pred_region
        %s446 = ssub.s32 %s18, 2
        // Predicated region
        $region61: #{dcgan_discriminator_forward.7} parent=59 // pred_check
          %p447 = pneg %p136
        $region62: #{dcgan_discriminator_forward.7} parent=59 // pred_check_branch
          %449 = sbr.rel (%p447) target = $region64
        $region63: #{dcgan_discriminator_forward.7} parent=59 // pred_region
          %s450 = sand.u32 %s121, 1
          %s451 = scalar_lea.sflag [#allocation4], %s450
          %s452 = sand.u32 %s121, 1
          %s453 = smul.addr %s452, 32
          %s454 = scalar_lea.vmem [#allocation10], %s453
          %455 = dma.done %s451, 512
        $region64: #{dcgan_discriminator_forward.7} parent=59 // pred_fallthru
          _
      $region60: #{dcgan_discriminator_forward.7} parent=5 // pred_fallthru
        _
    $region6: #{dcgan_discriminator_forward.7} parent=1 // loop_footer
      %s22 = sadd.s32 1, %s18
    $region7: #{dcgan_discriminator_forward.7} parent=1 // loop_footer_branch
      %17 = sbr.rel target = $region3
    $region8: #{dcgan_discriminator_forward.7} parent=1 // loop_exit
      _
    %456 = vsyncpa [#allocation3], 1
    %s457 = scalar_lea.sflag [#allocation3], 1
    %458 = vsyncpa %s457, 1
    %459 = vsyncpa [#allocation6], 1
    %460 = vsyncpa [#allocation9], 1
    %461 = vsyncpa [#allocation4], 1
    %s462 = scalar_lea.sflag [#allocation4], 1
    %463 = vsyncpa %s462, 1

// kernel: dcgan_discriminator_forward.9
$region0: #{dcgan_discriminator_forward.9}
  #allocation0 [shape = 'u32[]', space=smem, size = 0x4, offset = 0x4, fixed_abs, tag = 'smem constant byte address 0x4 - core index']
  #allocation1 [shape = 'u32[144,128]{1,0:T(1,128)}', space=vmem, size = 0x12000, scoped, tag = 'internal scratch']
  %s0 = inlined_call_operand.hbm [shape: bf16[128,64], index: 0, kind: input, shape index: {}]
  %s1 = inlined_call_operand.hbm [shape: f32[2,2,64], index: 1, kind: input, shape index: {}]
  %s2 = inlined_call_operand.hbm [shape: f32[1,64], index: 2, kind: input, shape index: {}]
  %s3 = inlined_call_operand.hbm [shape: f32[1,64], index: 3, kind: input, shape index: {}]
  %s4 = inlined_call_operand.hbm [shape: bf16[128,64], index: 4, kind: output, shape index: {}]
  %s5 = sld [smem:[#allocation0]]
  $region65: #{dcgan_discriminator_forward.9} parent=0
    _
  %s7 = ssub.s32 1, %s5
  %s8 = scalar_select 0, %s7, %s5
  $region1: #{dcgan_discriminator_forward.9} parent=0
    #allocation2 [shape = 'u8[32768]{0}', space=vmem, size = 0x8000, scoped, tag = 'input window, operand 0']
    #allocation3 [shape = 's32[2]{0}', space=sflag, size = 0x8, scoped, tag = 'scoped memory for dcgan_discriminator_forward.9']
    #allocation4 [shape = 's32[2]{0}', space=sflag, size = 0x8, scoped, tag = 'scoped memory for dcgan_discriminator_forward.9']
    #allocation5 [shape = 'u8[2048]{0}', space=vmem, size = 0x800, scoped, tag = 'input window, operand 1, single buffered']
    #allocation6 [shape = 's32[1]{0}', space=sflag, size = 0x4, scoped, tag = 'scoped memory for dcgan_discriminator_forward.9']
    #allocation7 [shape = 'u8[512]{0}', space=vmem, size = 0x400, scoped, tag = 'input window, operand 2, single buffered']
    #allocation8 [shape = 'u8[512]{0}', space=vmem, size = 0x400, scoped, tag = 'input window, operand 3, single buffered']
    #allocation9 [shape = 's32[1]{0}', space=sflag, size = 0x4, scoped, tag = 'scoped memory for dcgan_discriminator_forward.9']
    #allocation10 [shape = 'u8[32768]{0}', space=vmem, size = 0x8000, scoped, tag = 'output window, operand 0']
    %9 = vsyncpa [#allocation3], 0
    %s10 = scalar_lea.sflag [#allocation3], 1
    %11 = vsyncpa %s10, 0
    %12 = vsyncpa [#allocation6], 0
    %13 = vsyncpa [#allocation9], 0
    %14 = vsyncpa [#allocation4], 0
    %s15 = scalar_lea.sflag [#allocation4], 1
    %16 = vsyncpa %s15, 0
    loop: start=0, step=1, limit=4
    $region2: #{dcgan_discriminator_forward.9} parent=1 // loop_pre_header
      _
    $region3: #{dcgan_discriminator_forward.9} parent=1 // loop_header
      %s18 = sphi 0, %s22
      %p19 = scmp.ge.s32.totalorder %s18, 4
      %s28 = sphi 0, %s30
      %s31 = sphi 0, %s28
      %s32 = sphi 0, %s31
      %s48 = sphi 0, %s32
      %s52 = sphi 0, %s52
      %s54 = sphi 0, %s52
      %s55 = sphi 0, %s54
      %s69 = sphi 0, %s55
      %s73 = sphi 0, %s73
      %s75 = sphi 0, %s73
      %s76 = sphi 0, %s75
      %s90 = sphi 0, %s76
      %s94 = sphi 0, %s94
      %s96 = sphi 0, %s94
      %s97 = sphi 0, %s96
      %s111 = sphi 0, %s97
      %s117 = sphi 0, %s119
      %s120 = sphi 0, %s117
      %s121 = sphi 0, %s120
      %s137 = sphi 0, %s121
    $region4: #{dcgan_discriminator_forward.9} parent=1 // loop_header_branch
      %21 = sbr.rel (%p19) target = $region8
    $region5: #{dcgan_discriminator_forward.9} parent=1 // loop_body
      %s23 = ssub.s32 %s18, 1
      %s24 = ssub.s32 %s18, 2
      %s25 = sadd.s32 %s18, 1
      %s26 = ssub.s32 %s18, %s25
      %p27 = scmp.eq.s32.totalorder %s26, 0
      %s29 = sadd.s32 %s28, 1
      %s30 = scalar_select %p27, %s28, %s29
      %p33 = pneg %p27
      %p34 = scmp.eq.s32.totalorder %s18, 1
      %p35 = por %p33, %p34
      %p36 = scmp.ne.s32.totalorder %s28, %s31
      %p37 = scmp.eq.s32.totalorder %s18, 0
      %p38 = por %p36, %p37
      %p39 = scmp.ne.s32.totalorder %s28, %s31
      %p40 = scmp.eq.s32.totalorder %s23, 1
      %p41 = por %p39, %p40
      %p42 = scmp.ne.s32.totalorder %s31, %s32
      %p43 = scmp.eq.s32.totalorder %s23, 0
      %p44 = por %p42, %p43
      %p45 = scmp.ne.s32.totalorder %s31, %s32
      %p46 = scmp.eq.s32.totalorder %s24, 1
      %p47 = por %p45, %p46
      %p49 = scmp.ne.s32.totalorder %s32, %s48
      %p50 = scmp.eq.s32.totalorder %s24, 0
      %p51 = por %p49, %p50
      %s53 = sadd.s32 %s52, 1
      %p56 = scmp.eq.s32.totalorder %s18, 1
      %p57 = scmp.ne.s32.totalorder %s52, %s54
      %p58 = scmp.eq.s32.totalorder %s18, 0
      %p59 = por %p57, %p58
      %p60 = scmp.ne.s32.totalorder %s52, %s54
      %p61 = scmp.eq.s32.totalorder %s23, 1
      %p62 = por %p60, %p61
      %p63 = scmp.ne.s32.totalorder %s54, %s55
      %p64 = scmp.eq.s32.totalorder %s23, 0
      %p65 = por %p63, %p64
      %p66 = scmp.ne.s32.totalorder %s54, %s55
      %p67 = scmp.eq.s32.totalorder %s24, 1
      %p68 = por %p66, %p67
      %p70 = scmp.ne.s32.totalorder %s55, %s69
      %p71 = scmp.eq.s32.totalorder %s24, 0
      %p72 = por %p70, %p71
      %s74 = sadd.s32 %s73, 1
      %p77 = scmp.eq.s32.totalorder %s18, 1
      %p78 = scmp.ne.s32.totalorder %s73, %s75
      %p79 = scmp.eq.s32.totalorder %s18, 0
      %p80 = por %p78, %p79
      %p81 = scmp.ne.s32.totalorder %s73, %s75
      %p82 = scmp.eq.s32.totalorder %s23, 1
      %p83 = por %p81, %p82
      %p84 = scmp.ne.s32.totalorder %s75, %s76
      %p85 = scmp.eq.s32.totalorder %s23, 0
      %p86 = por %p84, %p85
      %p87 = scmp.ne.s32.totalorder %s75, %s76
      %p88 = scmp.eq.s32.totalorder %s24, 1
      %p89 = por %p87, %p88
      %p91 = scmp.ne.s32.totalorder %s76, %s90
      %p92 = scmp.eq.s32.totalorder %s24, 0
      %p93 = por %p91, %p92
      %s95 = sadd.s32 %s94, 1
      %p98 = scmp.eq.s32.totalorder %s18, 1
      %p99 = scmp.ne.s32.totalorder %s94, %s96
      %p100 = scmp.eq.s32.totalorder %s18, 0
      %p101 = por %p99, %p100
      %p102 = scmp.ne.s32.totalorder %s94, %s96
      %p103 = scmp.eq.s32.totalorder %s23, 1
      %p104 = por %p102, %p103
      %p105 = scmp.ne.s32.totalorder %s96, %s97
      %p106 = scmp.eq.s32.totalorder %s23, 0
      %p107 = por %p105, %p106
      %p108 = scmp.ne.s32.totalorder %s96, %s97
      %p109 = scmp.eq.s32.totalorder %s24, 1
      %p110 = por %p108, %p109
      %p112 = scmp.ne.s32.totalorder %s97, %s111
      %p113 = scmp.eq.s32.totalorder %s24, 0
      %p114 = por %p112, %p113
      %s115 = ssub.s32 %s18, %s25
      %p116 = scmp.eq.s32.totalorder %s115, 0
      %s118 = sadd.s32 %s117, 1
      %s119 = scalar_select %p116, %s117, %s118
      %p122 = pneg %p116
      %p123 = scmp.eq.s32.totalorder %s18, 1
      %p124 = por %p122, %p123
      %p125 = scmp.ne.s32.totalorder %s117, %s120
      %p126 = scmp.eq.s32.totalorder %s18, 0
      %p127 = por %p125, %p126
      %p128 = scmp.ne.s32.totalorder %s117, %s120
      %p129 = scmp.eq.s32.totalorder %s23, 1
      %p130 = por %p128, %p129
      %p131 = scmp.ne.s32.totalorder %s120, %s121
      %p132 = scmp.eq.s32.totalorder %s23, 0
      %p133 = por %p131, %p132
      %p134 = scmp.ne.s32.totalorder %s120, %s121
      %p135 = scmp.eq.s32.totalorder %s24, 1
      %p136 = por %p134, %p135
      %p138 = scmp.ne.s32.totalorder %s121, %s137
      %p139 = scmp.eq.s32.totalorder %s24, 0
      %p140 = por %p138, %p139
      %p141 = scmp.le.s32.totalorder 1, %s18
      %p142 = scmp.lt.s32.totalorder %s18, 3
      %p143 = pnand %p141, %p142
      %p144 = pneg %p143
      // Predicated region
      $region9: #{dcgan_discriminator_forward.9} parent=5 // pred_check
        _
      $region10: #{dcgan_discriminator_forward.9} parent=5 // pred_check_branch
        %146 = sbr.rel (%p143) target = $region12
      $region11: #{dcgan_discriminator_forward.9} parent=5 // pred_region
        %s147 = ssub.s32 %s18, 1
        // Predicated region
        $region13: #{dcgan_discriminator_forward.9} parent=11 // pred_check
          %p148 = pneg %p65
        $region14: #{dcgan_discriminator_forward.9} parent=11 // pred_check_branch
          %150 = sbr.rel (%p148) target = $region16
        $region15: #{dcgan_discriminator_forward.9} parent=11 // pred_region
          %s152 = ssub.s32 64, 64
          %153 = vsyncadd [#allocation6], %s152
          %s154 = sshll.u32 [#allocation5], 4
          %s155 = int_to_ptr.vmem [resolvable:$true] %s154
          %160 = dma.hbm_to_vmem [thread:$0]  %s1, 64, %s155, [#allocation6], 32, 32, 2
        $region16: #{dcgan_discriminator_forward.9} parent=11 // pred_fallthru
          _
        // Predicated region
        $region17: #{dcgan_discriminator_forward.9} parent=11 // pred_check
          %p161 = pneg %p86
        $region18: #{dcgan_discriminator_forward.9} parent=11 // pred_check_branch
          %163 = sbr.rel (%p161) target = $region20
        $region19: #{dcgan_discriminator_forward.9} parent=11 // pred_region
          %s165 = ssub.s32 16, 16
          %166 = vsyncadd [#allocation6], %s165
          %s168 = sshll.u32 [#allocation7], 4
          %s169 = int_to_ptr.vmem [resolvable:$true] %s168
          %171 = dma.hbm_to_vmem [thread:$0]  %s2, 16, %s169, [#allocation6]
        $region20: #{dcgan_discriminator_forward.9} parent=11 // pred_fallthru
          _
        // Predicated region
        $region21: #{dcgan_discriminator_forward.9} parent=11 // pred_check
          %p172 = pneg %p107
        $region22: #{dcgan_discriminator_forward.9} parent=11 // pred_check_branch
          %174 = sbr.rel (%p172) target = $region24
        $region23: #{dcgan_discriminator_forward.9} parent=11 // pred_region
          %s176 = ssub.s32 16, 16
          %177 = vsyncadd [#allocation9], %s176
          %s179 = sshll.u32 [#allocation8], 4
          %s180 = int_to_ptr.vmem [resolvable:$true] %s179
          %182 = dma.hbm_to_vmem [thread:$0]  %s3, 16, %s180, [#allocation9]
        $region24: #{dcgan_discriminator_forward.9} parent=11 // pred_fallthru
          _
      $region12: #{dcgan_discriminator_forward.9} parent=5 // pred_fallthru
        _
      %p183 = scmp.lt.s32.totalorder %s18, 2
      // Predicated region
      $region25: #{dcgan_discriminator_forward.9} parent=5 // pred_check
        %p184 = pneg %p183
      $region26: #{dcgan_discriminator_forward.9} parent=5 // pred_check_branch
        %186 = sbr.rel (%p184) target = $region28
      $region27: #{dcgan_discriminator_forward.9} parent=5 // pred_region
        // Predicated region
        $region29: #{dcgan_discriminator_forward.9} parent=27 // pred_check
          %p187 = pneg %p38
        $region30: #{dcgan_discriminator_forward.9} parent=27 // pred_check_branch
          %189 = sbr.rel (%p187) target = $region32
        $region31: #{dcgan_discriminator_forward.9} parent=27 // pred_region
          %s190 = sand.u32 %s28, 1
          %s191 = scalar_lea.sflag [#allocation3], %s190
          %s192 = sand.u32 %s28, 1
          %s193 = smul.addr %s192, 32
          %s194 = scalar_lea.vmem [#allocation2], %s193
          %s195 = smul.u32 8, %s18
          %s197 = ssub.s32 512, 512
          %198 = vsyncadd %s191, %s197
          %s199 = smul.addr %s195, 64
          %s200 = scalar_lea.hbm %s0, %s199
          %s201 = sshll.u32 %s194, 4
          %s202 = int_to_ptr.vmem [resolvable:$true] %s201
          %207 = dma.hbm_to_vmem [thread:$0]  %s200, 512, %s202, %s191, 64, 64, 4
        $region32: #{dcgan_discriminator_forward.9} parent=27 // pred_fallthru
          _
      $region28: #{dcgan_discriminator_forward.9} parent=5 // pred_fallthru
        _
      %p208 = scmp.le.s32.totalorder 1, %s18
      %p209 = scmp.lt.s32.totalorder %s18, 3
      %p210 = pnand %p208, %p209
      %p211 = pneg %p210
      // Predicated region
      $region33: #{dcgan_discriminator_forward.9} parent=5 // pred_check
        _
      $region34: #{dcgan_discriminator_forward.9} parent=5 // pred_check_branch
        %213 = sbr.rel (%p210) target = $region36
      $region35: #{dcgan_discriminator_forward.9} parent=5 // pred_region
        %s214 = ssub.s32 %s18, 1
        %s215 = sand.u32 %s31, 1
        %s216 = scalar_lea.sflag [#allocation3], %s215
        %s217 = sand.u32 %s31, 1
        %s218 = smul.addr %s217, 32
        %s219 = scalar_lea.vmem [#allocation2], %s218
        // Predicated region
        $region37: #{dcgan_discriminator_forward.9} parent=35 // pred_check
          %p220 = pneg %p44
        $region38: #{dcgan_discriminator_forward.9} parent=35 // pred_check_branch
          %222 = sbr.rel (%p220) target = $region40
        $region39: #{dcgan_discriminator_forward.9} parent=35 // pred_region
          %223 = dma.done %s216, 512
        $region40: #{dcgan_discriminator_forward.9} parent=35 // pred_fallthru
          _
        // Predicated region
        $region41: #{dcgan_discriminator_forward.9} parent=35 // pred_check
          %p224 = pneg %p65
        $region42: #{dcgan_discriminator_forward.9} parent=35 // pred_check_branch
          %226 = sbr.rel (%p224) target = $region44
        $region43: #{dcgan_discriminator_forward.9} parent=35 // pred_region
          %227 = dma.done [#allocation6], 64
        $region44: #{dcgan_discriminator_forward.9} parent=35 // pred_fallthru
          _
        // Predicated region
        $region45: #{dcgan_discriminator_forward.9} parent=35 // pred_check
          %p228 = pneg %p86
        $region46: #{dcgan_discriminator_forward.9} parent=35 // pred_check_branch
          %230 = sbr.rel (%p228) target = $region48
        $region47: #{dcgan_discriminator_forward.9} parent=35 // pred_region
          %231 = dma.done [#allocation6], 16
        $region48: #{dcgan_discriminator_forward.9} parent=35 // pred_fallthru
          _
        // Predicated region
        $region49: #{dcgan_discriminator_forward.9} parent=35 // pred_check
          %p232 = pneg %p107
        $region50: #{dcgan_discriminator_forward.9} parent=35 // pred_check_branch
          %234 = sbr.rel (%p232) target = $region52
        $region51: #{dcgan_discriminator_forward.9} parent=35 // pred_region
          %235 = dma.done [#allocation9], 16
        $region52: #{dcgan_discriminator_forward.9} parent=35 // pred_fallthru
          _
        %s236 = sand.u32 %s31, 1
        %s237 = scalar_lea.sflag [#allocation3], %s236
        %s238 = sand.u32 %s31, 1
        %s239 = smul.addr %s238, 32
        %s240 = scalar_lea.vmem [#allocation2], %s239
        %p241 = pneg %p44
        %p242 = pneg %p41
        %p243 = pneg %p65
        %p244 = pneg %p62
        %p245 = pneg %p86
        %p246 = pneg %p83
        %p247 = pneg %p107
        %p248 = pneg %p104
        %p249 = pneg %p133
        %p250 = pneg %p130
        %s251 = sand.u32 %s120, 1
        %s252 = scalar_lea.sflag [#allocation4], %s251
        %s253 = sand.u32 %s120, 1
        %s254 = smul.addr %s253, 32
        %s255 = scalar_lea.vmem [#allocation10], %s254
        %s256 = smul.u32 8, %s23
        %s257 = smul.u32 8, %s23
        %v258 = vld [vmem:[#allocation5] sm:$0x3]
        %v259 = vld [vmem:[#allocation5 + $0x2] sm:$0x3]
        %vm260 = vcmask 517120
        %v261 = vsel %vm260, %v258, 0.0
        %v262 = vsel %vm260, %v259, 0.0
        %v263 = vadd.f32 %v261, %v262
        %v264 = vmul.f32 %v263, 0.0078125
        %v265 = vmul.f32 %v264, %v264
        %v267 = vrot.slane %v265, 7
        %v269 = vsub.f32 %v264, %v267
        %v270 = vld [vmem:[#allocation7] sm:$0x1]
        %v271 = vadd.f32 %v269, 1e-05
        %v272 = vrsqrt.pop %v271
        %v275 = vunpack.c.l.s4 1966171168
        %v276 = vunpack.c.0.s8 %v275
        %v277 = vlaneseq
        %v278 = vshrl.u32 %v277, 7
        %v279 = vsub.s32 %v276, %v278
        %v280 = vrot.slane %v272, %v279
        %v281 = vcombine.high %v280, %v280
        %v283 = vunpack.c.l.s4 1966171168
        %v284 = vunpack.c.0.s8 %v283
        %v285 = vlaneseq
        %v286 = vshrl.u32 %v285, 7
        %v287 = vsub.s32 %v284, %v286
        %v288 = vrot.slane %v281, %v287
        %v290 = vmul.f32 %v270, %v288
        %v291 = vld [vmem:[#allocation8] sm:$0x1]
        %v292 = vmul.f32 %v264, %v290
        %v293 = vsub.f32 %v291, %v292
        %v294 = vld [vmem:[%s219] sm:$0xf]
        %v295 = vld [vmem:[%s219 + $0x4] sm:$0xf]
        %v296 = vld [vmem:[%s219 + $0x8] sm:$0xf]
        %v297 = vld [vmem:[%s219 + $0xc] sm:$0xf]
        %v298 = vld [vmem:[%s219 + $0x10] sm:$0xf]
        %v299 = vld [vmem:[%s219 + $0x14] sm:$0xf]
        %v300 = vld [vmem:[%s219 + $0x18] sm:$0xf]
        %v301 = vld [vmem:[%s219 + $0x1c] sm:$0xf]
        %v302 = vunpack.c.l.bf16 %v294
        %v303 = vunpack.c.l.bf16 %v295
        %v304 = vunpack.c.l.bf16 %v296
        %v305 = vunpack.c.l.bf16 %v297
        %v306 = vunpack.c.l.bf16 %v298
        %v307 = vunpack.c.l.bf16 %v299
        %v308 = vunpack.c.l.bf16 %v300
        %v309 = vunpack.c.l.bf16 %v301
        %v311 = vlaneseq
        %v312 = vshrl.u32 %v311, 7
        %v313 = vsub.s32 0, %v312
        %v314 = vrot.slane %v290, %v313
        %v316 = vmul.f32 %v302, %v314
        %v317 = vmul.f32 %v303, %v314
        %v318 = vmul.f32 %v304, %v314
        %v319 = vmul.f32 %v305, %v314
        %v320 = vmul.f32 %v306, %v314
        %v321 = vmul.f32 %v307, %v314
        %v322 = vmul.f32 %v308, %v314
        %v323 = vmul.f32 %v309, %v314
        %v325 = vlaneseq
        %v326 = vshrl.u32 %v325, 7
        %v327 = vsub.s32 0, %v326
        %v328 = vrot.slane %v293, %v327
        %v330 = vadd.f32 %v316, %v328
        %v331 = vadd.f32 %v317, %v328
        %v332 = vadd.f32 %v318, %v328
        %v333 = vadd.f32 %v319, %v328
        %v334 = vadd.f32 %v320, %v328
        %v335 = vadd.f32 %v321, %v328
        %v336 = vadd.f32 %v322, %v328
        %v337 = vadd.f32 %v323, %v328
        %vm338 = vcmp.gt.f32.partialorder %v330, 0.0
        %vm339 = vcmp.gt.f32.partialorder %v331, 0.0
        %vm340 = vcmp.gt.f32.partialorder %v332, 0.0
        %vm341 = vcmp.gt.f32.partialorder %v333, 0.0
        %vm342 = vcmp.gt.f32.partialorder %v334, 0.0
        %vm343 = vcmp.gt.f32.partialorder %v335, 0.0
        %vm344 = vcmp.gt.f32.partialorder %v336, 0.0
        %vm345 = vcmp.gt.f32.partialorder %v337, 0.0
        %v346 = vmul.f32 %v330, 0.2
        %v347 = vmul.f32 %v331, 0.2
        %v348 = vmul.f32 %v332, 0.2
        %v349 = vmul.f32 %v333, 0.2
        %v350 = vmul.f32 %v334, 0.2
        %v351 = vmul.f32 %v335, 0.2
        %v352 = vmul.f32 %v336, 0.2
        %v353 = vmul.f32 %v337, 0.2
        %v354 = vsel %vm338, %v330, %v346
        %v355 = vsel %vm339, %v331, %v347
        %v356 = vsel %vm340, %v332, %v348
        %v357 = vsel %vm341, %v333, %v349
        %v358 = vsel %vm342, %v334, %v350
        %v359 = vsel %vm343, %v335, %v351
        %v360 = vsel %vm344, %v336, %v352
        %v361 = vsel %vm345, %v337, %v353
        %v362 = vpack.c.bf16 %v355, %v354
        %v363 = vpack.c.bf16 %v357, %v356
        %v364 = vpack.c.bf16 %v359, %v358
        %v365 = vpack.c.bf16 %v361, %v360
        %v370 = vunpack.c.l.b16 %v362
        %v371 = vunpack.c.h.b16 %v362
        %v372 = vunpack.c.l.b16 %v363
        %v373 = vunpack.c.h.b16 %v363
        %v374 = vunpack.c.l.b16 %v364
        %v375 = vunpack.c.h.b16 %v364
        %v376 = vunpack.c.l.b16 %v365
        %v377 = vunpack.c.h.b16 %v365
        %v378 = vpack.c.b16 %v370, %v370
        %v379 = vpack.c.b16 %v371, %v371
        %v380 = vpack.c.b16 %v372, %v372
        %v381 = vpack.c.b16 %v373, %v373
        %v382 = vpack.c.b16 %v374, %v374
        %v383 = vpack.c.b16 %v375, %v375
        %v384 = vpack.c.b16 %v376, %v376
        %v385 = vpack.c.b16 %v377, %v377
        %vm394 = vcmask 519168
        %395 = vst.msk [vmem:[%s255] sm:$0xf] %vm394, %v378
        %396 = vst.msk [vmem:[%s255 + $0x4] sm:$0xf] %vm394, %v379
        %397 = vst.msk [vmem:[%s255 + $0x8] sm:$0xf] %vm394, %v380
        %398 = vst.msk [vmem:[%s255 + $0xc] sm:$0xf] %vm394, %v381
        %399 = vst.msk [vmem:[%s255 + $0x10] sm:$0xf] %vm394, %v382
        %400 = vst.msk [vmem:[%s255 + $0x14] sm:$0xf] %vm394, %v383
        %401 = vst.msk [vmem:[%s255 + $0x18] sm:$0xf] %vm394, %v384
        %402 = vst.msk [vmem:[%s255 + $0x1c] sm:$0xf] %vm394, %v385
        %s403 = sand.u32 %s120, 1
        %s404 = scalar_lea.sflag [#allocation4], %s403
        %s405 = sand.u32 %s120, 1
        %s406 = smul.addr %s405, 32
        %s407 = scalar_lea.vmem [#allocation10], %s406
        // Predicated region
        $region53: #{dcgan_discriminator_forward.9} parent=35 // pred_check
          %p408 = pneg %p130
        $region54: #{dcgan_discriminator_forward.9} parent=35 // pred_check_branch
          %410 = sbr.rel (%p408) target = $region56
        $region55: #{dcgan_discriminator_forward.9} parent=35 // pred_region
          %s411 = smul.u32 8, %s23
          %s413 = ssub.s32 512, 512
          %414 = vsyncadd %s404, %s413
          %s415 = smul.addr %s411, 64
          %s416 = scalar_lea.hbm %s4, %s415
          %s417 = sshll.u32 %s407, 4
          %s418 = int_to_ptr.vmem [resolvable:$true] %s417
          %423 = dma.vmem_to_hbm [thread:$0]  %s418, 512, %s416, %s404, 64, 64, 4
        $region56: #{dcgan_discriminator_forward.9} parent=35 // pred_fallthru
          _
      $region36: #{dcgan_discriminator_forward.9} parent=5 // pred_fallthru
        _
      %p424 = scmp.le.s32.totalorder 2, %s18
      // Predicated region
      $region57: #{dcgan_discriminator_forward.9} parent=5 // pred_check
        %p425 = pneg %p424
      $region58: #{dcgan_discriminator_forward.9} parent=5 // pred_check_branch
        %427 = sbr.rel (%p425) target = $region60
      $region59: #{dcgan_discriminator_forward.9} parent=5 // pred_region
        %s428 = ssub.s32 %s18, 2
        // Predicated region
        $region61: #{dcgan_discriminator_forward.9} parent=59 // pred_check
          %p429 = pneg %p136
        $region62: #{dcgan_discriminator_forward.9} parent=59 // pred_check_branch
          %431 = sbr.rel (%p429) target = $region64
        $region63: #{dcgan_discriminator_forward.9} parent=59 // pred_region
          %s432 = sand.u32 %s121, 1
          %s433 = scalar_lea.sflag [#allocation4], %s432
          %s434 = sand.u32 %s121, 1
          %s435 = smul.addr %s434, 32
          %s436 = scalar_lea.vmem [#allocation10], %s435
          %437 = dma.done %s433, 512
        $region64: #{dcgan_discriminator_forward.9} parent=59 // pred_fallthru
          _
      $region60: #{dcgan_discriminator_forward.9} parent=5 // pred_fallthru
        _
    $region6: #{dcgan_discriminator_forward.9} parent=1 // loop_footer
      %s22 = sadd.s32 1, %s18
    $region7: #{dcgan_discriminator_forward.9} parent=1 // loop_footer_branch
      %17 = sbr.rel target = $region3
    $region8: #{dcgan_discriminator_forward.9} parent=1 // loop_exit
      _
    %438 = vsyncpa [#allocation3], 1
    %s439 = scalar_lea.sflag [#allocation3], 1
    %440 = vsyncpa %s439, 1
    %441 = vsyncpa [#allocation6], 1
    %442 = vsyncpa [#allocation9], 1
    %443 = vsyncpa [#allocation4], 1
    %s444 = scalar_lea.sflag [#allocation4], 1
    %445 = vsyncpa %s444, 1

// kernel: dcgan_discriminator_forward.8
$region0: #{dcgan_discriminator_forward.8}
  #allocation0 [shape = 'u32[]', space=smem, size = 0x4, offset = 0x4, fixed_abs, tag = 'smem constant byte address 0x4 - core index']
  #allocation1 [shape = 'u32[144,128]{1,0:T(1,128)}', space=vmem, size = 0x12000, scoped, tag = 'internal scratch']
  %s0 = inlined_call_operand.hbm [shape: bf16[2,9,9,128], index: 0, kind: input, shape index: {}]
  %s1 = inlined_call_operand.hbm [shape: bf16[4,128,64], index: 1, kind: input, shape index: {}]
  %s2 = inlined_call_operand.hbm [shape: bf16[128,64], index: 2, kind: output, shape index: {0}]
  %s3 = inlined_call_operand.hbm [shape: f32[2,2,64], index: 3, kind: output, shape index: {1}]
  %4 = xla_tuple %s2, %s3
  %s5 = sld [smem:[#allocation0]]
  $region57: #{dcgan_discriminator_forward.8} parent=0
    _
  %s7 = ssub.s32 1, %s5
  %s8 = scalar_select 0, %s7, %s5
  $region1: #{dcgan_discriminator_forward.8} parent=0
    #allocation2 [shape = 'u8[73728]{0}', space=vmem, size = 0x12000, scoped, tag = 'input window, operand 0']
    #allocation3 [shape = 's32[2]{0}', space=sflag, size = 0x8, scoped, tag = 'scoped memory for dcgan_discriminator_forward.8']
    #allocation4 [shape = 's32[2]{0}', space=sflag, size = 0x8, scoped, tag = 'scoped memory for dcgan_discriminator_forward.8']
    #allocation5 [shape = 'u8[131072]{0}', space=vmem, size = 0x20000, scoped, tag = 'input window, operand 1, single buffered']
    #allocation6 [shape = 's32[1]{0}', space=sflag, size = 0x4, scoped, tag = 'scoped memory for dcgan_discriminator_forward.8']
    #allocation7 [shape = 'u8[32768]{0}', space=vmem, size = 0x8000, scoped, tag = 'output window, operand 0']
    #allocation8 [shape = 'u8[2048]{0}', space=vmem, size = 0x800, scoped, tag = 'output window, operand 1']
    #allocation9 [shape = 's32[2]{0}', space=sflag, size = 0x8, scoped, tag = 'scoped memory for dcgan_discriminator_forward.8']
    %9 = vsyncpa [#allocation3], 0
    %s10 = scalar_lea.sflag [#allocation3], 1
    %11 = vsyncpa %s10, 0
    %12 = vsyncpa [#allocation6], 0
    %13 = vsyncpa [#allocation4], 0
    %s14 = scalar_lea.sflag [#allocation4], 1
    %15 = vsyncpa %s14, 0
    %16 = vsyncpa [#allocation9], 0
    %s17 = scalar_lea.sflag [#allocation9], 1
    %18 = vsyncpa %s17, 0
    loop: start=0, step=1, limit=4
    $region2: #{dcgan_discriminator_forward.8} parent=1 // loop_pre_header
      _
    $region3: #{dcgan_discriminator_forward.8} parent=1 // loop_header
      %s20 = sphi 0, %s24
      %p21 = scmp.ge.s32.totalorder %s20, 4
      %s30 = sphi 0, %s32
      %s33 = sphi 0, %s30
      %s34 = sphi 0, %s33
      %s50 = sphi 0, %s34
      %s54 = sphi 0, %s54
      %s56 = sphi 0, %s54
      %s57 = sphi 0, %s56
      %s71 = sphi 0, %s57
      %s77 = sphi 0, %s79
      %s80 = sphi 0, %s77
      %s81 = sphi 0, %s80
      %s97 = sphi 0, %s81
      %s103 = sphi 0, %s105
      %s106 = sphi 0, %s103
      %s107 = sphi 0, %s106
      %s123 = sphi 0, %s107
    $region4: #{dcgan_discriminator_forward.8} parent=1 // loop_header_branch
      %23 = sbr.rel (%p21) target = $region8
    $region5: #{dcgan_discriminator_forward.8} parent=1 // loop_body
      %s25 = ssub.s32 %s20, 1
      %s26 = ssub.s32 %s20, 2
      %s27 = sadd.s32 %s20, 1
      %s28 = ssub.s32 %s20, %s27
      %p29 = scmp.eq.s32.totalorder %s28, 0
      %s31 = sadd.s32 %s30, 1
      %s32 = scalar_select %p29, %s30, %s31
      %p35 = pneg %p29
      %p36 = scmp.eq.s32.totalorder %s20, 1
      %p37 = por %p35, %p36
      %p38 = scmp.ne.s32.totalorder %s30, %s33
      %p39 = scmp.eq.s32.totalorder %s20, 0
      %p40 = por %p38, %p39
      %p41 = scmp.ne.s32.totalorder %s30, %s33
      %p42 = scmp.eq.s32.totalorder %s25, 1
      %p43 = por %p41, %p42
      %p44 = scmp.ne.s32.totalorder %s33, %s34
      %p45 = scmp.eq.s32.totalorder %s25, 0
      %p46 = por %p44, %p45
      %p47 = scmp.ne.s32.totalorder %s33, %s34
      %p48 = scmp.eq.s32.totalorder %s26, 1
      %p49 = por %p47, %p48
      %p51 = scmp.ne.s32.totalorder %s34, %s50
      %p52 = scmp.eq.s32.totalorder %s26, 0
      %p53 = por %p51, %p52
      %s55 = sadd.s32 %s54, 1
      %p58 = scmp.eq.s32.totalorder %s20, 1
      %p59 = scmp.ne.s32.totalorder %s54, %s56
      %p60 = scmp.eq.s32.totalorder %s20, 0
      %p61 = por %p59, %p60
      %p62 = scmp.ne.s32.totalorder %s54, %s56
      %p63 = scmp.eq.s32.totalorder %s25, 1
      %p64 = por %p62, %p63
      %p65 = scmp.ne.s32.totalorder %s56, %s57
      %p66 = scmp.eq.s32.totalorder %s25, 0
      %p67 = por %p65, %p66
      %p68 = scmp.ne.s32.totalorder %s56, %s57
      %p69 = scmp.eq.s32.totalorder %s26, 1
      %p70 = por %p68, %p69
      %p72 = scmp.ne.s32.totalorder %s57, %s71
      %p73 = scmp.eq.s32.totalorder %s26, 0
      %p74 = por %p72, %p73
      %s75 = ssub.s32 %s20, %s27
      %p76 = scmp.eq.s32.totalorder %s75, 0
      %s78 = sadd.s32 %s77, 1
      %s79 = scalar_select %p76, %s77, %s78
      %p82 = pneg %p76
      %p83 = scmp.eq.s32.totalorder %s20, 1
      %p84 = por %p82, %p83
      %p85 = scmp.ne.s32.totalorder %s77, %s80
      %p86 = scmp.eq.s32.totalorder %s20, 0
      %p87 = por %p85, %p86
      %p88 = scmp.ne.s32.totalorder %s77, %s80
      %p89 = scmp.eq.s32.totalorder %s25, 1
      %p90 = por %p88, %p89
      %p91 = scmp.ne.s32.totalorder %s80, %s81
      %p92 = scmp.eq.s32.totalorder %s25, 0
      %p93 = por %p91, %p92
      %p94 = scmp.ne.s32.totalorder %s80, %s81
      %p95 = scmp.eq.s32.totalorder %s26, 1
      %p96 = por %p94, %p95
      %p98 = scmp.ne.s32.totalorder %s81, %s97
      %p99 = scmp.eq.s32.totalorder %s26, 0
      %p100 = por %p98, %p99
      %s101 = ssub.s32 %s20, %s27
      %p102 = scmp.eq.s32.totalorder %s101, 0
      %s104 = sadd.s32 %s103, 1
      %s105 = scalar_select %p102, %s103, %s104
      %p108 = pneg %p102
      %p109 = scmp.eq.s32.totalorder %s20, 1
      %p110 = por %p108, %p109
      %p111 = scmp.ne.s32.totalorder %s103, %s106
      %p112 = scmp.eq.s32.totalorder %s20, 0
      %p113 = por %p111, %p112
      %p114 = scmp.ne.s32.totalorder %s103, %s106
      %p115 = scmp.eq.s32.totalorder %s25, 1
      %p116 = por %p114, %p115
      %p117 = scmp.ne.s32.totalorder %s106, %s107
      %p118 = scmp.eq.s32.totalorder %s25, 0
      %p119 = por %p117, %p118
      %p120 = scmp.ne.s32.totalorder %s106, %s107
      %p121 = scmp.eq.s32.totalorder %s26, 1
      %p122 = por %p120, %p121
      %p124 = scmp.ne.s32.totalorder %s107, %s123
      %p125 = scmp.eq.s32.totalorder %s26, 0
      %p126 = por %p124, %p125
      %p127 = scmp.le.s32.totalorder 1, %s20
      %p128 = scmp.lt.s32.totalorder %s20, 3
      %p129 = pnand %p127, %p128
      %p130 = pneg %p129
      // Predicated region
      $region9: #{dcgan_discriminator_forward.8} parent=5 // pred_check
        _
      $region10: #{dcgan_discriminator_forward.8} parent=5 // pred_check_branch
        %132 = sbr.rel (%p129) target = $region12
      $region11: #{dcgan_discriminator_forward.8} parent=5 // pred_region
        %s133 = ssub.s32 %s20, 1
        // Predicated region
        $region13: #{dcgan_discriminator_forward.8} parent=11 // pred_check
          %p134 = pneg %p67
        $region14: #{dcgan_discriminator_forward.8} parent=11 // pred_check_branch
          %136 = sbr.rel (%p134) target = $region16
        $region15: #{dcgan_discriminator_forward.8} parent=11 // pred_region
          %s138 = ssub.s32 4096, 4096
          %139 = vsyncadd [#allocation6], %s138
          %s140 = sshll.u32 [#allocation5], 4
          %s141 = int_to_ptr.vmem [resolvable:$true] %s140
          %146 = dma.hbm_to_vmem [thread:$0]  %s1, 4096, %s141, [#allocation6], 64, 64, 4
        $region16: #{dcgan_discriminator_forward.8} parent=11 // pred_fallthru
          _
      $region12: #{dcgan_discriminator_forward.8} parent=5 // pred_fallthru
        _
      %p147 = scmp.lt.s32.totalorder %s20, 2
      // Predicated region
      $region17: #{dcgan_discriminator_forward.8} parent=5 // pred_check
        %p148 = pneg %p147
      $region18: #{dcgan_discriminator_forward.8} parent=5 // pred_check_branch
        %150 = sbr.rel (%p148) target = $region20
      $region19: #{dcgan_discriminator_forward.8} parent=5 // pred_region
        // Predicated region
        $region21: #{dcgan_discriminator_forward.8} parent=19 // pred_check
          %p151 = pneg %p40
        $region22: #{dcgan_discriminator_forward.8} parent=19 // pred_check_branch
          %153 = sbr.rel (%p151) target = $region24
        $region23: #{dcgan_discriminator_forward.8} parent=19 // pred_region
          %s154 = sand.u32 %s30, 1
          %s155 = scalar_lea.sflag [#allocation3], %s154
          %s156 = sand.u32 %s30, 1
          %s157 = smul.addr %s156, 72
          %s158 = scalar_lea.vmem [#allocation2], %s157
          %s160 = ssub.s32 1152, 1152
          %161 = vsyncadd %s155, %s160
          %s162 = smul.addr %s20, 18
          %s163 = smul.addr %s162, 64
          %s164 = scalar_lea.hbm %s0, %s163
          %s165 = sshll.u32 %s158, 4
          %s166 = int_to_ptr.vmem [resolvable:$true] %s165
          %171 = dma.hbm_to_vmem [thread:$0]  %s164, 1152, %s166, %s155, 64, 64, 4
        $region24: #{dcgan_discriminator_forward.8} parent=19 // pred_fallthru
          _
      $region20: #{dcgan_discriminator_forward.8} parent=5 // pred_fallthru
        _
      %p172 = scmp.le.s32.totalorder 1, %s20
      %p173 = scmp.lt.s32.totalorder %s20, 3
      %p174 = pnand %p172, %p173
      %p175 = pneg %p174
      // Predicated region
      $region25: #{dcgan_discriminator_forward.8} parent=5 // pred_check
        _
      $region26: #{dcgan_discriminator_forward.8} parent=5 // pred_check_branch
        %177 = sbr.rel (%p174) target = $region28
      $region27: #{dcgan_discriminator_forward.8} parent=5 // pred_region
        %s178 = ssub.s32 %s20, 1
        %s179 = sand.u32 %s33, 1
        %s180 = scalar_lea.sflag [#allocation3], %s179
        %s181 = sand.u32 %s33, 1
        %s182 = smul.addr %s181, 72
        %s183 = scalar_lea.vmem [#allocation2], %s182
        // Predicated region
        $region29: #{dcgan_discriminator_forward.8} parent=27 // pred_check
          %p184 = pneg %p46
        $region30: #{dcgan_discriminator_forward.8} parent=27 // pred_check_branch
          %186 = sbr.rel (%p184) target = $region32
        $region31: #{dcgan_discriminator_forward.8} parent=27 // pred_region
          %187 = dma.done %s180, 1152
        $region32: #{dcgan_discriminator_forward.8} parent=27 // pred_fallthru
          _
        // Predicated region
        $region33: #{dcgan_discriminator_forward.8} parent=27 // pred_check
          %p188 = pneg %p67
        $region34: #{dcgan_discriminator_forward.8} parent=27 // pred_check_branch
          %190 = sbr.rel (%p188) target = $region36
        $region35: #{dcgan_discriminator_forward.8} parent=27 // pred_region
          %191 = dma.done [#allocation6], 4096
        $region36: #{dcgan_discriminator_forward.8} parent=27 // pred_fallthru
          _
        %s192 = sand.u32 %s33, 1
        %s193 = scalar_lea.sflag [#allocation3], %s192
        %s194 = sand.u32 %s33, 1
        %s195 = smul.addr %s194, 72
        %s196 = scalar_lea.vmem [#allocation2], %s195
        %p197 = pneg %p46
        %p198 = pneg %p43
        %p199 = pneg %p67
        %p200 = pneg %p64
        %p201 = pneg %p93
        %p202 = pneg %p90
        %s203 = sand.u32 %s80, 1
        %s204 = scalar_lea.sflag [#allocation4], %s203
        %s205 = sand.u32 %s80, 1
        %s206 = smul.addr %s205, 32
        %s207 = scalar_lea.vmem [#allocation7], %s206
        %p208 = pneg %p119
        %p209 = pneg %p116
        %s210 = sand.u32 %s106, 1
        %s211 = scalar_lea.sflag [#allocation9], %s210
        %s212 = sand.u32 %s106, 1
        %s213 = smul.addr %s212, 2
        %s214 = scalar_lea.vmem [#allocation8], %s213
        %s215 = smul.u32 8, %s25
        %v217 = vld [vmem:[%s183] sm:$0xf]
        %v218 = vld [vmem:[%s183 + $0x8] sm:$0xf]
        %v219 = vld [vmem:[%s183 + $0x10] sm:$0xf]
        %v220 = vld [vmem:[%s183 + $0x18] sm:$0xf]
        %v221 = vld [vmem:[%s183 + $0x20] sm:$0xf]
        %v222 = vld [vmem:[%s183 + $0x28] sm:$0xf]
        %v223 = vld [vmem:[%s183 + $0x30] sm:$0xf]
        %v224 = vld [vmem:[%s183 + $0x38] sm:$0xf]
        %v225 = vld [vmem:[#allocation5] sm:$0xf]
        %v226 = vld [vmem:[#allocation5 + $0x4] sm:$0xf]
        %v227 = vld [vmem:[#allocation5 + $0x8] sm:$0xf]
        %v228 = vld [vmem:[#allocation5 + $0xc] sm:$0xf]
        %v229 = vld [vmem:[#allocation5 + $0x10] sm:$0xf]
        %v230 = vld [vmem:[#allocation5 + $0x14] sm:$0xf]
        %v231 = vld [vmem:[#allocation5 + $0x18] sm:$0xf]
        %v232 = vld [vmem:[#allocation5 + $0x1c] sm:$0xf]
        %v233 = vld [vmem:[#allocation5 + $0x20] sm:$0xf]
        %v234 = vld [vmem:[#allocation5 + $0x24] sm:$0xf]
        %v235 = vld [vmem:[#allocation5 + $0x28] sm:$0xf]
        %v236 = vld [vmem:[#allocation5 + $0x2c] sm:$0xf]
        %v237 = vld [vmem:[#allocation5 + $0x30] sm:$0xf]
        %v238 = vld [vmem:[#allocation5 + $0x34] sm:$0xf]
        %v239 = vld [vmem:[#allocation5 + $0x38] sm:$0xf]
        %v240 = vld [vmem:[#allocation5 + $0x3c] sm:$0xf]
        %v241 = vld [vmem:[%s183 + $0x4] sm:$0x1]
        %v242 = vld [vmem:[%s183 + $0xc] sm:$0x1]
        %v243 = vld [vmem:[%s183 + $0x14] sm:$0x1]
        %v244 = vld [vmem:[%s183 + $0x1c] sm:$0x1]
        %v245 = vld [vmem:[%s183 + $0x24] sm:$0x1]
        %v246 = vld [vmem:[%s183 + $0x2c] sm:$0x1]
        %v247 = vld [vmem:[%s183 + $0x34] sm:$0x1]
        %v248 = vld [vmem:[%s183 + $0x3c] sm:$0x1]
        %vm249 = vsmask.f32 3328
        %vm250 = vsmask.f32 7440
        %vm251 = vmor %vm249, %vm250
        %v253 = vshrl.u32 %v217, 16
        %v255 = vrot.slane %v253, 4
        %v256 = vshll.u32 %v217, 16
        %v258 = vrot.slane %v256, 5
        %v259 = vor.u32 %v255, %v258
        %v260 = vrot.slane %v259, 4
        %v262 = vshll.u32 %v241, 16
        %v264 = vrot.slane %v262, 5
        %v265 = vsel %vm251, %v260, %v264
        %v267 = vshrl.u32 %v218, 16
        %v269 = vrot.slane %v267, 4
        %v270 = vshll.u32 %v218, 16
        %v272 = vrot.slane %v270, 5
        %v273 = vor.u32 %v269, %v272
        %v274 = vrot.slane %v273, 4
        %v276 = vshll.u32 %v242, 16
        %v278 = vrot.slane %v276, 5
        %v279 = vsel %vm251, %v274, %v278
        %v281 = vshrl.u32 %v219, 16
        %v283 = vrot.slane %v281, 4
        %v284 = vshll.u32 %v219, 16
        %v286 = vrot.slane %v284, 5
        %v287 = vor.u32 %v283, %v286
        %v288 = vrot.slane %v287, 4
        %v290 = vshll.u32 %v243, 16
        %v292 = vrot.slane %v290, 5
        %v293 = vsel %vm251, %v288, %v292
        %v295 = vshrl.u32 %v220, 16
        %v297 = vrot.slane %v295, 4
        %v298 = vshll.u32 %v220, 16
        %v300 = vrot.slane %v298, 5
        %v301 = vor.u32 %v297, %v300
        %v302 = vrot.slane %v301, 4
        %v304 = vshll.u32 %v244, 16
        %v306 = vrot.slane %v304, 5
        %v307 = vsel %vm251, %v302, %v306
        %v309 = vshrl.u32 %v221, 16
        %v311 = vrot.slane %v309, 4
        %v312 = vshll.u32 %v221, 16
        %v314 = vrot.slane %v312, 5
        %v315 = vor.u32 %v311, %v314
        %v316 = vrot.slane %v315, 4
        %v318 = vshll.u32 %v245, 16
        %v320 = vrot.slane %v318, 5
        %v321 = vsel %vm251, %v316, %v320
        %v323 = vshrl.u32 %v222, 16
        %v325 = vrot.slane %v323, 4
        %v326 = vshll.u32 %v222, 16
        %v328 = vrot.slane %v326, 5
        %v329 = vor.u32 %v325, %v328
        %v330 = vrot.slane %v329, 4
        %v332 = vshll.u32 %v246, 16
        %v334 = vrot.slane %v332, 5
        %v335 = vsel %vm251, %v330, %v334
        %v337 = vshrl.u32 %v223, 16
        %v339 = vrot.slane %v337, 4
        %v340 = vshll.u32 %v223, 16
        %v342 = vrot.slane %v340, 5
        %v343 = vor.u32 %v339, %v342
        %v344 = vrot.slane %v343, 4
        %v346 = vshll.u32 %v247, 16
        %v348 = vrot.slane %v346, 5
        %v349 = vsel %vm251, %v344, %v348
        %v351 = vshrl.u32 %v224, 16
        %v353 = vrot.slane %v351, 4
        %v354 = vshll.u32 %v224, 16
        %v356 = vrot.slane %v354, 5
        %v357 = vor.u32 %v353, %v356
        %v358 = vrot.slane %v357, 4
        %v360 = vshll.u32 %v248, 16
        %v362 = vrot.slane %v360, 5
        %v363 = vsel %vm251, %v358, %v362
        %s364 = scalar_lea.vmem [#allocation5], 64
        %v365 = vld [vmem:[%s364] sm:$0xf]
        %v366 = vld [vmem:[%s364 + $0x4] sm:$0xf]
        %v367 = vld [vmem:[%s364 + $0x8] sm:$0xf]
        %v368 = vld [vmem:[%s364 + $0xc] sm:$0xf]
        %v369 = vld [vmem:[%s364 + $0x10] sm:$0xf]
        %v370 = vld [vmem:[%s364 + $0x14] sm:$0xf]
        %v371 = vld [vmem:[%s364 + $0x18] sm:$0xf]
        %v372 = vld [vmem:[%s364 + $0x1c] sm:$0xf]
        %v373 = vld [vmem:[%s364 + $0x20] sm:$0xf]
        %v374 = vld [vmem:[%s364 + $0x24] sm:$0xf]
        %v375 = vld [vmem:[%s364 + $0x28] sm:$0xf]
        %v376 = vld [vmem:[%s364 + $0x2c] sm:$0xf]
        %v377 = vld [vmem:[%s364 + $0x30] sm:$0xf]
        %v378 = vld [vmem:[%s364 + $0x34] sm:$0xf]
        %v379 = vld [vmem:[%s364 + $0x38] sm:$0xf]
        %v380 = vld [vmem:[%s364 + $0x3c] sm:$0xf]
        %v381 = vunpack.c.l.b16 %v265
        %v382 = vunpack.c.l.b16 %v279
        %v383 = vunpack.c.l.b16 %v293
        %v384 = vunpack.c.l.b16 %v307
        %v385 = vunpack.c.l.b16 %v321
        %v386 = vunpack.c.l.b16 %v335
        %v387 = vunpack.c.l.b16 %v349
        %v388 = vunpack.c.l.b16 %v363
        %v389 = vpack.c.b16 %v382, %v381
        %v390 = vpack.c.b16 %v384, %v383
        %v391 = vpack.c.b16 %v386, %v385
        %v392 = vpack.c.b16 %v388, %v387
        %v413 = vunpack.c.l.b16 %v365
        %v414 = vunpack.c.l.b16 %v366
        %v415 = vunpack.c.l.b16 %v367
        %v416 = vunpack.c.l.b16 %v368
        %v417 = vunpack.c.l.b16 %v369
        %v418 = vunpack.c.l.b16 %v370
        %v419 = vunpack.c.l.b16 %v371
        %v420 = vunpack.c.l.b16 %v372
        %v421 = vunpack.c.l.b16 %v373
        %v422 = vunpack.c.l.b16 %v374
        %v423 = vunpack.c.l.b16 %v375
        %v424 = vunpack.c.l.b16 %v376
        %v425 = vunpack.c.l.b16 %v377
        %v426 = vunpack.c.l.b16 %v378
        %v427 = vunpack.c.l.b16 %v379
        %v428 = vunpack.c.l.b16 %v380
        %v429 = vpack.c.b16 %v414, %v413
        %v430 = vpack.c.b16 %v416, %v415
        %v431 = vpack.c.b16 %v418, %v417
        %v432 = vpack.c.b16 %v420, %v419
        %v433 = vpack.c.b16 %v422, %v421
        %v434 = vpack.c.b16 %v424, %v423
        %v435 = vpack.c.b16 %v426, %v425
        %v436 = vpack.c.b16 %v428, %v427
        %445 = vmatprep.subr.bf16.mxu0 0
        %446 = vmatpush1.bf16.msra.mxu0 %v429
        %447 = vmatprep.subr.bf16.mxu0 0
        %448 = vmatpush1.bf16.msra.mxu0 %v430
        %449 = vmatprep.subr.bf16.mxu0 0
        %450 = vmatpush1.bf16.msra.mxu0 %v431
        %451 = vmatprep.subr.bf16.mxu0 0
        %452 = vmatpush1.bf16.msra.mxu0 %v432
        %453 = vmatprep.subr.bf16.mxu0 0
        %454 = vmatpush1.bf16.msra.mxu0 %v433
        %455 = vmatprep.subr.bf16.mxu0 0
        %456 = vmatpush1.bf16.msra.mxu0 %v434
        %457 = vmatprep.subr.bf16.mxu0 0
        %458 = vmatpush1.bf16.msra.mxu0 %v435
        %459 = vmatprep.subr.bf16.mxu0 0
        %460 = vmatpush1.bf16.msra.mxu0 %v436
        %461 = vmatprep.subr.bf16.mxu0 0
        %462 = vmatpush1.bf16.msra.mxu0 0
        %463 = vmatprep.subr.bf16.mxu0 0
        %464 = vmatpush1.bf16.msra.mxu0 0
        %465 = vmatprep.subr.bf16.mxu0 0
        %466 = vmatpush1.bf16.msra.mxu0 0
        %467 = vmatprep.subr.bf16.mxu0 0
        %468 = vmatpush1.bf16.msra.mxu0 0
        %469 = vmatprep.subr.bf16.mxu0 0
        %470 = vmatpush1.bf16.msra.mxu0 0
        %471 = vmatprep.subr.bf16.mxu0 0
        %472 = vmatpush1.bf16.msra.mxu0 0
        %473 = vmatprep.subr.bf16.mxu0 0
        %474 = vmatpush1.bf16.msra.mxu0 0
        %475 = vmatprep.subr.bf16.mxu0 0
        %476 = vmatpush1.bf16.msra.mxu0 0
        %477 = vmatprep.mubr.bf16.mxu0 0
        %478 = vmatmul.mubr.bf16.gmra.mrb[0].mxu0 %v389
        %v479 = vpop.f32.mrb[0].mxu0
        %v480 = vadd.f32 0.0, %v479
        %v481 = vpop.f32.mrb[0].mxu0
        %v482 = vpop.f32.mrb[0].mxu0
        %v483 = vadd.f32 0.0, %v482
        %v484 = vpop.f32.mrb[0].mxu0
        %485 = vmatprep.mubr.bf16.mxu0 0
        %486 = vmatmul.mubr.bf16.gmra.mrb[0].mxu0 %v390
        %v487 = vpop.f32.mrb[0].mxu0
        %v488 = vadd.f32 0.0, %v487
        %v489 = vpop.f32.mrb[0].mxu0
        %v490 = vpop.f32.mrb[0].mxu0
        %v491 = vadd.f32 0.0, %v490
        %v492 = vpop.f32.mrb[0].mxu0
        %493 = vmatprep.mubr.bf16.mxu0 0
        %494 = vmatmul.mubr.bf16.gmra.mrb[0].mxu0 %v391
        %v495 = vpop.f32.mrb[0].mxu0
        %v496 = vadd.f32 0.0, %v495
        %v497 = vpop.f32.mrb[0].mxu0
        %v498 = vpop.f32.mrb[0].mxu0
        %v499 = vadd.f32 0.0, %v498
        %v500 = vpop.f32.mrb[0].mxu0
        %501 = vmatprep.mubr.bf16.mxu0 0
        %502 = vmatmul.mubr.bf16.gmra.mrb[0].mxu0 %v392
        %v503 = vpop.f32.mrb[0].mxu0
        %v504 = vadd.f32 0.0, %v503
        %v505 = vpop.f32.mrb[0].mxu0
        %v506 = vpop.f32.mrb[0].mxu0
        %v507 = vadd.f32 0.0, %v506
        %v508 = vpop.f32.mrb[0].mxu0
        %509 = vdwg.mxu0
        %v518 = vunpack.c.l.b16 %v217
        %v519 = vunpack.c.l.b16 %v218
        %v520 = vunpack.c.l.b16 %v219
        %v521 = vunpack.c.l.b16 %v220
        %v522 = vunpack.c.l.b16 %v221
        %v523 = vunpack.c.l.b16 %v222
        %v524 = vunpack.c.l.b16 %v223
        %v525 = vunpack.c.l.b16 %v224
        %v526 = vpack.c.b16 %v519, %v518
        %v527 = vpack.c.b16 %v521, %v520
        %v528 = vpack.c.b16 %v523, %v522
        %v529 = vpack.c.b16 %v525, %v524
        %v550 = vunpack.c.l.b16 %v225
        %v551 = vunpack.c.l.b16 %v226
        %v552 = vunpack.c.l.b16 %v227
        %v553 = vunpack.c.l.b16 %v228
        %v554 = vunpack.c.l.b16 %v229
        %v555 = vunpack.c.l.b16 %v230
        %v556 = vunpack.c.l.b16 %v231
        %v557 = vunpack.c.l.b16 %v232
        %v558 = vunpack.c.l.b16 %v233
        %v559 = vunpack.c.l.b16 %v234
        %v560 = vunpack.c.l.b16 %v235
        %v561 = vunpack.c.l.b16 %v236
        %v562 = vunpack.c.l.b16 %v237
        %v563 = vunpack.c.l.b16 %v238
        %v564 = vunpack.c.l.b16 %v239
        %v565 = vunpack.c.l.b16 %v240
        %v566 = vpack.c.b16 %v551, %v550
        %v567 = vpack.c.b16 %v553, %v552
        %v568 = vpack.c.b16 %v555, %v554
        %v569 = vpack.c.b16 %v557, %v556
        %v570 = vpack.c.b16 %v559, %v558
        %v571 = vpack.c.b16 %v561, %v560
        %v572 = vpack.c.b16 %v563, %v562
        %v573 = vpack.c.b16 %v565, %v564
        %582 = vmatprep.subr.bf16.mxu0 0
        %583 = vmatpush1.bf16.msra.mxu0 %v566
        %584 = vmatprep.subr.bf16.mxu0 0
        %585 = vmatpush1.bf16.msra.mxu0 %v567
        %586 = vmatprep.subr.bf16.mxu0 0
        %587 = vmatpush1.bf16.msra.mxu0 %v568
        %588 = vmatprep.subr.bf16.mxu0 0
        %589 = vmatpush1.bf16.msra.mxu0 %v569
        %590 = vmatprep.subr.bf16.mxu0 0
        %591 = vmatpush1.bf16.msra.mxu0 %v570
        %592 = vmatprep.subr.bf16.mxu0 0
        %593 = vmatpush1.bf16.msra.mxu0 %v571
        %594 = vmatprep.subr.bf16.mxu0 0
        %595 = vmatpush1.bf16.msra.mxu0 %v572
        %596 = vmatprep.subr.bf16.mxu0 0
        %597 = vmatpush1.bf16.msra.mxu0 %v573
        %598 = vmatprep.subr.bf16.mxu0 0
        %599 = vmatpush1.bf16.msra.mxu0 0
        %600 = vmatprep.subr.bf16.mxu0 0
        %601 = vmatpush1.bf16.msra.mxu0 0
        %602 = vmatprep.subr.bf16.mxu0 0
        %603 = vmatpush1.bf16.msra.mxu0 0
        %604 = vmatprep.subr.bf16.mxu0 0
        %605 = vmatpush1.bf16.msra.mxu0 0
        %606 = vmatprep.subr.bf16.mxu0 0
        %607 = vmatpush1.bf16.msra.mxu0 0
        %608 = vmatprep.subr.bf16.mxu0 0
        %609 = vmatpush1.bf16.msra.mxu0 0
        %610 = vmatprep.subr.bf16.mxu0 0
        %611 = vmatpush1.bf16.msra.mxu0 0
        %612 = vmatprep.subr.bf16.mxu0 0
        %613 = vmatpush1.bf16.msra.mxu0 0
        %614 = vmatprep.mubr.bf16.mxu0 0
        %615 = vmatmul.mubr.bf16.gmra.mrb[0].mxu0 %v526
        %v616 = vpop.f32.mrb[0].mxu0
        %v617 = vadd.f32 %v480, %v616
        %v618 = vpop.f32.mrb[0].mxu0
        %v619 = vpop.f32.mrb[0].mxu0
        %v620 = vadd.f32 %v483, %v619
        %v621 = vpop.f32.mrb[0].mxu0
        %622 = vmatprep.mubr.bf16.mxu0 0
        %623 = vmatmul.mubr.bf16.gmra.mrb[0].mxu0 %v527
        %v624 = vpop.f32.mrb[0].mxu0
        %v625 = vadd.f32 %v488, %v624
        %v626 = vpop.f32.mrb[0].mxu0
        %v627 = vpop.f32.mrb[0].mxu0
        %v628 = vadd.f32 %v491, %v627
        %v629 = vpop.f32.mrb[0].mxu0
        %630 = vmatprep.mubr.bf16.mxu0 0
        %631 = vmatmul.mubr.bf16.gmra.mrb[0].mxu0 %v528
        %v632 = vpop.f32.mrb[0].mxu0
        %v633 = vadd.f32 %v496, %v632
        %v634 = vpop.f32.mrb[0].mxu0
        %v635 = vpop.f32.mrb[0].mxu0
        %v636 = vadd.f32 %v499, %v635
        %v637 = vpop.f32.mrb[0].mxu0
        %638 = vmatprep.mubr.bf16.mxu0 0
        %639 = vmatmul.mubr.bf16.gmra.mrb[0].mxu0 %v529
        %v640 = vpop.f32.mrb[0].mxu0
        %v641 = vadd.f32 %v504, %v640
        %v642 = vpop.f32.mrb[0].mxu0
        %v643 = vpop.f32.mrb[0].mxu0
        %v644 = vadd.f32 %v507, %v643
        %v645 = vpop.f32.mrb[0].mxu0
        %646 = vdwg.mxu0
        %s647 = scalar_lea.vmem %s183, 8 [#allocation2]
        %v648 = vld [vmem:[%s647] sm:$0xf]
        %v649 = vld [vmem:[%s647 + $0x8] sm:$0xf]
        %v650 = vld [vmem:[%s647 + $0x10] sm:$0xf]
        %v651 = vld [vmem:[%s647 + $0x18] sm:$0xf]
        %v652 = vld [vmem:[%s647 + $0x20] sm:$0xf]
        %v653 = vld [vmem:[%s647 + $0x28] sm:$0xf]
        %v654 = vld [vmem:[%s647 + $0x30] sm:$0xf]
        %v655 = vld [vmem:[%s647 + $0x38] sm:$0xf]
        %s656 = scalar_lea.vmem [#allocation5], 128
        %v657 = vld [vmem:[%s656] sm:$0xf]
        %v658 = vld [vmem:[%s656 + $0x4] sm:$0xf]
        %v659 = vld [vmem:[%s656 + $0x8] sm:$0xf]
        %v660 = vld [vmem:[%s656 + $0xc] sm:$0xf]
        %v661 = vld [vmem:[%s656 + $0x10] sm:$0xf]
        %v662 = vld [vmem:[%s656 + $0x14] sm:$0xf]
        %v663 = vld [vmem:[%s656 + $0x18] sm:$0xf]
        %v664 = vld [vmem:[%s656 + $0x1c] sm:$0xf]
        %v665 = vld [vmem:[%s656 + $0x20] sm:$0xf]
        %v666 = vld [vmem:[%s656 + $0x24] sm:$0xf]
        %v667 = vld [vmem:[%s656 + $0x28] sm:$0xf]
        %v668 = vld [vmem:[%s656 + $0x2c] sm:$0xf]
        %v669 = vld [vmem:[%s656 + $0x30] sm:$0xf]
        %v670 = vld [vmem:[%s656 + $0x34] sm:$0xf]
        %v671 = vld [vmem:[%s656 + $0x38] sm:$0xf]
        %v672 = vld [vmem:[%s656 + $0x3c] sm:$0xf]
        %v681 = vunpack.c.l.b16 %v648
        %v682 = vunpack.c.l.b16 %v649
        %v683 = vunpack.c.l.b16 %v650
        %v684 = vunpack.c.l.b16 %v651
        %v685 = vunpack.c.l.b16 %v652
        %v686 = vunpack.c.l.b16 %v653
        %v687 = vunpack.c.l.b16 %v654
        %v688 = vunpack.c.l.b16 %v655
        %v689 = vpack.c.b16 %v682, %v681
        %v690 = vpack.c.b16 %v684, %v683
        %v691 = vpack.c.b16 %v686, %v685
        %v692 = vpack.c.b16 %v688, %v687
        %v713 = vunpack.c.l.b16 %v657
        %v714 = vunpack.c.l.b16 %v658
        %v715 = vunpack.c.l.b16 %v659
        %v716 = vunpack.c.l.b16 %v660
        %v717 = vunpack.c.l.b16 %v661
        %v718 = vunpack.c.l.b16 %v662
        %v719 = vunpack.c.l.b16 %v663
        %v720 = vunpack.c.l.b16 %v664
        %v721 = vunpack.c.l.b16 %v665
        %v722 = vunpack.c.l.b16 %v666
        %v723 = vunpack.c.l.b16 %v667
        %v724 = vunpack.c.l.b16 %v668
        %v725 = vunpack.c.l.b16 %v669
        %v726 = vunpack.c.l.b16 %v670
        %v727 = vunpack.c.l.b16 %v671
        %v728 = vunpack.c.l.b16 %v672
        %v729 = vpack.c.b16 %v714, %v713
        %v730 = vpack.c.b16 %v716, %v715
        %v731 = vpack.c.b16 %v718, %v717
        %v732 = vpack.c.b16 %v720, %v719
        %v733 = vpack.c.b16 %v722, %v721
        %v734 = vpack.c.b16 %v724, %v723
        %v735 = vpack.c.b16 %v726, %v725
        %v736 = vpack.c.b16 %v728, %v727
        %745 = vmatprep.subr.bf16.mxu0 0
        %746 = vmatpush1.bf16.msra.mxu0 %v729
        %747 = vmatprep.subr.bf16.mxu0 0
        %748 = vmatpush1.bf16.msra.mxu0 %v730
        %749 = vmatprep.subr.bf16.mxu0 0
        %750 = vmatpush1.bf16.msra.mxu0 %v731
        %751 = vmatprep.subr.bf16.mxu0 0
        %752 = vmatpush1.bf16.msra.mxu0 %v732
        %753 = vmatprep.subr.bf16.mxu0 0
        %754 = vmatpush1.bf16.msra.mxu0 %v733
        %755 = vmatprep.subr.bf16.mxu0 0
        %756 = vmatpush1.bf16.msra.mxu0 %v734
        %757 = vmatprep.subr.bf16.mxu0 0
        %758 = vmatpush1.bf16.msra.mxu0 %v735
        %759 = vmatprep.subr.bf16.mxu0 0
        %760 = vmatpush1.bf16.msra.mxu0 %v736
        %761 = vmatprep.subr.bf16.mxu0 0
        %762 = vmatpush1.bf16.msra.mxu0 0
        %763 = vmatprep.subr.bf16.mxu0 0
        %764 = vmatpush1.bf16.msra.mxu0 0
        %765 = vmatprep.subr.bf16.mxu0 0
        %766 = vmatpush1.bf16.msra.mxu0 0
        %767 = vmatprep.subr.bf16.mxu0 0
        %768 = vmatpush1.bf16.msra.mxu0 0
        %769 = vmatprep.subr.bf16.mxu0 0
        %770 = vmatpush1.bf16.msra.mxu0 0
        %771 = vmatprep.subr.bf16.mxu0 0
        %772 = vmatpush1.bf16.msra.mxu0 0
        %773 = vmatprep.subr.bf16.mxu0 0
        %774 = vmatpush1.bf16.msra.mxu0 0
        %775 = vmatprep.subr.bf16.mxu0 0
        %776 = vmatpush1.bf16.msra.mxu0 0
        %777 = vmatprep.mubr.bf16.mxu0 0
        %778 = vmatmul.mubr.bf16.gmra.mrb[0].mxu0 %v689
        %v779 = vpop.f32.mrb[0].mxu0
        %v780 = vadd.f32 0.0, %v779
        %v781 = vpop.f32.mrb[0].mxu0
        %v782 = vpop.f32.mrb[0].mxu0
        %v783 = vadd.f32 0.0, %v782
        %v784 = vpop.f32.mrb[0].mxu0
        %785 = vmatprep.mubr.bf16.mxu0 0
        %786 = vmatmul.mubr.bf16.gmra.mrb[0].mxu0 %v690
        %v787 = vpop.f32.mrb[0].mxu0
        %v788 = vadd.f32 0.0, %v787
        %v789 = vpop.f32.mrb[0].mxu0
        %v790 = vpop.f32.mrb[0].mxu0
        %v791 = vadd.f32 0.0, %v790
        %v792 = vpop.f32.mrb[0].mxu0
        %793 = vmatprep.mubr.bf16.mxu0 0
        %794 = vmatmul.mubr.bf16.gmra.mrb[0].mxu0 %v691
        %v795 = vpop.f32.mrb[0].mxu0
        %v796 = vadd.f32 0.0, %v795
        %v797 = vpop.f32.mrb[0].mxu0
        %v798 = vpop.f32.mrb[0].mxu0
        %v799 = vadd.f32 0.0, %v798
        %v800 = vpop.f32.mrb[0].mxu0
        %801 = vmatprep.mubr.bf16.mxu0 0
        %802 = vmatmul.mubr.bf16.gmra.mrb[0].mxu0 %v692
        %v803 = vpop.f32.mrb[0].mxu0
        %v804 = vadd.f32 0.0, %v803
        %v805 = vpop.f32.mrb[0].mxu0
        %v806 = vpop.f32.mrb[0].mxu0
        %v807 = vadd.f32 0.0, %v806
        %v808 = vpop.f32.mrb[0].mxu0
        %809 = vdwg.mxu0
        %v810 = vadd.f32 %v617, %v780
        %v811 = vadd.f32 %v620, %v783
        %v812 = vadd.f32 %v625, %v788
        %v813 = vadd.f32 %v628, %v791
        %v814 = vadd.f32 %v633, %v796
        %v815 = vadd.f32 %v636, %v799
        %v816 = vadd.f32 %v641, %v804
        %v817 = vadd.f32 %v644, %v807
        %v818 = vld [vmem:[%s647] sm:$0xf]
        %v819 = vld [vmem:[%s647 + $0x4] sm:$0x1]
        %v820 = vld [vmem:[%s647 + $0x8] sm:$0xf]
        %v821 = vld [vmem:[%s647 + $0xc] sm:$0x1]
        %v822 = vld [vmem:[%s647 + $0x10] sm:$0xf]
        %v823 = vld [vmem:[%s647 + $0x14] sm:$0x1]
        %v824 = vld [vmem:[%s647 + $0x18] sm:$0xf]
        %v825 = vld [vmem:[%s647 + $0x1c] sm:$0x1]
        %v826 = vld [vmem:[%s647 + $0x20] sm:$0xf]
        %v827 = vld [vmem:[%s647 + $0x24] sm:$0x1]
        %v828 = vld [vmem:[%s647 + $0x28] sm:$0xf]
        %v829 = vld [vmem:[%s647 + $0x2c] sm:$0x1]
        %v830 = vld [vmem:[%s647 + $0x30] sm:$0xf]
        %v831 = vld [vmem:[%s647 + $0x34] sm:$0x1]
        %v832 = vld [vmem:[%s647 + $0x38] sm:$0xf]
        %v833 = vld [vmem:[%s647 + $0x3c] sm:$0x1]
        %v835 = vshrl.u32 %v818, 16
        %v837 = vrot.slane %v835, 4
        %v838 = vshll.u32 %v818, 16
        %v840 = vrot.slane %v838, 5
        %v841 = vor.u32 %v837, %v840
        %v842 = vrot.slane %v841, 4
        %v844 = vshll.u32 %v819, 16
        %v846 = vrot.slane %v844, 5
        %v847 = vsel %vm251, %v842, %v846
        %v849 = vshrl.u32 %v820, 16
        %v851 = vrot.slane %v849, 4
        %v852 = vshll.u32 %v820, 16
        %v854 = vrot.slane %v852, 5
        %v855 = vor.u32 %v851, %v854
        %v856 = vrot.slane %v855, 4
        %v858 = vshll.u32 %v821, 16
        %v860 = vrot.slane %v858, 5
        %v861 = vsel %vm251, %v856, %v860
        %v863 = vshrl.u32 %v822, 16
        %v865 = vrot.slane %v863, 4
        %v866 = vshll.u32 %v822, 16
        %v868 = vrot.slane %v866, 5
        %v869 = vor.u32 %v865, %v868
        %v870 = vrot.slane %v869, 4
        %v872 = vshll.u32 %v823, 16
        %v874 = vrot.slane %v872, 5
        %v875 = vsel %vm251, %v870, %v874
        %v877 = vshrl.u32 %v824, 16
        %v879 = vrot.slane %v877, 4
        %v880 = vshll.u32 %v824, 16
        %v882 = vrot.slane %v880, 5
        %v883 = vor.u32 %v879, %v882
        %v884 = vrot.slane %v883, 4
        %v886 = vshll.u32 %v825, 16
        %v888 = vrot.slane %v886, 5
        %v889 = vsel %vm251, %v884, %v888
        %v891 = vshrl.u32 %v826, 16
        %v893 = vrot.slane %v891, 4
        %v894 = vshll.u32 %v826, 16
        %v896 = vrot.slane %v894, 5
        %v897 = vor.u32 %v893, %v896
        %v898 = vrot.slane %v897, 4
        %v900 = vshll.u32 %v827, 16
        %v902 = vrot.slane %v900, 5
        %v903 = vsel %vm251, %v898, %v902
        %v905 = vshrl.u32 %v828, 16
        %v907 = vrot.slane %v905, 4
        %v908 = vshll.u32 %v828, 16
        %v910 = vrot.slane %v908, 5
        %v911 = vor.u32 %v907, %v910
        %v912 = vrot.slane %v911, 4
        %v914 = vshll.u32 %v829, 16
        %v916 = vrot.slane %v914, 5
        %v917 = vsel %vm251, %v912, %v916
        %v919 = vshrl.u32 %v830, 16
        %v921 = vrot.slane %v919, 4
        %v922 = vshll.u32 %v830, 16
        %v924 = vrot.slane %v922, 5
        %v925 = vor.u32 %v921, %v924
        %v926 = vrot.slane %v925, 4
        %v928 = vshll.u32 %v831, 16
        %v930 = vrot.slane %v928, 5
        %v931 = vsel %vm251, %v926, %v930
        %v933 = vshrl.u32 %v832, 16
        %v935 = vrot.slane %v933, 4
        %v936 = vshll.u32 %v832, 16
        %v938 = vrot.slane %v936, 5
        %v939 = vor.u32 %v935, %v938
        %v940 = vrot.slane %v939, 4
        %v942 = vshll.u32 %v833, 16
        %v944 = vrot.slane %v942, 5
        %v945 = vsel %vm251, %v940, %v944
        %s946 = scalar_lea.vmem [#allocation5], 192
        %v947 = vld [vmem:[%s946] sm:$0xf]
        %v948 = vld [vmem:[%s946 + $0x4] sm:$0xf]
        %v949 = vld [vmem:[%s946 + $0x8] sm:$0xf]
        %v950 = vld [vmem:[%s946 + $0xc] sm:$0xf]
        %v951 = vld [vmem:[%s946 + $0x10] sm:$0xf]
        %v952 = vld [vmem:[%s946 + $0x14] sm:$0xf]
        %v953 = vld [vmem:[%s946 + $0x18] sm:$0xf]
        %v954 = vld [vmem:[%s946 + $0x1c] sm:$0xf]
        %v955 = vld [vmem:[%s946 + $0x20] sm:$0xf]
        %v956 = vld [vmem:[%s946 + $0x24] sm:$0xf]
        %v957 = vld [vmem:[%s946 + $0x28] sm:$0xf]
        %v958 = vld [vmem:[%s946 + $0x2c] sm:$0xf]
        %v959 = vld [vmem:[%s946 + $0x30] sm:$0xf]
        %v960 = vld [vmem:[%s946 + $0x34] sm:$0xf]
        %v961 = vld [vmem:[%s946 + $0x38] sm:$0xf]
        %v962 = vld [vmem:[%s946 + $0x3c] sm:$0xf]
        %v963 = vunpack.c.l.b16 %v847
        %v964 = vunpack.c.l.b16 %v861
        %v965 = vunpack.c.l.b16 %v875
        %v966 = vunpack.c.l.b16 %v889
        %v967 = vunpack.c.l.b16 %v903
        %v968 = vunpack.c.l.b16 %v917
        %v969 = vunpack.c.l.b16 %v931
        %v970 = vunpack.c.l.b16 %v945
        %v971 = vpack.c.b16 %v964, %v963
        %v972 = vpack.c.b16 %v966, %v965
        %v973 = vpack.c.b16 %v968, %v967
        %v974 = vpack.c.b16 %v970, %v969
        %v995 = vunpack.c.l.b16 %v947
        %v996 = vunpack.c.l.b16 %v948
        %v997 = vunpack.c.l.b16 %v949
        %v998 = vunpack.c.l.b16 %v950
        %v999 = vunpack.c.l.b16 %v951
        %v1000 = vunpack.c.l.b16 %v952
        %v1001 = vunpack.c.l.b16 %v953
        %v1002 = vunpack.c.l.b16 %v954
        %v1003 = vunpack.c.l.b16 %v955
        %v1004 = vunpack.c.l.b16 %v956
        %v1005 = vunpack.c.l.b16 %v957
        %v1006 = vunpack.c.l.b16 %v958
        %v1007 = vunpack.c.l.b16 %v959
        %v1008 = vunpack.c.l.b16 %v960
        %v1009 = vunpack.c.l.b16 %v961
        %v1010 = vunpack.c.l.b16 %v962
        %v1011 = vpack.c.b16 %v996, %v995
        %v1012 = vpack.c.b16 %v998, %v997
        %v1013 = vpack.c.b16 %v1000, %v999
        %v1014 = vpack.c.b16 %v1002, %v1001
        %v1015 = vpack.c.b16 %v1004, %v1003
        %v1016 = vpack.c.b16 %v1006, %v1005
        %v1017 = vpack.c.b16 %v1008, %v1007
        %v1018 = vpack.c.b16 %v1010, %v1009
        %1027 = vmatprep.subr.bf16.mxu0 0
        %1028 = vmatpush1.bf16.msra.mxu0 %v1011
        %1029 = vmatprep.subr.bf16.mxu0 0
        %1030 = vmatpush1.bf16.msra.mxu0 %v1012
        %1031 = vmatprep.subr.bf16.mxu0 0
        %1032 = vmatpush1.bf16.msra.mxu0 %v1013
        %1033 = vmatprep.subr.bf16.mxu0 0
        %1034 = vmatpush1.bf16.msra.mxu0 %v1014
        %1035 = vmatprep.subr.bf16.mxu0 0
        %1036 = vmatpush1.bf16.msra.mxu0 %v1015
        %1037 = vmatprep.subr.bf16.mxu0 0
        %1038 = vmatpush1.bf16.msra.mxu0 %v1016
        %1039 = vmatprep.subr.bf16.mxu0 0
        %1040 = vmatpush1.bf16.msra.mxu0 %v1017
        %1041 = vmatprep.subr.bf16.mxu0 0
        %1042 = vmatpush1.bf16.msra.mxu0 %v1018
        %1043 = vmatprep.subr.bf16.mxu0 0
        %1044 = vmatpush1.bf16.msra.mxu0 0
        %1045 = vmatprep.subr.bf16.mxu0 0
        %1046 = vmatpush1.bf16.msra.mxu0 0
        %1047 = vmatprep.subr.bf16.mxu0 0
        %1048 = vmatpush1.bf16.msra.mxu0 0
        %1049 = vmatprep.subr.bf16.mxu0 0
        %1050 = vmatpush1.bf16.msra.mxu0 0
        %1051 = vmatprep.subr.bf16.mxu0 0
        %1052 = vmatpush1.bf16.msra.mxu0 0
        %1053 = vmatprep.subr.bf16.mxu0 0
        %1054 = vmatpush1.bf16.msra.mxu0 0
        %1055 = vmatprep.subr.bf16.mxu0 0
        %1056 = vmatpush1.bf16.msra.mxu0 0
        %1057 = vmatprep.subr.bf16.mxu0 0
        %1058 = vmatpush1.bf16.msra.mxu0 0
        %1059 = vmatprep.mubr.bf16.mxu0 0
        %1060 = vmatmul.mubr.bf16.gmra.mrb[0].mxu0 %v971
        %v1061 = vpop.f32.mrb[0].mxu0
        %v1062 = vadd.f32 0.0, %v1061
        %v1063 = vpop.f32.mrb[0].mxu0
        %v1064 = vpop.f32.mrb[0].mxu0
        %v1065 = vadd.f32 0.0, %v1064
        %v1066 = vpop.f32.mrb[0].mxu0
        %1067 = vmatprep.mubr.bf16.mxu0 0
        %1068 = vmatmul.mubr.bf16.gmra.mrb[0].mxu0 %v972
        %v1069 = vpop.f32.mrb[0].mxu0
        %v1070 = vadd.f32 0.0, %v1069
        %v1071 = vpop.f32.mrb[0].mxu0
        %v1072 = vpop.f32.mrb[0].mxu0
        %v1073 = vadd.f32 0.0, %v1072
        %v1074 = vpop.f32.mrb[0].mxu0
        %1075 = vmatprep.mubr.bf16.mxu0 0
        %1076 = vmatmul.mubr.bf16.gmra.mrb[0].mxu0 %v973
        %v1077 = vpop.f32.mrb[0].mxu0
        %v1078 = vadd.f32 0.0, %v1077
        %v1079 = vpop.f32.mrb[0].mxu0
        %v1080 = vpop.f32.mrb[0].mxu0
        %v1081 = vadd.f32 0.0, %v1080
        %v1082 = vpop.f32.mrb[0].mxu0
        %1083 = vmatprep.mubr.bf16.mxu0 0
        %1084 = vmatmul.mubr.bf16.gmra.mrb[0].mxu0 %v974
        %v1085 = vpop.f32.mrb[0].mxu0
        %v1086 = vadd.f32 0.0, %v1085
        %v1087 = vpop.f32.mrb[0].mxu0
        %v1088 = vpop.f32.mrb[0].mxu0
        %v1089 = vadd.f32 0.0, %v1088
        %v1090 = vpop.f32.mrb[0].mxu0
        %1091 = vdwg.mxu0
        %v1092 = vadd.f32 %v810, %v1062
        %v1093 = vadd.f32 %v811, %v1065
        %v1094 = vadd.f32 %v812, %v1070
        %v1095 = vadd.f32 %v813, %v1073
        %v1096 = vadd.f32 %v814, %v1078
        %v1097 = vadd.f32 %v815, %v1081
        %v1098 = vadd.f32 %v816, %v1086
        %v1099 = vadd.f32 %v817, %v1089
        %v1100 = vpack.c.bf16 %v1093, %v1092
        %v1101 = vpack.c.bf16 %v1095, %v1094
        %v1102 = vpack.c.bf16 %v1097, %v1096
        %v1103 = vpack.c.bf16 %v1099, %v1098
        %v1108 = vunpack.c.l.b16 %v1100
        %v1109 = vunpack.c.h.b16 %v1100
        %v1110 = vunpack.c.l.b16 %v1101
        %v1111 = vunpack.c.h.b16 %v1101
        %v1112 = vunpack.c.l.b16 %v1102
        %v1113 = vunpack.c.h.b16 %v1102
        %v1114 = vunpack.c.l.b16 %v1103
        %v1115 = vunpack.c.h.b16 %v1103
        %v1116 = vpack.c.b16 %v1108, %v1108
        %v1117 = vpack.c.b16 %v1109, %v1109
        %v1118 = vpack.c.b16 %v1110, %v1110
        %v1119 = vpack.c.b16 %v1111, %v1111
        %v1120 = vpack.c.b16 %v1112, %v1112
        %v1121 = vpack.c.b16 %v1113, %v1113
        %v1122 = vpack.c.b16 %v1114, %v1114
        %v1123 = vpack.c.b16 %v1115, %v1115
        %vm1132 = vcmask 519168
        %1133 = vst.msk [vmem:[%s207] sm:$0xf] %vm1132, %v1116
        %1134 = vst.msk [vmem:[%s207 + $0x4] sm:$0xf] %vm1132, %v1117
        %1135 = vst.msk [vmem:[%s207 + $0x8] sm:$0xf] %vm1132, %v1118
        %1136 = vst.msk [vmem:[%s207 + $0xc] sm:$0xf] %vm1132, %v1119
        %1137 = vst.msk [vmem:[%s207 + $0x10] sm:$0xf] %vm1132, %v1120
        %1138 = vst.msk [vmem:[%s207 + $0x14] sm:$0xf] %vm1132, %v1121
        %1139 = vst.msk [vmem:[%s207 + $0x18] sm:$0xf] %vm1132, %v1122
        %1140 = vst.msk [vmem:[%s207 + $0x1c] sm:$0xf] %vm1132, %v1123
        %vm1141 = vcmask 523264
        %v1142 = vsel %vm1141, %v1092, 0.0
        %v1143 = vsel %vm1141, %v1093, 0.0
        %v1144 = vadd.f32 %v1142, %v1143
        %v1145 = vsel %vm1141, %v1094, 0.0
        %v1146 = vadd.f32 %v1144, %v1145
        %v1147 = vsel %vm1141, %v1095, 0.0
        %v1148 = vadd.f32 %v1146, %v1147
        %v1149 = vsel %vm1141, %v1096, 0.0
        %v1150 = vadd.f32 %v1148, %v1149
        %v1151 = vsel %vm1141, %v1097, 0.0
        %v1152 = vadd.f32 %v1150, %v1151
        %v1153 = vsel %vm1141, %v1098, 0.0
        %v1154 = vadd.f32 %v1152, %v1153
        %v1155 = vsel %vm1141, %v1099, 0.0
        %v1156 = vadd.f32 %v1154, %v1155
        %v1157 = vrot.slane %v1156, 4
        %v1158 = vadd.f32 %v1156, %v1157
        %v1159 = vrot.slane %v1158, 2
        %v1160 = vadd.f32 %v1158, %v1159
        %v1161 = vrot.slane %v1160, 1
        %v1162 = vadd.f32 %v1160, %v1161
        %v1163 = vmul.f32 %v1092, %v1092
        %v1164 = vmul.f32 %v1093, %v1093
        %v1165 = vmul.f32 %v1094, %v1094
        %v1166 = vmul.f32 %v1095, %v1095
        %v1167 = vmul.f32 %v1096, %v1096
        %v1168 = vmul.f32 %v1097, %v1097
        %v1169 = vmul.f32 %v1098, %v1098
        %v1170 = vmul.f32 %v1099, %v1099
        %v1171 = vsel %vm1141, %v1163, 0.0
        %v1172 = vsel %vm1141, %v1164, 0.0
        %v1173 = vadd.f32 %v1171, %v1172
        %v1174 = vsel %vm1141, %v1165, 0.0
        %v1175 = vadd.f32 %v1173, %v1174
        %v1176 = vsel %vm1141, %v1166, 0.0
        %v1177 = vadd.f32 %v1175, %v1176
        %v1178 = vsel %vm1141, %v1167, 0.0
        %v1179 = vadd.f32 %v1177, %v1178
        %v1180 = vsel %vm1141, %v1168, 0.0
        %v1181 = vadd.f32 %v1179, %v1180
        %v1182 = vsel %vm1141, %v1169, 0.0
        %v1183 = vadd.f32 %v1181, %v1182
        %v1184 = vsel %vm1141, %v1170, 0.0
        %v1185 = vadd.f32 %v1183, %v1184
        %v1186 = vrot.slane %v1185, 4
        %v1187 = vadd.f32 %v1185, %v1186
        %v1188 = vrot.slane %v1187, 2
        %v1189 = vadd.f32 %v1187, %v1188
        %v1190 = vrot.slane %v1189, 1
        %v1191 = vadd.f32 %v1189, %v1190
        %vm1192 = vcmask 1040384
        %v1193 = vsel %vm1192, %v1162, %v1191
        %vm1194 = vcmask 517120
        %1195 = vst.msk [vmem:[%s214] sm:$0x3] %vm1194, %v1193
        %s1196 = sand.u32 %s80, 1
        %s1197 = scalar_lea.sflag [#allocation4], %s1196
        %s1198 = sand.u32 %s80, 1
        %s1199 = smul.addr %s1198, 32
        %s1200 = scalar_lea.vmem [#allocation7], %s1199
        %s1201 = sand.u32 %s106, 1
        %s1202 = scalar_lea.sflag [#allocation9], %s1201
        %s1203 = sand.u32 %s106, 1
        %s1204 = smul.addr %s1203, 2
        %s1205 = scalar_lea.vmem [#allocation8], %s1204
        // Predicated region
        $region37: #{dcgan_discriminator_forward.8} parent=27 // pred_check
          %p1206 = pneg %p90
        $region38: #{dcgan_discriminator_forward.8} parent=27 // pred_check_branch
          %1208 = sbr.rel (%p1206) target = $region40
        $region39: #{dcgan_discriminator_forward.8} parent=27 // pred_region
          %s1209 = smul.u32 8, %s25
          %s1211 = ssub.s32 512, 512
          %1212 = vsyncadd %s1197, %s1211
          %s1213 = smul.addr %s1209, 64
          %s1214 = scalar_lea.hbm %s2, %s1213
          %s1215 = sshll.u32 %s1200, 4
          %s1216 = int_to_ptr.vmem [resolvable:$true] %s1215
          %1221 = dma.vmem_to_hbm [thread:$0]  %s1216, 512, %s1214, %s1197, 64, 64, 4
        $region40: #{dcgan_discriminator_forward.8} parent=27 // pred_fallthru
          _
        // Predicated region
        $region41: #{dcgan_discriminator_forward.8} parent=27 // pred_check
          %p1222 = pneg %p116
        $region42: #{dcgan_discriminator_forward.8} parent=27 // pred_check_branch
          %1224 = sbr.rel (%p1222) target = $region44
        $region43: #{dcgan_discriminator_forward.8} parent=27 // pred_region
          %s1226 = ssub.s32 32, 32
          %1227 = vsyncadd %s1202, %s1226
          %s1228 = smul.addr %s25, 32
          %s1229 = scalar_lea.hbm %s3, %s1228
          %s1231 = sshll.u32 %s1205, 4
          %s1232 = int_to_ptr.vmem [resolvable:$true] %s1231
          %1234 = dma.vmem_to_hbm [thread:$0]  %s1232, 32, %s1229, %s1202
        $region44: #{dcgan_discriminator_forward.8} parent=27 // pred_fallthru
          _
      $region28: #{dcgan_discriminator_forward.8} parent=5 // pred_fallthru
        _
      %p1235 = scmp.le.s32.totalorder 2, %s20
      // Predicated region
      $region45: #{dcgan_discriminator_forward.8} parent=5 // pred_check
        %p1236 = pneg %p1235
      $region46: #{dcgan_discriminator_forward.8} parent=5 // pred_check_branch
        %1238 = sbr.rel (%p1236) target = $region48
      $region47: #{dcgan_discriminator_forward.8} parent=5 // pred_region
        %s1239 = ssub.s32 %s20, 2
        // Predicated region
        $region49: #{dcgan_discriminator_forward.8} parent=47 // pred_check
          %p1240 = pneg %p96
        $region50: #{dcgan_discriminator_forward.8} parent=47 // pred_check_branch
          %1242 = sbr.rel (%p1240) target = $region52
        $region51: #{dcgan_discriminator_forward.8} parent=47 // pred_region
          %s1243 = sand.u32 %s81, 1
          %s1244 = scalar_lea.sflag [#allocation4], %s1243
          %s1245 = sand.u32 %s81, 1
          %s1246 = smul.addr %s1245, 32
          %s1247 = scalar_lea.vmem [#allocation7], %s1246
          %1248 = dma.done %s1244, 512
        $region52: #{dcgan_discriminator_forward.8} parent=47 // pred_fallthru
          _
        // Predicated region
        $region53: #{dcgan_discriminator_forward.8} parent=47 // pred_check
          %p1249 = pneg %p122
        $region54: #{dcgan_discriminator_forward.8} parent=47 // pred_check_branch
          %1251 = sbr.rel (%p1249) target = $region56
        $region55: #{dcgan_discriminator_forward.8} parent=47 // pred_region
          %s1252 = sand.u32 %s107, 1
          %s1253 = scalar_lea.sflag [#allocation9], %s1252
          %s1254 = sand.u32 %s107, 1
          %s1255 = smul.addr %s1254, 2
          %s1256 = scalar_lea.vmem [#allocation8], %s1255
          %1257 = dma.done %s1253, 32
        $region56: #{dcgan_discriminator_forward.8} parent=47 // pred_fallthru
          _
      $region48: #{dcgan_discriminator_forward.8} parent=5 // pred_fallthru
        _
    $region6: #{dcgan_discriminator_forward.8} parent=1 // loop_footer
      %s24 = sadd.s32 1, %s20
    $region7: #{dcgan_discriminator_forward.8} parent=1 // loop_footer_branch
      %19 = sbr.rel target = $region3
    $region8: #{dcgan_discriminator_forward.8} parent=1 // loop_exit
      _
    %1258 = vsyncpa [#allocation3], 1
    %s1259 = scalar_lea.sflag [#allocation3], 1
    %1260 = vsyncpa %s1259, 1
    %1261 = vsyncpa [#allocation6], 1
    %1262 = vsyncpa [#allocation4], 1
    %s1263 = scalar_lea.sflag [#allocation4], 1
    %1264 = vsyncpa %s1263, 1
    %1265 = vsyncpa [#allocation9], 1
    %s1266 = scalar_lea.sflag [#allocation9], 1
    %1267 = vsyncpa %s1266, 1

// kernel: dcgan_discriminator_forward.11
$region0: #{dcgan_discriminator_forward.11}
  #allocation0 [shape = 'u32[]', space=smem, size = 0x4, offset = 0x4, fixed_abs, tag = 'smem constant byte address 0x4 - core index']
  #allocation1 [shape = 'u32[144,128]{1,0:T(1,128)}', space=vmem, size = 0x12000, scoped, tag = 'internal scratch']
  %s0 = inlined_call_operand.hbm [shape: bf16[32,128], index: 0, kind: input, shape index: {}]
  %s1 = inlined_call_operand.hbm [shape: f32[1,2,128], index: 1, kind: input, shape index: {}]
  %s2 = inlined_call_operand.hbm [shape: f32[1,128], index: 2, kind: input, shape index: {}]
  %s3 = inlined_call_operand.hbm [shape: f32[1,128], index: 3, kind: input, shape index: {}]
  %s4 = inlined_call_operand.hbm [shape: f32[16,128], index: 4, kind: input, shape index: {}]
  %s5 = inlined_call_operand.hbm [shape: f32[2,1], index: 5, kind: output, shape index: {}]
  %s6 = sld [smem:[#allocation0]]
  $region50: #{dcgan_discriminator_forward.11} parent=0
    _
  %s8 = ssub.s32 1, %s6
  %s9 = scalar_select 0, %s8, %s6
  $region1: #{dcgan_discriminator_forward.11} parent=0
    #allocation2 [shape = 'u8[8192]{0}', space=vmem, size = 0x2000, scoped, tag = 'input window, operand 0, single buffered']
    #allocation3 [shape = 's32[1]{0}', space=sflag, size = 0x4, scoped, tag = 'scoped memory for dcgan_discriminator_forward.11']
    #allocation4 [shape = 's32[1]{0}', space=sflag, size = 0x4, scoped, tag = 'scoped memory for dcgan_discriminator_forward.11']
    #allocation5 [shape = 'u8[1024]{0}', space=vmem, size = 0x400, scoped, tag = 'input window, operand 1, single buffered']
    #allocation6 [shape = 's32[1]{0}', space=sflag, size = 0x4, scoped, tag = 'scoped memory for dcgan_discriminator_forward.11']
    #allocation7 [shape = 'u8[512]{0}', space=vmem, size = 0x400, scoped, tag = 'input window, operand 2, single buffered']
    #allocation8 [shape = 'u8[512]{0}', space=vmem, size = 0x400, scoped, tag = 'input window, operand 3, single buffered']
    #allocation9 [shape = 's32[1]{0}', space=sflag, size = 0x4, scoped, tag = 'scoped memory for dcgan_discriminator_forward.11']
    #allocation10 [shape = 'u8[8192]{0}', space=vmem, size = 0x2000, scoped, tag = 'input window, operand 4, single buffered']
    #allocation11 [shape = 'u8[1024]{0}', space=vmem, size = 0x400, scoped, tag = 'output window, operand 0, single buffered']
    %10 = vsyncpa [#allocation3], 0
    %11 = vsyncpa [#allocation6], 0
    %12 = vsyncpa [#allocation9], 0
    %13 = vsyncpa [#allocation4], 0
    // Predicated region
    $region2: #{dcgan_discriminator_forward.11} parent=1 // pred_check
      _
    $region3: #{dcgan_discriminator_forward.11} parent=1 // pred_check_branch
      %15 = sbr.rel (0) target = $region5
    $region4: #{dcgan_discriminator_forward.11} parent=1 // pred_region
      %s17 = ssub.s32 256, 256
      %18 = vsyncadd [#allocation3], %s17
      %s19 = sshll.u32 [#allocation2], 4
      %s20 = int_to_ptr.vmem [resolvable:$true] %s19
      %25 = dma.hbm_to_vmem [thread:$0]  %s0, 256, %s20, [#allocation3], 64, 64, 4
    $region5: #{dcgan_discriminator_forward.11} parent=1 // pred_fallthru
      _
    // Predicated region
    $region6: #{dcgan_discriminator_forward.11} parent=1 // pred_check
      _
    $region7: #{dcgan_discriminator_forward.11} parent=1 // pred_check_branch
      %27 = sbr.rel (0) target = $region9
    $region8: #{dcgan_discriminator_forward.11} parent=1 // pred_region
      %s29 = ssub.s32 32, 32
      %30 = vsyncadd [#allocation6], %s29
      %s32 = sshll.u32 [#allocation5], 4
      %s33 = int_to_ptr.vmem [resolvable:$true] %s32
      %35 = dma.hbm_to_vmem [thread:$0]  %s1, 32, %s33, [#allocation6]
    $region9: #{dcgan_discriminator_forward.11} parent=1 // pred_fallthru
      _
    // Predicated region
    $region10: #{dcgan_discriminator_forward.11} parent=1 // pred_check
      _
    $region11: #{dcgan_discriminator_forward.11} parent=1 // pred_check_branch
      %37 = sbr.rel (0) target = $region13
    $region12: #{dcgan_discriminator_forward.11} parent=1 // pred_region
      %s39 = ssub.s32 16, 16
      %40 = vsyncadd [#allocation6], %s39
      %s42 = sshll.u32 [#allocation7], 4
      %s43 = int_to_ptr.vmem [resolvable:$true] %s42
      %45 = dma.hbm_to_vmem [thread:$0]  %s2, 16, %s43, [#allocation6]
    $region13: #{dcgan_discriminator_forward.11} parent=1 // pred_fallthru
      _
    // Predicated region
    $region14: #{dcgan_discriminator_forward.11} parent=1 // pred_check
      _
    $region15: #{dcgan_discriminator_forward.11} parent=1 // pred_check_branch
      %47 = sbr.rel (0) target = $region17
    $region16: #{dcgan_discriminator_forward.11} parent=1 // pred_region
      %s49 = ssub.s32 16, 16
      %50 = vsyncadd [#allocation9], %s49
      %s52 = sshll.u32 [#allocation8], 4
      %s53 = int_to_ptr.vmem [resolvable:$true] %s52
      %55 = dma.hbm_to_vmem [thread:$0]  %s3, 16, %s53, [#allocation9]
    $region17: #{dcgan_discriminator_forward.11} parent=1 // pred_fallthru
      _
    // Predicated region
    $region18: #{dcgan_discriminator_forward.11} parent=1 // pred_check
      _
    $region19: #{dcgan_discriminator_forward.11} parent=1 // pred_check_branch
      %57 = sbr.rel (0) target = $region21
    $region20: #{dcgan_discriminator_forward.11} parent=1 // pred_region
      %s59 = ssub.s32 256, 256
      %60 = vsyncadd [#allocation9], %s59
      %s61 = sshll.u32 [#allocation10], 4
      %s62 = int_to_ptr.vmem [resolvable:$true] %s61
      %67 = dma.hbm_to_vmem [thread:$0]  %s4, 256, %s62, [#allocation9], 128, 128, 8
    $region21: #{dcgan_discriminator_forward.11} parent=1 // pred_fallthru
      _
    // Predicated region
    $region22: #{dcgan_discriminator_forward.11} parent=1 // pred_check
      _
    $region23: #{dcgan_discriminator_forward.11} parent=1 // pred_check_branch
      %69 = sbr.rel (0) target = $region25
    $region24: #{dcgan_discriminator_forward.11} parent=1 // pred_region
      %70 = dma.done [#allocation3], 256
    $region25: #{dcgan_discriminator_forward.11} parent=1 // pred_fallthru
      _
    // Predicated region
    $region26: #{dcgan_discriminator_forward.11} parent=1 // pred_check
      _
    $region27: #{dcgan_discriminator_forward.11} parent=1 // pred_check_branch
      %72 = sbr.rel (0) target = $region29
    $region28: #{dcgan_discriminator_forward.11} parent=1 // pred_region
      %73 = dma.done [#allocation6], 32
    $region29: #{dcgan_discriminator_forward.11} parent=1 // pred_fallthru
      _
    // Predicated region
    $region30: #{dcgan_discriminator_forward.11} parent=1 // pred_check
      _
    $region31: #{dcgan_discriminator_forward.11} parent=1 // pred_check_branch
      %75 = sbr.rel (0) target = $region33
    $region32: #{dcgan_discriminator_forward.11} parent=1 // pred_region
      %76 = dma.done [#allocation6], 16
    $region33: #{dcgan_discriminator_forward.11} parent=1 // pred_fallthru
      _
    // Predicated region
    $region34: #{dcgan_discriminator_forward.11} parent=1 // pred_check
      _
    $region35: #{dcgan_discriminator_forward.11} parent=1 // pred_check_branch
      %78 = sbr.rel (0) target = $region37
    $region36: #{dcgan_discriminator_forward.11} parent=1 // pred_region
      %79 = dma.done [#allocation9], 16
    $region37: #{dcgan_discriminator_forward.11} parent=1 // pred_fallthru
      _
    // Predicated region
    $region38: #{dcgan_discriminator_forward.11} parent=1 // pred_check
      _
    $region39: #{dcgan_discriminator_forward.11} parent=1 // pred_check_branch
      %81 = sbr.rel (0) target = $region41
    $region40: #{dcgan_discriminator_forward.11} parent=1 // pred_region
      %82 = dma.done [#allocation9], 256
    $region41: #{dcgan_discriminator_forward.11} parent=1 // pred_fallthru
      _
    %v83 = vld [vmem:[#allocation5] sm:$0x3]
    %v84 = vadd.f32 %v83, 0.0
    %v85 = vmul.f32 %v84, 0.03125
    %v86 = vmul.f32 %v85, %v85
    %v88 = vrot.slane %v86, 7
    %v90 = vsub.f32 %v85, %v88
    %v91 = vld [vmem:[#allocation7] sm:$0x1]
    %v92 = vadd.f32 %v90, 1e-05
    %v93 = vrsqrt.pop %v92
    %v96 = vunpack.c.l.s4 1966171168
    %v97 = vunpack.c.0.s8 %v96
    %v98 = vlaneseq
    %v99 = vshrl.u32 %v98, 7
    %v100 = vsub.s32 %v97, %v99
    %v101 = vrot.slane %v93, %v100
    %v102 = vcombine.high %v101, %v101
    %v104 = vunpack.c.l.s4 1966171168
    %v105 = vunpack.c.0.s8 %v104
    %v106 = vlaneseq
    %v107 = vshrl.u32 %v106, 7
    %v108 = vsub.s32 %v105, %v107
    %v109 = vrot.slane %v102, %v108
    %v111 = vmul.f32 %v91, %v109
    %v112 = vld [vmem:[#allocation8] sm:$0x1]
    %v113 = vmul.f32 %v85, %v111
    %v114 = vsub.f32 %v112, %v113
    %v115 = vld [vmem:[#allocation2] sm:$0xf]
    %v116 = vld [vmem:[#allocation2 + $0x4] sm:$0xf]
    %v117 = vld [vmem:[#allocation2 + $0x8] sm:$0xf]
    %v118 = vld [vmem:[#allocation2 + $0xc] sm:$0xf]
    %v119 = vunpack.c.l.bf16 %v115
    %v120 = vunpack.c.l.bf16 %v116
    %v121 = vunpack.c.l.bf16 %v117
    %v122 = vunpack.c.l.bf16 %v118
    %v124 = vlaneseq
    %v125 = vshrl.u32 %v124, 7
    %v126 = vsub.s32 0, %v125
    %v127 = vrot.slane %v111, %v126
    %v129 = vmul.f32 %v119, %v127
    %v130 = vmul.f32 %v120, %v127
    %v131 = vmul.f32 %v121, %v127
    %v132 = vmul.f32 %v122, %v127
    %v134 = vlaneseq
    %v135 = vshrl.u32 %v134, 7
    %v136 = vsub.s32 0, %v135
    %v137 = vrot.slane %v114, %v136
    %v139 = vadd.f32 %v129, %v137
    %v140 = vadd.f32 %v130, %v137
    %v141 = vadd.f32 %v131, %v137
    %v142 = vadd.f32 %v132, %v137
    %vm143 = vcmp.gt.f32.partialorder %v139, 0.0
    %vm144 = vcmp.gt.f32.partialorder %v140, 0.0
    %vm145 = vcmp.gt.f32.partialorder %v141, 0.0
    %vm146 = vcmp.gt.f32.partialorder %v142, 0.0
    %v147 = vmul.f32 %v139, 0.2
    %v148 = vmul.f32 %v140, 0.2
    %v149 = vmul.f32 %v141, 0.2
    %v150 = vmul.f32 %v142, 0.2
    %v151 = vsel %vm143, %v139, %v147
    %v152 = vsel %vm144, %v140, %v148
    %v153 = vsel %vm145, %v141, %v149
    %v154 = vsel %vm146, %v142, %v150
    %v155 = vld [vmem:[#allocation10] sm:$0xff]
    %v156 = vld [vmem:[#allocation10 + $0x8] sm:$0xff]
    %v157 = vmul.f32 %v151, %v155
    %v158 = vmul.f32 %v152, %v156
    %v159 = vmul.f32 %v153, %v155
    %v160 = vmul.f32 %v154, %v156
    %v161 = vadd.f32 %v157, %v158
    %v162 = vrot.slane %v161, 4
    %v163 = vadd.f32 %v161, %v162
    %v164 = vrot.slane %v163, 2
    %v165 = vadd.f32 %v163, %v164
    %v166 = vrot.slane %v165, 1
    %v167 = vadd.f32 %v165, %v166
    %v168 = vadd.f32 %v159, %v160
    %v169 = vrot.slane %v168, 4
    %v170 = vadd.f32 %v168, %v169
    %v171 = vrot.slane %v170, 2
    %v172 = vadd.f32 %v170, %v171
    %v173 = vrot.slane %v172, 1
    %v174 = vadd.f32 %v172, %v173
    %vm177 = vcmask 1041409
    %v178 = vsel %vm177, %v174, %v167
    %vm180 = vcmask 1041408
    %v181 = vsel %vm180, %v178, 0.0
    %182 = vadd.xlane.f32.xlu0 %v181
    %v183 = vpop.xlane.xlu0 %182
    %v184 = vmul.f32 %v183, 0.5
    %v185 = vtanh.pop %v184
    %v186 = vadd.f32 %v185, 1.0
    %v187 = vmul.f32 %v186, 0.5
    %vm188 = vcmask 1024
    %189 = vst.msk [vmem:[#allocation11] sm:$0x3] %vm188, %v187
    // Predicated region
    $region42: #{dcgan_discriminator_forward.11} parent=1 // pred_check
      _
    $region43: #{dcgan_discriminator_forward.11} parent=1 // pred_check_branch
      %191 = sbr.rel (0) target = $region45
    $region44: #{dcgan_discriminator_forward.11} parent=1 // pred_region
      %s193 = ssub.s32 32, 32
      %194 = vsyncadd [#allocation4], %s193
      %s196 = sshll.u32 [#allocation11], 4
      %s197 = int_to_ptr.vmem [resolvable:$true] %s196
      %199 = dma.vmem_to_hbm [thread:$0]  %s197, 32, %s5, [#allocation4]
    $region45: #{dcgan_discriminator_forward.11} parent=1 // pred_fallthru
      _
    // Predicated region
    $region46: #{dcgan_discriminator_forward.11} parent=1 // pred_check
      _
    $region47: #{dcgan_discriminator_forward.11} parent=1 // pred_check_branch
      %201 = sbr.rel (0) target = $region49
    $region48: #{dcgan_discriminator_forward.11} parent=1 // pred_region
      %202 = dma.done [#allocation4], 32
    $region49: #{dcgan_discriminator_forward.11} parent=1 // pred_fallthru
      _
    %203 = vsyncpa [#allocation3], 1
    %204 = vsyncpa [#allocation6], 1
    %205 = vsyncpa [#allocation9], 1
    %206 = vsyncpa [#allocation4], 1

// kernel: dcgan_discriminator_forward.10
$region0: #{dcgan_discriminator_forward.10}
  #allocation0 [shape = 'u32[]', space=smem, size = 0x4, offset = 0x4, fixed_abs, tag = 'smem constant byte address 0x4 - core index']
  #allocation1 [shape = 'u32[144,128]{1,0:T(1,128)}', space=vmem, size = 0x12000, scoped, tag = 'internal scratch']
  %s0 = inlined_call_operand.hbm [shape: bf16[32,1024], index: 0, kind: input, shape index: {}]
  %s1 = inlined_call_operand.hbm [shape: bf16[1024,128], index: 1, kind: input, shape index: {}]
  %s2 = inlined_call_operand.hbm [shape: bf16[32,128], index: 2, kind: output, shape index: {0}]
  %s3 = inlined_call_operand.hbm [shape: f32[1,2,128], index: 3, kind: output, shape index: {1}]
  %4 = xla_tuple %s2, %s3
  %s5 = sld [smem:[#allocation0]]
  $region34: #{dcgan_discriminator_forward.10} parent=0
    _
  %s7 = ssub.s32 1, %s5
  %s8 = scalar_select 0, %s7, %s5
  $region1: #{dcgan_discriminator_forward.10} parent=0
    #allocation2 [shape = 'u8[65536]{0}', space=vmem, size = 0x10000, scoped, tag = 'input window, operand 0, single buffered']
    #allocation3 [shape = 's32[1]{0}', space=sflag, size = 0x4, scoped, tag = 'scoped memory for dcgan_discriminator_forward.10']
    #allocation4 [shape = 's32[1]{0}', space=sflag, size = 0x4, scoped, tag = 'scoped memory for dcgan_discriminator_forward.10']
    #allocation5 [shape = 'u8[262144]{0}', space=vmem, size = 0x40000, scoped, tag = 'input window, operand 1, single buffered']
    #allocation6 [shape = 's32[1]{0}', space=sflag, size = 0x4, scoped, tag = 'scoped memory for dcgan_discriminator_forward.10']
    #allocation7 [shape = 'u8[8192]{0}', space=vmem, size = 0x2000, scoped, tag = 'output window, operand 0, single buffered']
    #allocation8 [shape = 'u8[1024]{0}', space=vmem, size = 0x400, scoped, tag = 'output window, operand 1, single buffered']
    #allocation9 [shape = 's32[1]{0}', space=sflag, size = 0x4, scoped, tag = 'scoped memory for dcgan_discriminator_forward.10']
    %9 = vsyncpa [#allocation3], 0
    %10 = vsyncpa [#allocation6], 0
    %11 = vsyncpa [#allocation4], 0
    %12 = vsyncpa [#allocation9], 0
    // Predicated region
    $region2: #{dcgan_discriminator_forward.10} parent=1 // pred_check
      _
    $region3: #{dcgan_discriminator_forward.10} parent=1 // pred_check_branch
      %14 = sbr.rel (0) target = $region5
    $region4: #{dcgan_discriminator_forward.10} parent=1 // pred_region
      %s16 = ssub.s32 2048, 2048
      %17 = vsyncadd [#allocation3], %s16
      %s18 = sshll.u32 [#allocation2], 4
      %s19 = int_to_ptr.vmem [resolvable:$true] %s18
      %24 = dma.hbm_to_vmem [thread:$0]  %s0, 2048, %s19, [#allocation3], 512, 512, 32
    $region5: #{dcgan_discriminator_forward.10} parent=1 // pred_fallthru
      _
    // Predicated region
    $region6: #{dcgan_discriminator_forward.10} parent=1 // pred_check
      _
    $region7: #{dcgan_discriminator_forward.10} parent=1 // pred_check_branch
      %26 = sbr.rel (0) target = $region9
    $region8: #{dcgan_discriminator_forward.10} parent=1 // pred_region
      %s28 = ssub.s32 8192, 8192
      %29 = vsyncadd [#allocation6], %s28
      %s30 = sshll.u32 [#allocation5], 4
      %s31 = int_to_ptr.vmem [resolvable:$true] %s30
      %36 = dma.hbm_to_vmem [thread:$0]  %s1, 8192, %s31, [#allocation6], 64, 64, 4
    $region9: #{dcgan_discriminator_forward.10} parent=1 // pred_fallthru
      _
    // Predicated region
    $region10: #{dcgan_discriminator_forward.10} parent=1 // pred_check
      _
    $region11: #{dcgan_discriminator_forward.10} parent=1 // pred_check_branch
      %38 = sbr.rel (0) target = $region13
    $region12: #{dcgan_discriminator_forward.10} parent=1 // pred_region
      %39 = dma.done [#allocation3], 2048
    $region13: #{dcgan_discriminator_forward.10} parent=1 // pred_fallthru
      _
    // Predicated region
    $region14: #{dcgan_discriminator_forward.10} parent=1 // pred_check
      _
    $region15: #{dcgan_discriminator_forward.10} parent=1 // pred_check_branch
      %41 = sbr.rel (0) target = $region17
    $region16: #{dcgan_discriminator_forward.10} parent=1 // pred_region
      %42 = dma.done [#allocation6], 8192
    $region17: #{dcgan_discriminator_forward.10} parent=1 // pred_fallthru
      _
    %v44 = vld [vmem:[#allocation2] sm:$0xff]
    %v45 = vld [vmem:[#allocation2 + $0x8] sm:$0xff]
    %v46 = vld [vmem:[#allocation2 + $0x10] sm:$0xff]
    %v47 = vld [vmem:[#allocation2 + $0x18] sm:$0xff]
    %v48 = vld [vmem:[#allocation2 + $0x20] sm:$0xff]
    %v49 = vld [vmem:[#allocation2 + $0x28] sm:$0xff]
    %v50 = vld [vmem:[#allocation2 + $0x30] sm:$0xff]
    %v51 = vld [vmem:[#allocation2 + $0x38] sm:$0xff]
    %v52 = vld [vmem:[#allocation2 + $0x40] sm:$0xff]
    %v53 = vld [vmem:[#allocation2 + $0x48] sm:$0xff]
    %v54 = vld [vmem:[#allocation2 + $0x50] sm:$0xff]
    %v55 = vld [vmem:[#allocation2 + $0x58] sm:$0xff]
    %v56 = vld [vmem:[#allocation2 + $0x60] sm:$0xff]
    %v57 = vld [vmem:[#allocation2 + $0x68] sm:$0xff]
    %v58 = vld [vmem:[#allocation2 + $0x70] sm:$0xff]
    %v59 = vld [vmem:[#allocation2 + $0x78] sm:$0xff]
    %v60 = vld [vmem:[#allocation5] sm:$0xf]
    %v61 = vld [vmem:[#allocation5 + $0x4] sm:$0xf]
    %v62 = vld [vmem:[#allocation5 + $0x8] sm:$0xf]
    %v63 = vld [vmem:[#allocation5 + $0xc] sm:$0xf]
    %v64 = vld [vmem:[#allocation5 + $0x10] sm:$0xf]
    %v65 = vld [vmem:[#allocation5 + $0x14] sm:$0xf]
    %v66 = vld [vmem:[#allocation5 + $0x18] sm:$0xf]
    %v67 = vld [vmem:[#allocation5 + $0x1c] sm:$0xf]
    %v68 = vld [vmem:[#allocation5 + $0x20] sm:$0xf]
    %v69 = vld [vmem:[#allocation5 + $0x24] sm:$0xf]
    %v70 = vld [vmem:[#allocation5 + $0x28] sm:$0xf]
    %v71 = vld [vmem:[#allocation5 + $0x2c] sm:$0xf]
    %v72 = vld [vmem:[#allocation5 + $0x30] sm:$0xf]
    %v73 = vld [vmem:[#allocation5 + $0x34] sm:$0xf]
    %v74 = vld [vmem:[#allocation5 + $0x38] sm:$0xf]
    %v75 = vld [vmem:[#allocation5 + $0x3c] sm:$0xf]
    %v76 = vld [vmem:[#allocation5 + $0x40] sm:$0xf]
    %v77 = vld [vmem:[#allocation5 + $0x44] sm:$0xf]
    %v78 = vld [vmem:[#allocation5 + $0x48] sm:$0xf]
    %v79 = vld [vmem:[#allocation5 + $0x4c] sm:$0xf]
    %v80 = vld [vmem:[#allocation5 + $0x50] sm:$0xf]
    %v81 = vld [vmem:[#allocation5 + $0x54] sm:$0xf]
    %v82 = vld [vmem:[#allocation5 + $0x58] sm:$0xf]
    %v83 = vld [vmem:[#allocation5 + $0x5c] sm:$0xf]
    %v84 = vld [vmem:[#allocation5 + $0x60] sm:$0xf]
    %v85 = vld [vmem:[#allocation5 + $0x64] sm:$0xf]
    %v86 = vld [vmem:[#allocation5 + $0x68] sm:$0xf]
    %v87 = vld [vmem:[#allocation5 + $0x6c] sm:$0xf]
    %v88 = vld [vmem:[#allocation5 + $0x70] sm:$0xf]
    %v89 = vld [vmem:[#allocation5 + $0x74] sm:$0xf]
    %v90 = vld [vmem:[#allocation5 + $0x78] sm:$0xf]
    %v91 = vld [vmem:[#allocation5 + $0x7c] sm:$0xf]
    %v92 = vld [vmem:[#allocation5 + $0x80] sm:$0xf]
    %v93 = vld [vmem:[#allocation5 + $0x84] sm:$0xf]
    %v94 = vld [vmem:[#allocation5 + $0x88] sm:$0xf]
    %v95 = vld [vmem:[#allocation5 + $0x8c] sm:$0xf]
    %v96 = vld [vmem:[#allocation5 + $0x90] sm:$0xf]
    %v97 = vld [vmem:[#allocation5 + $0x94] sm:$0xf]
    %v98 = vld [vmem:[#allocation5 + $0x98] sm:$0xf]
    %v99 = vld [vmem:[#allocation5 + $0x9c] sm:$0xf]
    %v100 = vld [vmem:[#allocation5 + $0xa0] sm:$0xf]
    %v101 = vld [vmem:[#allocation5 + $0xa4] sm:$0xf]
    %v102 = vld [vmem:[#allocation5 + $0xa8] sm:$0xf]
    %v103 = vld [vmem:[#allocation5 + $0xac] sm:$0xf]
    %v104 = vld [vmem:[#allocation5 + $0xb0] sm:$0xf]
    %v105 = vld [vmem:[#allocation5 + $0xb4] sm:$0xf]
    %v106 = vld [vmem:[#allocation5 + $0xb8] sm:$0xf]
    %v107 = vld [vmem:[#allocation5 + $0xbc] sm:$0xf]
    %v108 = vld [vmem:[#allocation5 + $0xc0] sm:$0xf]
    %v109 = vld [vmem:[#allocation5 + $0xc4] sm:$0xf]
    %v110 = vld [vmem:[#allocation5 + $0xc8] sm:$0xf]
    %v111 = vld [vmem:[#allocation5 + $0xcc] sm:$0xf]
    %v112 = vld [vmem:[#allocation5 + $0xd0] sm:$0xf]
    %v113 = vld [vmem:[#allocation5 + $0xd4] sm:$0xf]
    %v114 = vld [vmem:[#allocation5 + $0xd8] sm:$0xf]
    %v115 = vld [vmem:[#allocation5 + $0xdc] sm:$0xf]
    %v116 = vld [vmem:[#allocation5 + $0xe0] sm:$0xf]
    %v117 = vld [vmem:[#allocation5 + $0xe4] sm:$0xf]
    %v118 = vld [vmem:[#allocation5 + $0xe8] sm:$0xf]
    %v119 = vld [vmem:[#allocation5 + $0xec] sm:$0xf]
    %v120 = vld [vmem:[#allocation5 + $0xf0] sm:$0xf]
    %v121 = vld [vmem:[#allocation5 + $0xf4] sm:$0xf]
    %v122 = vld [vmem:[#allocation5 + $0xf8] sm:$0xf]
    %v123 = vld [vmem:[#allocation5 + $0xfc] sm:$0xf]
    %v124 = vld [vmem:[#allocation5 + $0x100] sm:$0xf]
    %v125 = vld [vmem:[#allocation5 + $0x104] sm:$0xf]
    %v126 = vld [vmem:[#allocation5 + $0x108] sm:$0xf]
    %v127 = vld [vmem:[#allocation5 + $0x10c] sm:$0xf]
    %v128 = vld [vmem:[#allocation5 + $0x110] sm:$0xf]
    %v129 = vld [vmem:[#allocation5 + $0x114] sm:$0xf]
    %v130 = vld [vmem:[#allocation5 + $0x118] sm:$0xf]
    %v131 = vld [vmem:[#allocation5 + $0x11c] sm:$0xf]
    %v132 = vld [vmem:[#allocation5 + $0x120] sm:$0xf]
    %v133 = vld [vmem:[#allocation5 + $0x124] sm:$0xf]
    %v134 = vld [vmem:[#allocation5 + $0x128] sm:$0xf]
    %v135 = vld [vmem:[#allocation5 + $0x12c] sm:$0xf]
    %v136 = vld [vmem:[#allocation5 + $0x130] sm:$0xf]
    %v137 = vld [vmem:[#allocation5 + $0x134] sm:$0xf]
    %v138 = vld [vmem:[#allocation5 + $0x138] sm:$0xf]
    %v139 = vld [vmem:[#allocation5 + $0x13c] sm:$0xf]
    %v140 = vld [vmem:[#allocation5 + $0x140] sm:$0xf]
    %v141 = vld [vmem:[#allocation5 + $0x144] sm:$0xf]
    %v142 = vld [vmem:[#allocation5 + $0x148] sm:$0xf]
    %v143 = vld [vmem:[#allocation5 + $0x14c] sm:$0xf]
    %v144 = vld [vmem:[#allocation5 + $0x150] sm:$0xf]
    %v145 = vld [vmem:[#allocation5 + $0x154] sm:$0xf]
    %v146 = vld [vmem:[#allocation5 + $0x158] sm:$0xf]
    %v147 = vld [vmem:[#allocation5 + $0x15c] sm:$0xf]
    %v148 = vld [vmem:[#allocation5 + $0x160] sm:$0xf]
    %v149 = vld [vmem:[#allocation5 + $0x164] sm:$0xf]
    %v150 = vld [vmem:[#allocation5 + $0x168] sm:$0xf]
    %v151 = vld [vmem:[#allocation5 + $0x16c] sm:$0xf]
    %v152 = vld [vmem:[#allocation5 + $0x170] sm:$0xf]
    %v153 = vld [vmem:[#allocation5 + $0x174] sm:$0xf]
    %v154 = vld [vmem:[#allocation5 + $0x178] sm:$0xf]
    %v155 = vld [vmem:[#allocation5 + $0x17c] sm:$0xf]
    %v156 = vld [vmem:[#allocation5 + $0x180] sm:$0xf]
    %v157 = vld [vmem:[#allocation5 + $0x184] sm:$0xf]
    %v158 = vld [vmem:[#allocation5 + $0x188] sm:$0xf]
    %v159 = vld [vmem:[#allocation5 + $0x18c] sm:$0xf]
    %v160 = vld [vmem:[#allocation5 + $0x190] sm:$0xf]
    %v161 = vld [vmem:[#allocation5 + $0x194] sm:$0xf]
    %v162 = vld [vmem:[#allocation5 + $0x198] sm:$0xf]
    %v163 = vld [vmem:[#allocation5 + $0x19c] sm:$0xf]
    %v164 = vld [vmem:[#allocation5 + $0x1a0] sm:$0xf]
    %v165 = vld [vmem:[#allocation5 + $0x1a4] sm:$0xf]
    %v166 = vld [vmem:[#allocation5 + $0x1a8] sm:$0xf]
    %v167 = vld [vmem:[#allocation5 + $0x1ac] sm:$0xf]
    %v168 = vld [vmem:[#allocation5 + $0x1b0] sm:$0xf]
    %v169 = vld [vmem:[#allocation5 + $0x1b4] sm:$0xf]
    %v170 = vld [vmem:[#allocation5 + $0x1b8] sm:$0xf]
    %v171 = vld [vmem:[#allocation5 + $0x1bc] sm:$0xf]
    %v172 = vld [vmem:[#allocation5 + $0x1c0] sm:$0xf]
    %v173 = vld [vmem:[#allocation5 + $0x1c4] sm:$0xf]
    %v174 = vld [vmem:[#allocation5 + $0x1c8] sm:$0xf]
    %v175 = vld [vmem:[#allocation5 + $0x1cc] sm:$0xf]
    %v176 = vld [vmem:[#allocation5 + $0x1d0] sm:$0xf]
    %v177 = vld [vmem:[#allocation5 + $0x1d4] sm:$0xf]
    %v178 = vld [vmem:[#allocation5 + $0x1d8] sm:$0xf]
    %v179 = vld [vmem:[#allocation5 + $0x1dc] sm:$0xf]
    %v180 = vld [vmem:[#allocation5 + $0x1e0] sm:$0xf]
    %v181 = vld [vmem:[#allocation5 + $0x1e4] sm:$0xf]
    %v182 = vld [vmem:[#allocation5 + $0x1e8] sm:$0xf]
    %v183 = vld [vmem:[#allocation5 + $0x1ec] sm:$0xf]
    %v184 = vld [vmem:[#allocation5 + $0x1f0] sm:$0xf]
    %v185 = vld [vmem:[#allocation5 + $0x1f4] sm:$0xf]
    %v186 = vld [vmem:[#allocation5 + $0x1f8] sm:$0xf]
    %v187 = vld [vmem:[#allocation5 + $0x1fc] sm:$0xf]
    %v204 = vunpack.c.l.b16 %v44
    %v205 = vunpack.c.h.b16 %v44
    %v206 = vunpack.c.l.b16 %v45
    %v207 = vunpack.c.h.b16 %v45
    %v208 = vunpack.c.l.b16 %v46
    %v209 = vunpack.c.h.b16 %v46
    %v210 = vunpack.c.l.b16 %v47
    %v211 = vunpack.c.h.b16 %v47
    %v212 = vunpack.c.l.b16 %v48
    %v213 = vunpack.c.h.b16 %v48
    %v214 = vunpack.c.l.b16 %v49
    %v215 = vunpack.c.h.b16 %v49
    %v216 = vunpack.c.l.b16 %v50
    %v217 = vunpack.c.h.b16 %v50
    %v218 = vunpack.c.l.b16 %v51
    %v219 = vunpack.c.h.b16 %v51
    %v220 = vunpack.c.l.b16 %v52
    %v221 = vunpack.c.h.b16 %v52
    %v222 = vunpack.c.l.b16 %v53
    %v223 = vunpack.c.h.b16 %v53
    %v224 = vunpack.c.l.b16 %v54
    %v225 = vunpack.c.h.b16 %v54
    %v226 = vunpack.c.l.b16 %v55
    %v227 = vunpack.c.h.b16 %v55
    %v228 = vunpack.c.l.b16 %v56
    %v229 = vunpack.c.h.b16 %v56
    %v230 = vunpack.c.l.b16 %v57
    %v231 = vunpack.c.h.b16 %v57
    %v232 = vunpack.c.l.b16 %v58
    %v233 = vunpack.c.h.b16 %v58
    %v234 = vunpack.c.l.b16 %v59
    %v235 = vunpack.c.h.b16 %v59
    %v236 = vpack.c.b16 %v212, %v204
    %v237 = vpack.c.b16 %v213, %v205
    %v238 = vpack.c.b16 %v214, %v206
    %v239 = vpack.c.b16 %v215, %v207
    %v240 = vpack.c.b16 %v216, %v208
    %v241 = vpack.c.b16 %v217, %v209
    %v242 = vpack.c.b16 %v218, %v210
    %v243 = vpack.c.b16 %v219, %v211
    %v244 = vpack.c.b16 %v228, %v220
    %v245 = vpack.c.b16 %v229, %v221
    %v246 = vpack.c.b16 %v230, %v222
    %v247 = vpack.c.b16 %v231, %v223
    %v248 = vpack.c.b16 %v232, %v224
    %v249 = vpack.c.b16 %v233, %v225
    %v250 = vpack.c.b16 %v234, %v226
    %v251 = vpack.c.b16 %v235, %v227
    %v396 = vunpack.c.l.b16 %v60
    %v397 = vunpack.c.l.b16 %v61
    %v398 = vunpack.c.l.b16 %v62
    %v399 = vunpack.c.l.b16 %v63
    %v400 = vunpack.c.l.b16 %v64
    %v401 = vunpack.c.l.b16 %v65
    %v402 = vunpack.c.l.b16 %v66
    %v403 = vunpack.c.l.b16 %v67
    %v404 = vunpack.c.l.b16 %v68
    %v405 = vunpack.c.l.b16 %v69
    %v406 = vunpack.c.l.b16 %v70
    %v407 = vunpack.c.l.b16 %v71
    %v408 = vunpack.c.l.b16 %v72
    %v409 = vunpack.c.l.b16 %v73
    %v410 = vunpack.c.l.b16 %v74
    %v411 = vunpack.c.l.b16 %v75
    %v412 = vunpack.c.l.b16 %v76
    %v413 = vunpack.c.l.b16 %v77
    %v414 = vunpack.c.l.b16 %v78
    %v415 = vunpack.c.l.b16 %v79
    %v416 = vunpack.c.l.b16 %v80
    %v417 = vunpack.c.l.b16 %v81
    %v418 = vunpack.c.l.b16 %v82
    %v419 = vunpack.c.l.b16 %v83
    %v420 = vunpack.c.l.b16 %v84
    %v421 = vunpack.c.l.b16 %v85
    %v422 = vunpack.c.l.b16 %v86
    %v423 = vunpack.c.l.b16 %v87
    %v424 = vunpack.c.l.b16 %v88
    %v425 = vunpack.c.l.b16 %v89
    %v426 = vunpack.c.l.b16 %v90
    %v427 = vunpack.c.l.b16 %v91
    %v428 = vunpack.c.l.b16 %v92
    %v429 = vunpack.c.l.b16 %v93
    %v430 = vunpack.c.l.b16 %v94
    %v431 = vunpack.c.l.b16 %v95
    %v432 = vunpack.c.l.b16 %v96
    %v433 = vunpack.c.l.b16 %v97
    %v434 = vunpack.c.l.b16 %v98
    %v435 = vunpack.c.l.b16 %v99
    %v436 = vunpack.c.l.b16 %v100
    %v437 = vunpack.c.l.b16 %v101
    %v438 = vunpack.c.l.b16 %v102
    %v439 = vunpack.c.l.b16 %v103
    %v440 = vunpack.c.l.b16 %v104
    %v441 = vunpack.c.l.b16 %v105
    %v442 = vunpack.c.l.b16 %v106
    %v443 = vunpack.c.l.b16 %v107
    %v444 = vunpack.c.l.b16 %v108
    %v445 = vunpack.c.l.b16 %v109
    %v446 = vunpack.c.l.b16 %v110
    %v447 = vunpack.c.l.b16 %v111
    %v448 = vunpack.c.l.b16 %v112
    %v449 = vunpack.c.l.b16 %v113
    %v450 = vunpack.c.l.b16 %v114
    %v451 = vunpack.c.l.b16 %v115
    %v452 = vunpack.c.l.b16 %v116
    %v453 = vunpack.c.l.b16 %v117
    %v454 = vunpack.c.l.b16 %v118
    %v455 = vunpack.c.l.b16 %v119
    %v456 = vunpack.c.l.b16 %v120
    %v457 = vunpack.c.l.b16 %v121
    %v458 = vunpack.c.l.b16 %v122
    %v459 = vunpack.c.l.b16 %v123
    %v460 = vunpack.c.l.b16 %v124
    %v461 = vunpack.c.l.b16 %v125
    %v462 = vunpack.c.l.b16 %v126
    %v463 = vunpack.c.l.b16 %v127
    %v464 = vunpack.c.l.b16 %v128
    %v465 = vunpack.c.l.b16 %v129
    %v466 = vunpack.c.l.b16 %v130
    %v467 = vunpack.c.l.b16 %v131
    %v468 = vunpack.c.l.b16 %v132
    %v469 = vunpack.c.l.b16 %v133
    %v470 = vunpack.c.l.b16 %v134
    %v471 = vunpack.c.l.b16 %v135
    %v472 = vunpack.c.l.b16 %v136
    %v473 = vunpack.c.l.b16 %v137
    %v474 = vunpack.c.l.b16 %v138
    %v475 = vunpack.c.l.b16 %v139
    %v476 = vunpack.c.l.b16 %v140
    %v477 = vunpack.c.l.b16 %v141
    %v478 = vunpack.c.l.b16 %v142
    %v479 = vunpack.c.l.b16 %v143
    %v480 = vunpack.c.l.b16 %v144
    %v481 = vunpack.c.l.b16 %v145
    %v482 = vunpack.c.l.b16 %v146
    %v483 = vunpack.c.l.b16 %v147
    %v484 = vunpack.c.l.b16 %v148
    %v485 = vunpack.c.l.b16 %v149
    %v486 = vunpack.c.l.b16 %v150
    %v487 = vunpack.c.l.b16 %v151
    %v488 = vunpack.c.l.b16 %v152
    %v489 = vunpack.c.l.b16 %v153
    %v490 = vunpack.c.l.b16 %v154
    %v491 = vunpack.c.l.b16 %v155
    %v492 = vunpack.c.l.b16 %v156
    %v493 = vunpack.c.l.b16 %v157
    %v494 = vunpack.c.l.b16 %v158
    %v495 = vunpack.c.l.b16 %v159
    %v496 = vunpack.c.l.b16 %v160
    %v497 = vunpack.c.l.b16 %v161
    %v498 = vunpack.c.l.b16 %v162
    %v499 = vunpack.c.l.b16 %v163
    %v500 = vunpack.c.l.b16 %v164
    %v501 = vunpack.c.l.b16 %v165
    %v502 = vunpack.c.l.b16 %v166
    %v503 = vunpack.c.l.b16 %v167
    %v504 = vunpack.c.l.b16 %v168
    %v505 = vunpack.c.l.b16 %v169
    %v506 = vunpack.c.l.b16 %v170
    %v507 = vunpack.c.l.b16 %v171
    %v508 = vunpack.c.l.b16 %v172
    %v509 = vunpack.c.l.b16 %v173
    %v510 = vunpack.c.l.b16 %v174
    %v511 = vunpack.c.l.b16 %v175
    %v512 = vunpack.c.l.b16 %v176
    %v513 = vunpack.c.l.b16 %v177
    %v514 = vunpack.c.l.b16 %v178
    %v515 = vunpack.c.l.b16 %v179
    %v516 = vunpack.c.l.b16 %v180
    %v517 = vunpack.c.l.b16 %v181
    %v518 = vunpack.c.l.b16 %v182
    %v519 = vunpack.c.l.b16 %v183
    %v520 = vunpack.c.l.b16 %v184
    %v521 = vunpack.c.l.b16 %v185
    %v522 = vunpack.c.l.b16 %v186
    %v523 = vunpack.c.l.b16 %v187
    %v524 = vpack.c.b16 %v397, %v396
    %v525 = vpack.c.b16 %v399, %v398
    %v526 = vpack.c.b16 %v401, %v400
    %v527 = vpack.c.b16 %v403, %v402
    %v528 = vpack.c.b16 %v405, %v404
    %v529 = vpack.c.b16 %v407, %v406
    %v530 = vpack.c.b16 %v409, %v408
    %v531 = vpack.c.b16 %v411, %v410
    %v532 = vpack.c.b16 %v413, %v412
    %v533 = vpack.c.b16 %v415, %v414
    %v534 = vpack.c.b16 %v417, %v416
    %v535 = vpack.c.b16 %v419, %v418
    %v536 = vpack.c.b16 %v421, %v420
    %v537 = vpack.c.b16 %v423, %v422
    %v538 = vpack.c.b16 %v425, %v424
    %v539 = vpack.c.b16 %v427, %v426
    %v540 = vpack.c.b16 %v429, %v428
    %v541 = vpack.c.b16 %v431, %v430
    %v542 = vpack.c.b16 %v433, %v432
    %v543 = vpack.c.b16 %v435, %v434
    %v544 = vpack.c.b16 %v437, %v436
    %v545 = vpack.c.b16 %v439, %v438
    %v546 = vpack.c.b16 %v441, %v440
    %v547 = vpack.c.b16 %v443, %v442
    %v548 = vpack.c.b16 %v445, %v444
    %v549 = vpack.c.b16 %v447, %v446
    %v550 = vpack.c.b16 %v449, %v448
    %v551 = vpack.c.b16 %v451, %v450
    %v552 = vpack.c.b16 %v453, %v452
    %v553 = vpack.c.b16 %v455, %v454
    %v554 = vpack.c.b16 %v457, %v456
    %v555 = vpack.c.b16 %v459, %v458
    %v556 = vpack.c.b16 %v461, %v460
    %v557 = vpack.c.b16 %v463, %v462
    %v558 = vpack.c.b16 %v465, %v464
    %v559 = vpack.c.b16 %v467, %v466
    %v560 = vpack.c.b16 %v469, %v468
    %v561 = vpack.c.b16 %v471, %v470
    %v562 = vpack.c.b16 %v473, %v472
    %v563 = vpack.c.b16 %v475, %v474
    %v564 = vpack.c.b16 %v477, %v476
    %v565 = vpack.c.b16 %v479, %v478
    %v566 = vpack.c.b16 %v481, %v480
    %v567 = vpack.c.b16 %v483, %v482
    %v568 = vpack.c.b16 %v485, %v484
    %v569 = vpack.c.b16 %v487, %v486
    %v570 = vpack.c.b16 %v489, %v488
    %v571 = vpack.c.b16 %v491, %v490
    %v572 = vpack.c.b16 %v493, %v492
    %v573 = vpack.c.b16 %v495, %v494
    %v574 = vpack.c.b16 %v497, %v496
    %v575 = vpack.c.b16 %v499, %v498
    %v576 = vpack.c.b16 %v501, %v500
    %v577 = vpack.c.b16 %v503, %v502
    %v578 = vpack.c.b16 %v505, %v504
    %v579 = vpack.c.b16 %v507, %v506
    %v580 = vpack.c.b16 %v509, %v508
    %v581 = vpack.c.b16 %v511, %v510
    %v582 = vpack.c.b16 %v513, %v512
    %v583 = vpack.c.b16 %v515, %v514
    %v584 = vpack.c.b16 %v517, %v516
    %v585 = vpack.c.b16 %v519, %v518
    %v586 = vpack.c.b16 %v521, %v520
    %v587 = vpack.c.b16 %v523, %v522
    %652 = vmatprep.subr.bf16.mxu0 0
    %653 = vmatpush1.bf16.msra.mxu0 %v524
    %654 = vmatprep.subr.bf16.mxu0 0
    %655 = vmatpush1.bf16.msra.mxu0 %v525
    %656 = vmatprep.subr.bf16.mxu0 0
    %657 = vmatpush1.bf16.msra.mxu0 %v526
    %658 = vmatprep.subr.bf16.mxu0 0
    %659 = vmatpush1.bf16.msra.mxu0 %v527
    %660 = vmatprep.subr.bf16.mxu0 0
    %661 = vmatpush1.bf16.msra.mxu0 %v528
    %662 = vmatprep.subr.bf16.mxu0 0
    %663 = vmatpush1.bf16.msra.mxu0 %v529
    %664 = vmatprep.subr.bf16.mxu0 0
    %665 = vmatpush1.bf16.msra.mxu0 %v530
    %666 = vmatprep.subr.bf16.mxu0 0
    %667 = vmatpush1.bf16.msra.mxu0 %v531
    %668 = vmatprep.subr.bf16.mxu0 0
    %669 = vmatpush1.bf16.msra.mxu0 %v532
    %670 = vmatprep.subr.bf16.mxu0 0
    %671 = vmatpush1.bf16.msra.mxu0 %v533
    %672 = vmatprep.subr.bf16.mxu0 0
    %673 = vmatpush1.bf16.msra.mxu0 %v534
    %674 = vmatprep.subr.bf16.mxu0 0
    %675 = vmatpush1.bf16.msra.mxu0 %v535
    %676 = vmatprep.subr.bf16.mxu0 0
    %677 = vmatpush1.bf16.msra.mxu0 %v536
    %678 = vmatprep.subr.bf16.mxu0 0
    %679 = vmatpush1.bf16.msra.mxu0 %v537
    %680 = vmatprep.subr.bf16.mxu0 0
    %681 = vmatpush1.bf16.msra.mxu0 %v538
    %682 = vmatprep.subr.bf16.mxu0 0
    %683 = vmatpush1.bf16.msra.mxu0 %v539
    %684 = vmatprep.mubr.bf16.mxu0 %v237
    %685 = vmatmul.mubr.bf16.gmra.mrb[0].mxu0 %v236
    %v686 = vpop.f32.mrb[0].mxu0
    %v687 = vadd.f32 0.0, %v686
    %v688 = vpop.f32.mrb[0].mxu0
    %v689 = vpop.f32.mrb[0].mxu0
    %v690 = vadd.f32 0.0, %v689
    %v691 = vpop.f32.mrb[0].mxu0
    %692 = vmatprep.mubr.bf16.mxu0 %v245
    %693 = vmatmul.mubr.bf16.gmra.mrb[0].mxu0 %v244
    %v694 = vpop.f32.mrb[0].mxu0
    %v695 = vadd.f32 0.0, %v694
    %v696 = vpop.f32.mrb[0].mxu0
    %v697 = vpop.f32.mrb[0].mxu0
    %v698 = vadd.f32 0.0, %v697
    %v699 = vpop.f32.mrb[0].mxu0
    %700 = vdwg.mxu0
    %701 = vmatprep.subr.bf16.mxu0 0
    %702 = vmatpush1.bf16.msra.mxu0 %v540
    %703 = vmatprep.subr.bf16.mxu0 0
    %704 = vmatpush1.bf16.msra.mxu0 %v541
    %705 = vmatprep.subr.bf16.mxu0 0
    %706 = vmatpush1.bf16.msra.mxu0 %v542
    %707 = vmatprep.subr.bf16.mxu0 0
    %708 = vmatpush1.bf16.msra.mxu0 %v543
    %709 = vmatprep.subr.bf16.mxu0 0
    %710 = vmatpush1.bf16.msra.mxu0 %v544
    %711 = vmatprep.subr.bf16.mxu0 0
    %712 = vmatpush1.bf16.msra.mxu0 %v545
    %713 = vmatprep.subr.bf16.mxu0 0
    %714 = vmatpush1.bf16.msra.mxu0 %v546
    %715 = vmatprep.subr.bf16.mxu0 0
    %716 = vmatpush1.bf16.msra.mxu0 %v547
    %717 = vmatprep.subr.bf16.mxu0 0
    %718 = vmatpush1.bf16.msra.mxu0 %v548
    %719 = vmatprep.subr.bf16.mxu0 0
    %720 = vmatpush1.bf16.msra.mxu0 %v549
    %721 = vmatprep.subr.bf16.mxu0 0
    %722 = vmatpush1.bf16.msra.mxu0 %v550
    %723 = vmatprep.subr.bf16.mxu0 0
    %724 = vmatpush1.bf16.msra.mxu0 %v551
    %725 = vmatprep.subr.bf16.mxu0 0
    %726 = vmatpush1.bf16.msra.mxu0 %v552
    %727 = vmatprep.subr.bf16.mxu0 0
    %728 = vmatpush1.bf16.msra.mxu0 %v553
    %729 = vmatprep.subr.bf16.mxu0 0
    %730 = vmatpush1.bf16.msra.mxu0 %v554
    %731 = vmatprep.subr.bf16.mxu0 0
    %732 = vmatpush1.bf16.msra.mxu0 %v555
    %733 = vmatprep.mubr.bf16.mxu0 %v239
    %734 = vmatmul.mubr.bf16.gmra.mrb[0].mxu0 %v238
    %v735 = vpop.f32.mrb[0].mxu0
    %v736 = vadd.f32 %v687, %v735
    %v737 = vpop.f32.mrb[0].mxu0
    %v738 = vpop.f32.mrb[0].mxu0
    %v739 = vadd.f32 %v690, %v738
    %v740 = vpop.f32.mrb[0].mxu0
    %741 = vmatprep.mubr.bf16.mxu0 %v247
    %742 = vmatmul.mubr.bf16.gmra.mrb[0].mxu0 %v246
    %v743 = vpop.f32.mrb[0].mxu0
    %v744 = vadd.f32 %v695, %v743
    %v745 = vpop.f32.mrb[0].mxu0
    %v746 = vpop.f32.mrb[0].mxu0
    %v747 = vadd.f32 %v698, %v746
    %v748 = vpop.f32.mrb[0].mxu0
    %749 = vdwg.mxu0
    %750 = vmatprep.subr.bf16.mxu0 0
    %751 = vmatpush1.bf16.msra.mxu0 %v556
    %752 = vmatprep.subr.bf16.mxu0 0
    %753 = vmatpush1.bf16.msra.mxu0 %v557
    %754 = vmatprep.subr.bf16.mxu0 0
    %755 = vmatpush1.bf16.msra.mxu0 %v558
    %756 = vmatprep.subr.bf16.mxu0 0
    %757 = vmatpush1.bf16.msra.mxu0 %v559
    %758 = vmatprep.subr.bf16.mxu0 0
    %759 = vmatpush1.bf16.msra.mxu0 %v560
    %760 = vmatprep.subr.bf16.mxu0 0
    %761 = vmatpush1.bf16.msra.mxu0 %v561
    %762 = vmatprep.subr.bf16.mxu0 0
    %763 = vmatpush1.bf16.msra.mxu0 %v562
    %764 = vmatprep.subr.bf16.mxu0 0
    %765 = vmatpush1.bf16.msra.mxu0 %v563
    %766 = vmatprep.subr.bf16.mxu0 0
    %767 = vmatpush1.bf16.msra.mxu0 %v564
    %768 = vmatprep.subr.bf16.mxu0 0
    %769 = vmatpush1.bf16.msra.mxu0 %v565
    %770 = vmatprep.subr.bf16.mxu0 0
    %771 = vmatpush1.bf16.msra.mxu0 %v566
    %772 = vmatprep.subr.bf16.mxu0 0
    %773 = vmatpush1.bf16.msra.mxu0 %v567
    %774 = vmatprep.subr.bf16.mxu0 0
    %775 = vmatpush1.bf16.msra.mxu0 %v568
    %776 = vmatprep.subr.bf16.mxu0 0
    %777 = vmatpush1.bf16.msra.mxu0 %v569
    %778 = vmatprep.subr.bf16.mxu0 0
    %779 = vmatpush1.bf16.msra.mxu0 %v570
    %780 = vmatprep.subr.bf16.mxu0 0
    %781 = vmatpush1.bf16.msra.mxu0 %v571
    %782 = vmatprep.mubr.bf16.mxu0 %v241
    %783 = vmatmul.mubr.bf16.gmra.mrb[0].mxu0 %v240
    %v784 = vpop.f32.mrb[0].mxu0
    %v785 = vadd.f32 %v736, %v784
    %v786 = vpop.f32.mrb[0].mxu0
    %v787 = vpop.f32.mrb[0].mxu0
    %v788 = vadd.f32 %v739, %v787
    %v789 = vpop.f32.mrb[0].mxu0
    %790 = vmatprep.mubr.bf16.mxu0 %v249
    %791 = vmatmul.mubr.bf16.gmra.mrb[0].mxu0 %v248
    %v792 = vpop.f32.mrb[0].mxu0
    %v793 = vadd.f32 %v744, %v792
    %v794 = vpop.f32.mrb[0].mxu0
    %v795 = vpop.f32.mrb[0].mxu0
    %v796 = vadd.f32 %v747, %v795
    %v797 = vpop.f32.mrb[0].mxu0
    %798 = vdwg.mxu0
    %799 = vmatprep.subr.bf16.mxu0 0
    %800 = vmatpush1.bf16.msra.mxu0 %v572
    %801 = vmatprep.subr.bf16.mxu0 0
    %802 = vmatpush1.bf16.msra.mxu0 %v573
    %803 = vmatprep.subr.bf16.mxu0 0
    %804 = vmatpush1.bf16.msra.mxu0 %v574
    %805 = vmatprep.subr.bf16.mxu0 0
    %806 = vmatpush1.bf16.msra.mxu0 %v575
    %807 = vmatprep.subr.bf16.mxu0 0
    %808 = vmatpush1.bf16.msra.mxu0 %v576
    %809 = vmatprep.subr.bf16.mxu0 0
    %810 = vmatpush1.bf16.msra.mxu0 %v577
    %811 = vmatprep.subr.bf16.mxu0 0
    %812 = vmatpush1.bf16.msra.mxu0 %v578
    %813 = vmatprep.subr.bf16.mxu0 0
    %814 = vmatpush1.bf16.msra.mxu0 %v579
    %815 = vmatprep.subr.bf16.mxu0 0
    %816 = vmatpush1.bf16.msra.mxu0 %v580
    %817 = vmatprep.subr.bf16.mxu0 0
    %818 = vmatpush1.bf16.msra.mxu0 %v581
    %819 = vmatprep.subr.bf16.mxu0 0
    %820 = vmatpush1.bf16.msra.mxu0 %v582
    %821 = vmatprep.subr.bf16.mxu0 0
    %822 = vmatpush1.bf16.msra.mxu0 %v583
    %823 = vmatprep.subr.bf16.mxu0 0
    %824 = vmatpush1.bf16.msra.mxu0 %v584
    %825 = vmatprep.subr.bf16.mxu0 0
    %826 = vmatpush1.bf16.msra.mxu0 %v585
    %827 = vmatprep.subr.bf16.mxu0 0
    %828 = vmatpush1.bf16.msra.mxu0 %v586
    %829 = vmatprep.subr.bf16.mxu0 0
    %830 = vmatpush1.bf16.msra.mxu0 %v587
    %831 = vmatprep.mubr.bf16.mxu0 %v243
    %832 = vmatmul.mubr.bf16.gmra.mrb[0].mxu0 %v242
    %v833 = vpop.f32.mrb[0].mxu0
    %v834 = vadd.f32 %v785, %v833
    %v835 = vpop.f32.mrb[0].mxu0
    %v836 = vpop.f32.mrb[0].mxu0
    %v837 = vadd.f32 %v788, %v836
    %v838 = vpop.f32.mrb[0].mxu0
    %839 = vmatprep.mubr.bf16.mxu0 %v251
    %840 = vmatmul.mubr.bf16.gmra.mrb[0].mxu0 %v250
    %v841 = vpop.f32.mrb[0].mxu0
    %v842 = vadd.f32 %v793, %v841
    %v843 = vpop.f32.mrb[0].mxu0
    %v844 = vpop.f32.mrb[0].mxu0
    %v845 = vadd.f32 %v796, %v844
    %v846 = vpop.f32.mrb[0].mxu0
    %847 = vdwg.mxu0
    %v848 = vpack.c.bf16 %v837, %v834
    %v849 = vpack.c.bf16 %v845, %v842
    %v852 = vunpack.c.l.b16 %v848
    %v853 = vunpack.c.h.b16 %v848
    %v854 = vunpack.c.l.b16 %v849
    %v855 = vunpack.c.h.b16 %v849
    %v856 = vpack.c.b16 %v852, %v852
    %v857 = vpack.c.b16 %v853, %v853
    %v858 = vpack.c.b16 %v854, %v854
    %v859 = vpack.c.b16 %v855, %v855
    %864 = vst [vmem:[#allocation7] sm:$0xf] %v856
    %865 = vst [vmem:[#allocation7 + $0x4] sm:$0xf] %v857
    %866 = vst [vmem:[#allocation7 + $0x8] sm:$0xf] %v858
    %867 = vst [vmem:[#allocation7 + $0xc] sm:$0xf] %v859
    %v868 = vadd.f32 %v834, %v837
    %v869 = vadd.f32 %v868, %v842
    %v870 = vadd.f32 %v869, %v845
    %v871 = vrot.slane %v870, 4
    %v872 = vadd.f32 %v870, %v871
    %v873 = vrot.slane %v872, 2
    %v874 = vadd.f32 %v872, %v873
    %v875 = vrot.slane %v874, 1
    %v876 = vadd.f32 %v874, %v875
    %v877 = vmul.f32 %v834, %v834
    %v878 = vmul.f32 %v837, %v837
    %v879 = vmul.f32 %v842, %v842
    %v880 = vmul.f32 %v845, %v845
    %v881 = vadd.f32 %v877, %v878
    %v882 = vadd.f32 %v881, %v879
    %v883 = vadd.f32 %v882, %v880
    %v884 = vrot.slane %v883, 4
    %v885 = vadd.f32 %v883, %v884
    %v886 = vrot.slane %v885, 2
    %v887 = vadd.f32 %v885, %v886
    %v888 = vrot.slane %v887, 1
    %v889 = vadd.f32 %v887, %v888
    %vm890 = vcmask 1040384
    %v891 = vsel %vm890, %v876, %v889
    %892 = vst [vmem:[#allocation8] sm:$0x3] %v891
    // Predicated region
    $region18: #{dcgan_discriminator_forward.10} parent=1 // pred_check
      _
    $region19: #{dcgan_discriminator_forward.10} parent=1 // pred_check_branch
      %894 = sbr.rel (0) target = $region21
    $region20: #{dcgan_discriminator_forward.10} parent=1 // pred_region
      %s896 = ssub.s32 256, 256
      %897 = vsyncadd [#allocation4], %s896
      %s898 = sshll.u32 [#allocation7], 4
      %s899 = int_to_ptr.vmem [resolvable:$true] %s898
      %904 = dma.vmem_to_hbm [thread:$0]  %s899, 256, %s2, [#allocation4], 64, 64, 4
    $region21: #{dcgan_discriminator_forward.10} parent=1 // pred_fallthru
      _
    // Predicated region
    $region22: #{dcgan_discriminator_forward.10} parent=1 // pred_check
      _
    $region23: #{dcgan_discriminator_forward.10} parent=1 // pred_check_branch
      %906 = sbr.rel (0) target = $region25
    $region24: #{dcgan_discriminator_forward.10} parent=1 // pred_region
      %s908 = ssub.s32 32, 32
      %909 = vsyncadd [#allocation9], %s908
      %s911 = sshll.u32 [#allocation8], 4
      %s912 = int_to_ptr.vmem [resolvable:$true] %s911
      %914 = dma.vmem_to_hbm [thread:$0]  %s912, 32, %s3, [#allocation9]
    $region25: #{dcgan_discriminator_forward.10} parent=1 // pred_fallthru
      _
    // Predicated region
    $region26: #{dcgan_discriminator_forward.10} parent=1 // pred_check
      _
    $region27: #{dcgan_discriminator_forward.10} parent=1 // pred_check_branch
      %916 = sbr.rel (0) target = $region29
    $region28: #{dcgan_discriminator_forward.10} parent=1 // pred_region
      %917 = dma.done [#allocation4], 256
    $region29: #{dcgan_discriminator_forward.10} parent=1 // pred_fallthru
      _
    // Predicated region
    $region30: #{dcgan_discriminator_forward.10} parent=1 // pred_check
      _
    $region31: #{dcgan_discriminator_forward.10} parent=1 // pred_check_branch
      %919 = sbr.rel (0) target = $region33
    $region32: #{dcgan_discriminator_forward.10} parent=1 // pred_region
      %920 = dma.done [#allocation9], 32
    $region33: #{dcgan_discriminator_forward.10} parent=1 // pred_fallthru
      _
    %921 = vsyncpa [#allocation3], 1
    %922 = vsyncpa [#allocation6], 1
    %923 = vsyncpa [#allocation4], 1
    %924 = vsyncpa [#allocation9], 1

</llo_original>
